<compile_context>
chip_gen: v5e
topology: v5e:2x2
jax: 0.10.0
libtpu: 0.0.40
codegen_flags: <defaults>
</compile_context>

<pallas_src>
import numpy as np

import jax
import jax.numpy as jnp
from jax.experimental import pallas as pl
from jax.experimental.pallas import tpu as pltpu

BN_EPS = 1e-5

IMG = 28        # MNIST spatial size (required by Linear(3*3*32, 128))
S1, S2, S3 = 14, 7, 3          # spatial sizes after conv1 / conv2 / conv3
C1, C2, C3 = 8, 16, 32         # channel counts
KK = 9                         # 3x3 taps
HID = 128                      # hidden linear width


def _const_spec(shape):
    """Full-array block, same for every grid step (weights / tables)."""
    nd = len(shape)
    return pl.BlockSpec(shape, lambda b, _nd=nd: (0,) * _nd)


# -----------------------------------------------------------------------------
# The single fused kernel: one grid program == one batch sample.
# Activations are 2-D (spatial, channels) values, channels on the lane axis.
# -----------------------------------------------------------------------------
def _encmnist_kernel(p1_ref, w1_ref, b1_ref,
                     P2_ref, w2_ref, s2_ref, t2_ref,
                     P3_ref, w3_ref, b3_ref,
                     w4_ref, b4_ref, w5_ref, b5_ref,
                     out_ref):
    f32, bf16 = jnp.float32, jnp.bfloat16

    # --- conv1 (3x3, s=2, p=1) + bias + ReLU; input was im2col'ed at entry ---
    x1 = jnp.dot(p1_ref[...], w1_ref[...], preferred_element_type=f32)   # (196, 8)
    x1 = jnp.maximum(x1 + b1_ref[...], 0.0).astype(bf16)

    # --- conv2 (3x3, s=2, p=1) + folded BatchNorm(eval) + ReLU ---
    # Stride-2 gather per tap = one-hot selection matmul (MXU), padding baked in.
    acc2 = jnp.zeros((S2 * S2, C2), f32)                                  # (49, 16)
    for k in range(KK):
        tap = jnp.dot(P2_ref[k], x1, preferred_element_type=f32).astype(bf16)  # (49, 8)
        acc2 = acc2 + jnp.dot(tap, w2_ref[k], preferred_element_type=f32)
    x2 = jnp.maximum(acc2 * s2_ref[...] + t2_ref[...], 0.0).astype(bf16)  # (49, 16)

    # --- conv3 (3x3, s=2, p=0) + bias + ReLU ---
    acc3 = jnp.zeros((S3 * S3, C3), f32)                                  # (9, 32)
    for k in range(KK):
        tap = jnp.dot(P3_ref[k], x2, preferred_element_type=f32).astype(bf16)  # (9, 16)
        acc3 = acc3 + jnp.dot(tap, w3_ref[k], preferred_element_type=f32)
    x3 = jnp.maximum(acc3 + b3_ref[...], 0.0).astype(bf16)                # (9, 32)

    # --- flatten (PyTorch channel-major order folded into w4) + Linear + ReLU ---
    acc4 = jnp.zeros((1, HID), f32)
    for s in range(S3 * S3):
        acc4 = acc4 + jnp.dot(x3[s:s + 1, :], w4_ref[s], preferred_element_type=f32)
    h = jnp.maximum(acc4 + b4_ref[...], 0.0).astype(bf16)                 # (1, 128)

    # --- Linear -> latent ---
    out = jnp.dot(h, w5_ref[...], preferred_element_type=f32) + b5_ref[...]
    out_ref[...] = out.astype(out_ref.dtype)


# -----------------------------------------------------------------------------
# Wrapper: one cheap XLA preprocessing step (entry im2col) + ONE pallas_call.
# -----------------------------------------------------------------------------
def encmnist_forward(pp, x):
    """x: (B, 1, 28, 28) float32 (PyTorch NCHW)."""
    B = x.shape[0]
    latent = pp['w5'].shape[1]

    # Entry preprocessing, done once: pad=1 then extract the 9 stride-2 taps.
    xpad = jnp.pad(x.astype(jnp.float32), ((0, 0), (0, 0), (1, 1), (1, 1)))
    taps = [xpad[:, 0, kh:kh + 2 * S1:2, kw:kw + 2 * S1:2]
            for kh in range(3) for kw in range(3)]
    patches = jnp.stack(taps, axis=-1).reshape(B, S1 * S1, KK).astype(jnp.bfloat16)

    weight_args = [pp['w1'], pp['b1'], pp['P2'], pp['w2'], pp['s2'], pp['t2'],
                   pp['P3'], pp['w3'], pp['b3'], pp['w4'], pp['b4'],
                   pp['w5'], pp['b5']]

    out = pl.pallas_call(
        _encmnist_kernel,
        out_shape=jax.ShapeDtypeStruct((B, 1, latent), jnp.float32),
        grid=(B,),
        in_specs=[pl.BlockSpec((None, S1 * S1, KK), lambda b: (b, 0, 0))]
                 + [_const_spec(a.shape) for a in weight_args],
        out_specs=pl.BlockSpec((None, 1, latent), lambda b: (b, 0, 0)),
        compiler_params=pltpu.CompilerParams(dimension_semantics=("parallel",)),
    )(patches, *weight_args)
    return out.reshape(B, latent)


# -----------------------------------------------------------------------------
# Synthetic parameters in PyTorch layout + conversion to kernel layout.
# -----------------------------------------------------------------------------
def init_torch_params(key, latent_dim):
    ks = jax.random.split(key, 16)

    def u(k, shape, fan_in):
        bound = 1.0 / np.sqrt(fan_in)
        return jax.random.uniform(k, shape, jnp.float32, -bound, bound)

    p = {}
    p['conv1_w'] = u(ks[0], (C1, 1, 3, 3), 9);      p['conv1_b'] = u(ks[1], (C1,), 9)
    p['conv2_w'] = u(ks[2], (C2, C1, 3, 3), 72);    p['conv2_b'] = u(ks[3], (C2,), 72)
    p['bn_gamma'] = 1.0 + 0.1 * jax.random.normal(ks[4], (C2,), jnp.float32)
    p['bn_beta'] = 0.1 * jax.random.normal(ks[5], (C2,), jnp.float32)
    p['bn_mean'] = 0.1 * jax.random.normal(ks[6], (C2,), jnp.float32)
    p['bn_var'] = jax.random.uniform(ks[7], (C2,), jnp.float32, 0.5, 1.5)
    p['conv3_w'] = u(ks[8], (C3, C2, 3, 3), 144);   p['conv3_b'] = u(ks[9], (C3,), 144)
    p['lin1_w'] = u(ks[10], (HID, C3 * S3 * S3), 288)
    p['lin1_b'] = u(ks[11], (HID,), 288)
    p['lin2_w'] = u(ks[12], (latent_dim, HID), 128)
    p['lin2_b'] = u(ks[13], (latent_dim,), 128)
    return p


def prepare_params(pt):
    """Convert PyTorch-layout params into the kernel's channels-last layout and
    build the constant one-hot tap-selection matrices (stride/padding baked in)."""
    f32, bf16 = jnp.float32, jnp.bfloat16

    # conv2: output (i2,j2), tap (kh,kw) reads conv1-output position
    # (2*i2+kh-1, 2*j2+kw-1); out-of-range (padding) rows are all-zero.
    P2 = np.zeros((KK, S2 * S2, S1 * S1), np.float32)
    for kh in range(3):
        for kw in range(3):
            k = kh * 3 + kw
            for i2 in range(S2):
                for j2 in range(S2):
                    r, c = 2 * i2 + kh - 1, 2 * j2 + kw - 1
                    if 0 <= r < S1 and 0 <= c < S1:
                        P2[k, i2 * S2 + j2, r * S1 + c] = 1.0

    # conv3: padding=0, reads conv2-output position (2*i3+kh, 2*j3+kw).
    P3 = np.zeros((KK, S3 * S3, S2 * S2), np.float32)
    for kh in range(3):
        for kw in range(3):
            k = kh * 3 + kw
            for i3 in range(S3):
                for j3 in range(S3):
                    P3[k, i3 * S3 + j3, (2 * i3 + kh) * S2 + (2 * j3 + kw)] = 1.0

    cw1 = np.asarray(pt['conv1_w'])                              # (8,1,3,3)
    w1 = cw1.reshape(C1, KK).T                                   # (9, 8)
    cw2 = np.asarray(pt['conv2_w'])                              # (16,8,3,3)
    w2 = cw2.transpose(2, 3, 1, 0).reshape(KK, C1, C2)           # (9, 8, 16)
    cw3 = np.asarray(pt['conv3_w'])                              # (32,16,3,3)
    w3 = cw3.transpose(2, 3, 1, 0).reshape(KK, C2, C3)           # (9, 16, 32)

    gamma, beta = np.asarray(pt['bn_gamma']), np.asarray(pt['bn_beta'])
    mean, var = np.asarray(pt['bn_mean']), np.asarray(pt['bn_var'])
    scale2 = gamma / np.sqrt(var + BN_EPS)
    shift2 = beta + (np.asarray(pt['conv2_b']) - mean) * scale2  # conv bias folded in

    # Linear1 columns re-ordered from PyTorch flatten order (c*9+s) to (s, c).
    lw1 = np.asarray(pt['lin1_w'])                               # (128, 288)
    w4 = lw1.reshape(HID, C3, S3 * S3).transpose(2, 1, 0)        # (9, 32, 128)
    w5 = np.asarray(pt['lin2_w']).T                              # (128, latent)
    latent = w5.shape[1]

    return dict(
        w1=jnp.asarray(w1, bf16),
        b1=jnp.asarray(pt['conv1_b'], f32).reshape(1, C1),
        P2=jnp.asarray(P2, bf16), w2=jnp.asarray(w2, bf16),
        s2=jnp.asarray(scale2, f32).reshape(1, C2),
        t2=jnp.asarray(shift2, f32).reshape(1, C2),
        P3=jnp.asarray(P3, bf16), w3=jnp.asarray(w3, bf16),
        b3=jnp.asarray(pt['conv3_b'], f32).reshape(1, C3),
        w4=jnp.asarray(w4, bf16),
        b4=jnp.asarray(pt['lin1_b'], f32).reshape(1, HID),
        w5=jnp.asarray(w5, bf16),
        b5=jnp.asarray(pt['lin2_b'], f32).reshape(1, latent),
    )


# -----------------------------------------------------------------------------
# Pure-JAX f32 reference (mirrors the PyTorch module in eval mode).
# -----------------------------------------------------------------------------
def encmnist_reference(pt, x):
    def conv(a, w, b, stride, pad):
        y = jax.lax.conv_general_dilated(
            a, w, window_strides=(stride, stride),
            padding=((pad, pad), (pad, pad)),
            dimension_numbers=('NCHW', 'OIHW', 'NCHW'))
        return y + b.reshape(1, -1, 1, 1)

    y = jax.nn.relu(conv(x, pt['conv1_w'], pt['conv1_b'], 2, 1))
    y = conv(y, pt['conv2_w'], pt['conv2_b'], 2, 1)
    y = ((y - pt['bn_mean'].reshape(1, -1, 1, 1))
         / jnp.sqrt(pt['bn_var'].reshape(1, -1, 1, 1) + BN_EPS)
         * pt['bn_gamma'].reshape(1, -1, 1, 1) + pt['bn_beta'].reshape(1, -1, 1, 1))
    y = jax.nn.relu(y)
    y = jax.nn.relu(conv(y, pt['conv3_w'], pt['conv3_b'], 2, 0))
    y = y.reshape(x.shape[0], -1)                        # PyTorch Flatten (NCHW order)
    y = jax.nn.relu(y @ pt['lin1_w'].T + pt['lin1_b'])
    return y @ pt['lin2_w'].T + pt['lin2_b']


if __name__ == "__main__":
    key = jax.random.PRNGKey(0)
    kp, kx = jax.random.split(key)

    latent_dim = 16
    pt_params = init_torch_params(kp, latent_dim)
    prepped = prepare_params(pt_params)

    # MNIST-shaped input (B, C, H, W) = (2, 1, 28, 28): required by Linear(3*3*32, .)
    x = jax.random.normal(kx, (2, 1, IMG, IMG), jnp.float32)

    fwd = jax.jit(encmnist_forward)
    out = jax.block_until_ready(fwd(prepped, x))

    assert out.shape == (2, latent_dim), out.shape
    assert bool(jnp.all(jnp.isfinite(out)))

    ref = jax.block_until_ready(encmnist_reference(pt_params, x))
    # bf16 matmul operands with f32 accumulation -> loose tolerance vs f32 reference.
    np.testing.assert_allclose(np.asarray(out), np.asarray(ref), rtol=5e-2, atol=5e-2)

    print("KERNEL_OK")
</pallas_src>

<mosaic_0001>
module attributes {stable_mosaic.version = 11 : i64} {
  func.func @_encmnist_kernel(%arg0: i32, %arg1: memref<1x196x9xbf16, #tpu.memory_space<vmem>>, %arg2: memref<9x8xbf16, #tpu.memory_space<vmem>>, %arg3: memref<1x8xf32, #tpu.memory_space<vmem>>, %arg4: memref<9x49x196xbf16, #tpu.memory_space<vmem>>, %arg5: memref<9x8x16xbf16, #tpu.memory_space<vmem>>, %arg6: memref<1x16xf32, #tpu.memory_space<vmem>>, %arg7: memref<1x16xf32, #tpu.memory_space<vmem>>, %arg8: memref<9x9x49xbf16, #tpu.memory_space<vmem>>, %arg9: memref<9x16x32xbf16, #tpu.memory_space<vmem>>, %arg10: memref<1x32xf32, #tpu.memory_space<vmem>>, %arg11: memref<9x32x128xbf16, #tpu.memory_space<vmem>>, %arg12: memref<1x128xf32, #tpu.memory_space<vmem>>, %arg13: memref<128x16xbf16, #tpu.memory_space<vmem>>, %arg14: memref<1x16xf32, #tpu.memory_space<vmem>>, %arg15: memref<1x1x16xf32, #tpu.memory_space<vmem>>) attributes {dimension_semantics = [#tpu.dimension_semantics<parallel>], iteration_bounds = array<i64: 2>, scalar_prefetch = 0 : i64, scratch_operands = 0 : i64, tpu.core_type = #tpu.core_type<tc>, window_params = [{transform_indices = @transform_0, window_bounds = array<i64: 1, 196, 9>}, {pipeline_mode = #tpu.pipeline_mode<synchronous>, transform_indices = @transform_1, window_bounds = array<i64: 9, 8>}, {pipeline_mode = #tpu.pipeline_mode<synchronous>, transform_indices = @transform_2, window_bounds = array<i64: 1, 8>}, {pipeline_mode = #tpu.pipeline_mode<synchronous>, transform_indices = @transform_3, window_bounds = array<i64: 9, 49, 196>}, {pipeline_mode = #tpu.pipeline_mode<synchronous>, transform_indices = @transform_4, window_bounds = array<i64: 9, 8, 16>}, {pipeline_mode = #tpu.pipeline_mode<synchronous>, transform_indices = @transform_5, window_bounds = array<i64: 1, 16>}, {pipeline_mode = #tpu.pipeline_mode<synchronous>, transform_indices = @transform_6, window_bounds = array<i64: 1, 16>}, {pipeline_mode = #tpu.pipeline_mode<synchronous>, transform_indices = @transform_7, window_bounds = array<i64: 9, 9, 49>}, {pipeline_mode = #tpu.pipeline_mode<synchronous>, transform_indices = @transform_8, window_bounds = array<i64: 9, 16, 32>}, {pipeline_mode = #tpu.pipeline_mode<synchronous>, transform_indices = @transform_9, window_bounds = array<i64: 1, 32>}, {pipeline_mode = #tpu.pipeline_mode<synchronous>, transform_indices = @transform_10, window_bounds = array<i64: 9, 32, 128>}, {pipeline_mode = #tpu.pipeline_mode<synchronous>, transform_indices = @transform_11, window_bounds = array<i64: 1, 128>}, {pipeline_mode = #tpu.pipeline_mode<synchronous>, transform_indices = @transform_12, window_bounds = array<i64: 128, 16>}, {pipeline_mode = #tpu.pipeline_mode<synchronous>, transform_indices = @transform_13, window_bounds = array<i64: 1, 16>}, {transform_indices = @transform_14, window_bounds = array<i64: 1, 1, 16>}]} {
    %c0 = arith.constant 0 : index
    %c0_0 = arith.constant 0 : index
    %c0_1 = arith.constant 0 : index
    %0 = vector.load %arg1[%c0, %c0_0, %c0_1] : memref<1x196x9xbf16, #tpu.memory_space<vmem>>, vector<1x196x9xbf16>
    %1 = vector.shape_cast %0 : vector<1x196x9xbf16> to vector<196x9xbf16>
    %c0_2 = arith.constant 0 : index
    %c0_3 = arith.constant 0 : index
    %2 = vector.load %arg2[%c0_2, %c0_3] : memref<9x8xbf16, #tpu.memory_space<vmem>>, vector<9x8xbf16>
    %cst = arith.constant dense<0.000000e+00> : vector<196x8xf32>
    %3 = tpu.matmul %1, %2, %cst {dimension_numbers = #tpu.dot_dimension_numbers<[1], [0], [0], [1], [0, 0, 1, 1], [], []>} : vector<196x9xbf16>, vector<9x8xbf16>, vector<196x8xf32> -> vector<196x8xf32>
    %c0_4 = arith.constant 0 : index
    %c0_5 = arith.constant 0 : index
    %4 = vector.load %arg3[%c0_4, %c0_5] : memref<1x8xf32, #tpu.memory_space<vmem>>, vector<1x8xf32>
    %5 = vector.broadcast %4 : vector<1x8xf32> to vector<196x8xf32>
    %6 = arith.addf %3, %5 : vector<196x8xf32>
    %cst_6 = arith.constant 0.000000e+00 : f32
    %7 = vector.broadcast %cst_6 : f32 to vector<196x8xf32>
    %8 = arith.maximumf %6, %7 : vector<196x8xf32>
    %9 = arith.truncf %8 : vector<196x8xf32> to vector<196x8xbf16>
    %cst_7 = arith.constant 0.000000e+00 : f32
    %10 = vector.broadcast %cst_7 : f32 to vector<49x16xf32>
    %c0_8 = arith.constant 0 : index
    %c0_9 = arith.constant 0 : index
    %c0_10 = arith.constant 0 : index
    %11 = vector.load %arg4[%c0_8, %c0_9, %c0_10] : memref<9x49x196xbf16, #tpu.memory_space<vmem>>, vector<1x49x196xbf16>
    %12 = vector.shape_cast %11 : vector<1x49x196xbf16> to vector<49x196xbf16>
    %cst_11 = arith.constant dense<0.000000e+00> : vector<49x8xf32>
    %13 = tpu.matmul %12, %9, %cst_11 {dimension_numbers = #tpu.dot_dimension_numbers<[1], [0], [0], [1], [0, 0, 1, 1], [], []>} : vector<49x196xbf16>, vector<196x8xbf16>, vector<49x8xf32> -> vector<49x8xf32>
    %14 = arith.truncf %13 : vector<49x8xf32> to vector<49x8xbf16>
    %c0_12 = arith.constant 0 : index
    %c0_13 = arith.constant 0 : index
    %c0_14 = arith.constant 0 : index
    %15 = vector.load %arg5[%c0_12, %c0_13, %c0_14] : memref<9x8x16xbf16, #tpu.memory_space<vmem>>, vector<1x8x16xbf16>
    %16 = vector.shape_cast %15 : vector<1x8x16xbf16> to vector<8x16xbf16>
    %cst_15 = arith.constant dense<0.000000e+00> : vector<49x16xf32>
    %17 = tpu.matmul %14, %16, %cst_15 {dimension_numbers = #tpu.dot_dimension_numbers<[1], [0], [0], [1], [0, 0, 1, 1], [], []>} : vector<49x8xbf16>, vector<8x16xbf16>, vector<49x16xf32> -> vector<49x16xf32>
    %18 = arith.addf %10, %17 : vector<49x16xf32>
    %c1 = arith.constant 1 : index
    %c0_16 = arith.constant 0 : index
    %c0_17 = arith.constant 0 : index
    %19 = vector.load %arg4[%c1, %c0_16, %c0_17] : memref<9x49x196xbf16, #tpu.memory_space<vmem>>, vector<1x49x196xbf16>
    %20 = vector.shape_cast %19 : vector<1x49x196xbf16> to vector<49x196xbf16>
    %cst_18 = arith.constant dense<0.000000e+00> : vector<49x8xf32>
    %21 = tpu.matmul %20, %9, %cst_18 {dimension_numbers = #tpu.dot_dimension_numbers<[1], [0], [0], [1], [0, 0, 1, 1], [], []>} : vector<49x196xbf16>, vector<196x8xbf16>, vector<49x8xf32> -> vector<49x8xf32>
    %22 = arith.truncf %21 : vector<49x8xf32> to vector<49x8xbf16>
    %c1_19 = arith.constant 1 : index
    %c0_20 = arith.constant 0 : index
    %c0_21 = arith.constant 0 : index
    %23 = vector.load %arg5[%c1_19, %c0_20, %c0_21] : memref<9x8x16xbf16, #tpu.memory_space<vmem>>, vector<1x8x16xbf16>
    %24 = vector.shape_cast %23 : vector<1x8x16xbf16> to vector<8x16xbf16>
    %cst_22 = arith.constant dense<0.000000e+00> : vector<49x16xf32>
    %25 = tpu.matmul %22, %24, %cst_22 {dimension_numbers = #tpu.dot_dimension_numbers<[1], [0], [0], [1], [0, 0, 1, 1], [], []>} : vector<49x8xbf16>, vector<8x16xbf16>, vector<49x16xf32> -> vector<49x16xf32>
    %26 = arith.addf %18, %25 : vector<49x16xf32>
    %c2 = arith.constant 2 : index
    %c0_23 = arith.constant 0 : index
    %c0_24 = arith.constant 0 : index
    %27 = vector.load %arg4[%c2, %c0_23, %c0_24] : memref<9x49x196xbf16, #tpu.memory_space<vmem>>, vector<1x49x196xbf16>
    %28 = vector.shape_cast %27 : vector<1x49x196xbf16> to vector<49x196xbf16>
    %cst_25 = arith.constant dense<0.000000e+00> : vector<49x8xf32>
    %29 = tpu.matmul %28, %9, %cst_25 {dimension_numbers = #tpu.dot_dimension_numbers<[1], [0], [0], [1], [0, 0, 1, 1], [], []>} : vector<49x196xbf16>, vector<196x8xbf16>, vector<49x8xf32> -> vector<49x8xf32>
    %30 = arith.truncf %29 : vector<49x8xf32> to vector<49x8xbf16>
    %c2_26 = arith.constant 2 : index
    %c0_27 = arith.constant 0 : index
    %c0_28 = arith.constant 0 : index
    %31 = vector.load %arg5[%c2_26, %c0_27, %c0_28] : memref<9x8x16xbf16, #tpu.memory_space<vmem>>, vector<1x8x16xbf16>
    %32 = vector.shape_cast %31 : vector<1x8x16xbf16> to vector<8x16xbf16>
    %cst_29 = arith.constant dense<0.000000e+00> : vector<49x16xf32>
    %33 = tpu.matmul %30, %32, %cst_29 {dimension_numbers = #tpu.dot_dimension_numbers<[1], [0], [0], [1], [0, 0, 1, 1], [], []>} : vector<49x8xbf16>, vector<8x16xbf16>, vector<49x16xf32> -> vector<49x16xf32>
    %34 = arith.addf %26, %33 : vector<49x16xf32>
    %c3 = arith.constant 3 : index
    %c0_30 = arith.constant 0 : index
    %c0_31 = arith.constant 0 : index
    %35 = vector.load %arg4[%c3, %c0_30, %c0_31] : memref<9x49x196xbf16, #tpu.memory_space<vmem>>, vector<1x49x196xbf16>
    %36 = vector.shape_cast %35 : vector<1x49x196xbf16> to vector<49x196xbf16>
    %cst_32 = arith.constant dense<0.000000e+00> : vector<49x8xf32>
    %37 = tpu.matmul %36, %9, %cst_32 {dimension_numbers = #tpu.dot_dimension_numbers<[1], [0], [0], [1], [0, 0, 1, 1], [], []>} : vector<49x196xbf16>, vector<196x8xbf16>, vector<49x8xf32> -> vector<49x8xf32>
    %38 = arith.truncf %37 : vector<49x8xf32> to vector<49x8xbf16>
    %c3_33 = arith.constant 3 : index
    %c0_34 = arith.constant 0 : index
    %c0_35 = arith.constant 0 : index
    %39 = vector.load %arg5[%c3_33, %c0_34, %c0_35] : memref<9x8x16xbf16, #tpu.memory_space<vmem>>, vector<1x8x16xbf16>
    %40 = vector.shape_cast %39 : vector<1x8x16xbf16> to vector<8x16xbf16>
    %cst_36 = arith.constant dense<0.000000e+00> : vector<49x16xf32>
    %41 = tpu.matmul %38, %40, %cst_36 {dimension_numbers = #tpu.dot_dimension_numbers<[1], [0], [0], [1], [0, 0, 1, 1], [], []>} : vector<49x8xbf16>, vector<8x16xbf16>, vector<49x16xf32> -> vector<49x16xf32>
    %42 = arith.addf %34, %41 : vector<49x16xf32>
    %c4 = arith.constant 4 : index
    %c0_37 = arith.constant 0 : index
    %c0_38 = arith.constant 0 : index
    %43 = vector.load %arg4[%c4, %c0_37, %c0_38] : memref<9x49x196xbf16, #tpu.memory_space<vmem>>, vector<1x49x196xbf16>
    %44 = vector.shape_cast %43 : vector<1x49x196xbf16> to vector<49x196xbf16>
    %cst_39 = arith.constant dense<0.000000e+00> : vector<49x8xf32>
    %45 = tpu.matmul %44, %9, %cst_39 {dimension_numbers = #tpu.dot_dimension_numbers<[1], [0], [0], [1], [0, 0, 1, 1], [], []>} : vector<49x196xbf16>, vector<196x8xbf16>, vector<49x8xf32> -> vector<49x8xf32>
    %46 = arith.truncf %45 : vector<49x8xf32> to vector<49x8xbf16>
    %c4_40 = arith.constant 4 : index
    %c0_41 = arith.constant 0 : index
    %c0_42 = arith.constant 0 : index
    %47 = vector.load %arg5[%c4_40, %c0_41, %c0_42] : memref<9x8x16xbf16, #tpu.memory_space<vmem>>, vector<1x8x16xbf16>
    %48 = vector.shape_cast %47 : vector<1x8x16xbf16> to vector<8x16xbf16>
    %cst_43 = arith.constant dense<0.000000e+00> : vector<49x16xf32>
    %49 = tpu.matmul %46, %48, %cst_43 {dimension_numbers = #tpu.dot_dimension_numbers<[1], [0], [0], [1], [0, 0, 1, 1], [], []>} : vector<49x8xbf16>, vector<8x16xbf16>, vector<49x16xf32> -> vector<49x16xf32>
    %50 = arith.addf %42, %49 : vector<49x16xf32>
    %c5 = arith.constant 5 : index
    %c0_44 = arith.constant 0 : index
    %c0_45 = arith.constant 0 : index
    %51 = vector.load %arg4[%c5, %c0_44, %c0_45] : memref<9x49x196xbf16, #tpu.memory_space<vmem>>, vector<1x49x196xbf16>
    %52 = vector.shape_cast %51 : vector<1x49x196xbf16> to vector<49x196xbf16>
    %cst_46 = arith.constant dense<0.000000e+00> : vector<49x8xf32>
    %53 = tpu.matmul %52, %9, %cst_46 {dimension_numbers = #tpu.dot_dimension_numbers<[1], [0], [0], [1], [0, 0, 1, 1], [], []>} : vector<49x196xbf16>, vector<196x8xbf16>, vector<49x8xf32> -> vector<49x8xf32>
    %54 = arith.truncf %53 : vector<49x8xf32> to vector<49x8xbf16>
    %c5_47 = arith.constant 5 : index
    %c0_48 = arith.constant 0 : index
    %c0_49 = arith.constant 0 : index
    %55 = vector.load %arg5[%c5_47, %c0_48, %c0_49] : memref<9x8x16xbf16, #tpu.memory_space<vmem>>, vector<1x8x16xbf16>
    %56 = vector.shape_cast %55 : vector<1x8x16xbf16> to vector<8x16xbf16>
    %cst_50 = arith.constant dense<0.000000e+00> : vector<49x16xf32>
    %57 = tpu.matmul %54, %56, %cst_50 {dimension_numbers = #tpu.dot_dimension_numbers<[1], [0], [0], [1], [0, 0, 1, 1], [], []>} : vector<49x8xbf16>, vector<8x16xbf16>, vector<49x16xf32> -> vector<49x16xf32>
    %58 = arith.addf %50, %57 : vector<49x16xf32>
    %c6 = arith.constant 6 : index
    %c0_51 = arith.constant 0 : index
    %c0_52 = arith.constant 0 : index
    %59 = vector.load %arg4[%c6, %c0_51, %c0_52] : memref<9x49x196xbf16, #tpu.memory_space<vmem>>, vector<1x49x196xbf16>
    %60 = vector.shape_cast %59 : vector<1x49x196xbf16> to vector<49x196xbf16>
    %cst_53 = arith.constant dense<0.000000e+00> : vector<49x8xf32>
    %61 = tpu.matmul %60, %9, %cst_53 {dimension_numbers = #tpu.dot_dimension_numbers<[1], [0], [0], [1], [0, 0, 1, 1], [], []>} : vector<49x196xbf16>, vector<196x8xbf16>, vector<49x8xf32> -> vector<49x8xf32>
    %62 = arith.truncf %61 : vector<49x8xf32> to vector<49x8xbf16>
    %c6_54 = arith.constant 6 : index
    %c0_55 = arith.constant 0 : index
    %c0_56 = arith.constant 0 : index
    %63 = vector.load %arg5[%c6_54, %c0_55, %c0_56] : memref<9x8x16xbf16, #tpu.memory_space<vmem>>, vector<1x8x16xbf16>
    %64 = vector.shape_cast %63 : vector<1x8x16xbf16> to vector<8x16xbf16>
    %cst_57 = arith.constant dense<0.000000e+00> : vector<49x16xf32>
    %65 = tpu.matmul %62, %64, %cst_57 {dimension_numbers = #tpu.dot_dimension_numbers<[1], [0], [0], [1], [0, 0, 1, 1], [], []>} : vector<49x8xbf16>, vector<8x16xbf16>, vector<49x16xf32> -> vector<49x16xf32>
    %66 = arith.addf %58, %65 : vector<49x16xf32>
    %c7 = arith.constant 7 : index
    %c0_58 = arith.constant 0 : index
    %c0_59 = arith.constant 0 : index
    %67 = vector.load %arg4[%c7, %c0_58, %c0_59] : memref<9x49x196xbf16, #tpu.memory_space<vmem>>, vector<1x49x196xbf16>
    %68 = vector.shape_cast %67 : vector<1x49x196xbf16> to vector<49x196xbf16>
    %cst_60 = arith.constant dense<0.000000e+00> : vector<49x8xf32>
    %69 = tpu.matmul %68, %9, %cst_60 {dimension_numbers = #tpu.dot_dimension_numbers<[1], [0], [0], [1], [0, 0, 1, 1], [], []>} : vector<49x196xbf16>, vector<196x8xbf16>, vector<49x8xf32> -> vector<49x8xf32>
    %70 = arith.truncf %69 : vector<49x8xf32> to vector<49x8xbf16>
    %c7_61 = arith.constant 7 : index
    %c0_62 = arith.constant 0 : index
    %c0_63 = arith.constant 0 : index
    %71 = vector.load %arg5[%c7_61, %c0_62, %c0_63] : memref<9x8x16xbf16, #tpu.memory_space<vmem>>, vector<1x8x16xbf16>
    %72 = vector.shape_cast %71 : vector<1x8x16xbf16> to vector<8x16xbf16>
    %cst_64 = arith.constant dense<0.000000e+00> : vector<49x16xf32>
    %73 = tpu.matmul %70, %72, %cst_64 {dimension_numbers = #tpu.dot_dimension_numbers<[1], [0], [0], [1], [0, 0, 1, 1], [], []>} : vector<49x8xbf16>, vector<8x16xbf16>, vector<49x16xf32> -> vector<49x16xf32>
    %74 = arith.addf %66, %73 : vector<49x16xf32>
    %c8 = arith.constant 8 : index
    %c0_65 = arith.constant 0 : index
    %c0_66 = arith.constant 0 : index
    %75 = vector.load %arg4[%c8, %c0_65, %c0_66] : memref<9x49x196xbf16, #tpu.memory_space<vmem>>, vector<1x49x196xbf16>
    %76 = vector.shape_cast %75 : vector<1x49x196xbf16> to vector<49x196xbf16>
    %cst_67 = arith.constant dense<0.000000e+00> : vector<49x8xf32>
    %77 = tpu.matmul %76, %9, %cst_67 {dimension_numbers = #tpu.dot_dimension_numbers<[1], [0], [0], [1], [0, 0, 1, 1], [], []>} : vector<49x196xbf16>, vector<196x8xbf16>, vector<49x8xf32> -> vector<49x8xf32>
    %78 = arith.truncf %77 : vector<49x8xf32> to vector<49x8xbf16>
    %c8_68 = arith.constant 8 : index
    %c0_69 = arith.constant 0 : index
    %c0_70 = arith.constant 0 : index
    %79 = vector.load %arg5[%c8_68, %c0_69, %c0_70] : memref<9x8x16xbf16, #tpu.memory_space<vmem>>, vector<1x8x16xbf16>
    %80 = vector.shape_cast %79 : vector<1x8x16xbf16> to vector<8x16xbf16>
    %cst_71 = arith.constant dense<0.000000e+00> : vector<49x16xf32>
    %81 = tpu.matmul %78, %80, %cst_71 {dimension_numbers = #tpu.dot_dimension_numbers<[1], [0], [0], [1], [0, 0, 1, 1], [], []>} : vector<49x8xbf16>, vector<8x16xbf16>, vector<49x16xf32> -> vector<49x16xf32>
    %82 = arith.addf %74, %81 : vector<49x16xf32>
    %c0_72 = arith.constant 0 : index
    %c0_73 = arith.constant 0 : index
    %83 = vector.load %arg6[%c0_72, %c0_73] : memref<1x16xf32, #tpu.memory_space<vmem>>, vector<1x16xf32>
    %84 = vector.broadcast %83 : vector<1x16xf32> to vector<49x16xf32>
    %85 = arith.mulf %82, %84 : vector<49x16xf32>
    %c0_74 = arith.constant 0 : index
    %c0_75 = arith.constant 0 : index
    %86 = vector.load %arg7[%c0_74, %c0_75] : memref<1x16xf32, #tpu.memory_space<vmem>>, vector<1x16xf32>
    %87 = vector.broadcast %86 : vector<1x16xf32> to vector<49x16xf32>
    %88 = arith.addf %85, %87 : vector<49x16xf32>
    %cst_76 = arith.constant 0.000000e+00 : f32
    %89 = vector.broadcast %cst_76 : f32 to vector<49x16xf32>
    %90 = arith.maximumf %88, %89 : vector<49x16xf32>
    %91 = arith.truncf %90 : vector<49x16xf32> to vector<49x16xbf16>
    %cst_77 = arith.constant 0.000000e+00 : f32
    %92 = vector.broadcast %cst_77 : f32 to vector<9x32xf32>
    %c0_78 = arith.constant 0 : index
    %c0_79 = arith.constant 0 : index
    %c0_80 = arith.constant 0 : index
    %93 = vector.load %arg8[%c0_78, %c0_79, %c0_80] : memref<9x9x49xbf16, #tpu.memory_space<vmem>>, vector<1x9x49xbf16>
    %94 = vector.shape_cast %93 : vector<1x9x49xbf16> to vector<9x49xbf16>
    %cst_81 = arith.constant dense<0.000000e+00> : vector<9x16xf32>
    %95 = tpu.matmul %94, %91, %cst_81 {dimension_numbers = #tpu.dot_dimension_numbers<[1], [0], [0], [1], [0, 0, 1, 1], [], []>} : vector<9x49xbf16>, vector<49x16xbf16>, vector<9x16xf32> -> vector<9x16xf32>
    %96 = arith.truncf %95 : vector<9x16xf32> to vector<9x16xbf16>
    %c0_82 = arith.constant 0 : index
    %c0_83 = arith.constant 0 : index
    %c0_84 = arith.constant 0 : index
    %97 = vector.load %arg9[%c0_82, %c0_83, %c0_84] : memref<9x16x32xbf16, #tpu.memory_space<vmem>>, vector<1x16x32xbf16>
    %98 = vector.shape_cast %97 : vector<1x16x32xbf16> to vector<16x32xbf16>
    %cst_85 = arith.constant dense<0.000000e+00> : vector<9x32xf32>
    %99 = tpu.matmul %96, %98, %cst_85 {dimension_numbers = #tpu.dot_dimension_numbers<[1], [0], [0], [1], [0, 0, 1, 1], [], []>} : vector<9x16xbf16>, vector<16x32xbf16>, vector<9x32xf32> -> vector<9x32xf32>
    %100 = arith.addf %92, %99 : vector<9x32xf32>
    %c1_86 = arith.constant 1 : index
    %c0_87 = arith.constant 0 : index
    %c0_88 = arith.constant 0 : index
    %101 = vector.load %arg8[%c1_86, %c0_87, %c0_88] : memref<9x9x49xbf16, #tpu.memory_space<vmem>>, vector<1x9x49xbf16>
    %102 = vector.shape_cast %101 : vector<1x9x49xbf16> to vector<9x49xbf16>
    %cst_89 = arith.constant dense<0.000000e+00> : vector<9x16xf32>
    %103 = tpu.matmul %102, %91, %cst_89 {dimension_numbers = #tpu.dot_dimension_numbers<[1], [0], [0], [1], [0, 0, 1, 1], [], []>} : vector<9x49xbf16>, vector<49x16xbf16>, vector<9x16xf32> -> vector<9x16xf32>
    %104 = arith.truncf %103 : vector<9x16xf32> to vector<9x16xbf16>
    %c1_90 = arith.constant 1 : index
    %c0_91 = arith.constant 0 : index
    %c0_92 = arith.constant 0 : index
    %105 = vector.load %arg9[%c1_90, %c0_91, %c0_92] : memref<9x16x32xbf16, #tpu.memory_space<vmem>>, vector<1x16x32xbf16>
    %106 = vector.shape_cast %105 : vector<1x16x32xbf16> to vector<16x32xbf16>
    %cst_93 = arith.constant dense<0.000000e+00> : vector<9x32xf32>
    %107 = tpu.matmul %104, %106, %cst_93 {dimension_numbers = #tpu.dot_dimension_numbers<[1], [0], [0], [1], [0, 0, 1, 1], [], []>} : vector<9x16xbf16>, vector<16x32xbf16>, vector<9x32xf32> -> vector<9x32xf32>
    %108 = arith.addf %100, %107 : vector<9x32xf32>
    %c2_94 = arith.constant 2 : index
    %c0_95 = arith.constant 0 : index
    %c0_96 = arith.constant 0 : index
    %109 = vector.load %arg8[%c2_94, %c0_95, %c0_96] : memref<9x9x49xbf16, #tpu.memory_space<vmem>>, vector<1x9x49xbf16>
    %110 = vector.shape_cast %109 : vector<1x9x49xbf16> to vector<9x49xbf16>
    %cst_97 = arith.constant dense<0.000000e+00> : vector<9x16xf32>
    %111 = tpu.matmul %110, %91, %cst_97 {dimension_numbers = #tpu.dot_dimension_numbers<[1], [0], [0], [1], [0, 0, 1, 1], [], []>} : vector<9x49xbf16>, vector<49x16xbf16>, vector<9x16xf32> -> vector<9x16xf32>
    %112 = arith.truncf %111 : vector<9x16xf32> to vector<9x16xbf16>
    %c2_98 = arith.constant 2 : index
    %c0_99 = arith.constant 0 : index
    %c0_100 = arith.constant 0 : index
    %113 = vector.load %arg9[%c2_98, %c0_99, %c0_100] : memref<9x16x32xbf16, #tpu.memory_space<vmem>>, vector<1x16x32xbf16>
    %114 = vector.shape_cast %113 : vector<1x16x32xbf16> to vector<16x32xbf16>
    %cst_101 = arith.constant dense<0.000000e+00> : vector<9x32xf32>
    %115 = tpu.matmul %112, %114, %cst_101 {dimension_numbers = #tpu.dot_dimension_numbers<[1], [0], [0], [1], [0, 0, 1, 1], [], []>} : vector<9x16xbf16>, vector<16x32xbf16>, vector<9x32xf32> -> vector<9x32xf32>
    %116 = arith.addf %108, %115 : vector<9x32xf32>
    %c3_102 = arith.constant 3 : index
    %c0_103 = arith.constant 0 : index
    %c0_104 = arith.constant 0 : index
    %117 = vector.load %arg8[%c3_102, %c0_103, %c0_104] : memref<9x9x49xbf16, #tpu.memory_space<vmem>>, vector<1x9x49xbf16>
    %118 = vector.shape_cast %117 : vector<1x9x49xbf16> to vector<9x49xbf16>
    %cst_105 = arith.constant dense<0.000000e+00> : vector<9x16xf32>
    %119 = tpu.matmul %118, %91, %cst_105 {dimension_numbers = #tpu.dot_dimension_numbers<[1], [0], [0], [1], [0, 0, 1, 1], [], []>} : vector<9x49xbf16>, vector<49x16xbf16>, vector<9x16xf32> -> vector<9x16xf32>
    %120 = arith.truncf %119 : vector<9x16xf32> to vector<9x16xbf16>
    %c3_106 = arith.constant 3 : index
    %c0_107 = arith.constant 0 : index
    %c0_108 = arith.constant 0 : index
    %121 = vector.load %arg9[%c3_106, %c0_107, %c0_108] : memref<9x16x32xbf16, #tpu.memory_space<vmem>>, vector<1x16x32xbf16>
    %122 = vector.shape_cast %121 : vector<1x16x32xbf16> to vector<16x32xbf16>
    %cst_109 = arith.constant dense<0.000000e+00> : vector<9x32xf32>
    %123 = tpu.matmul %120, %122, %cst_109 {dimension_numbers = #tpu.dot_dimension_numbers<[1], [0], [0], [1], [0, 0, 1, 1], [], []>} : vector<9x16xbf16>, vector<16x32xbf16>, vector<9x32xf32> -> vector<9x32xf32>
    %124 = arith.addf %116, %123 : vector<9x32xf32>
    %c4_110 = arith.constant 4 : index
    %c0_111 = arith.constant 0 : index
    %c0_112 = arith.constant 0 : index
    %125 = vector.load %arg8[%c4_110, %c0_111, %c0_112] : memref<9x9x49xbf16, #tpu.memory_space<vmem>>, vector<1x9x49xbf16>
    %126 = vector.shape_cast %125 : vector<1x9x49xbf16> to vector<9x49xbf16>
    %cst_113 = arith.constant dense<0.000000e+00> : vector<9x16xf32>
    %127 = tpu.matmul %126, %91, %cst_113 {dimension_numbers = #tpu.dot_dimension_numbers<[1], [0], [0], [1], [0, 0, 1, 1], [], []>} : vector<9x49xbf16>, vector<49x16xbf16>, vector<9x16xf32> -> vector<9x16xf32>
    %128 = arith.truncf %127 : vector<9x16xf32> to vector<9x16xbf16>
    %c4_114 = arith.constant 4 : index
    %c0_115 = arith.constant 0 : index
    %c0_116 = arith.constant 0 : index
    %129 = vector.load %arg9[%c4_114, %c0_115, %c0_116] : memref<9x16x32xbf16, #tpu.memory_space<vmem>>, vector<1x16x32xbf16>
    %130 = vector.shape_cast %129 : vector<1x16x32xbf16> to vector<16x32xbf16>
    %cst_117 = arith.constant dense<0.000000e+00> : vector<9x32xf32>
    %131 = tpu.matmul %128, %130, %cst_117 {dimension_numbers = #tpu.dot_dimension_numbers<[1], [0], [0], [1], [0, 0, 1, 1], [], []>} : vector<9x16xbf16>, vector<16x32xbf16>, vector<9x32xf32> -> vector<9x32xf32>
    %132 = arith.addf %124, %131 : vector<9x32xf32>
    %c5_118 = arith.constant 5 : index
    %c0_119 = arith.constant 0 : index
    %c0_120 = arith.constant 0 : index
    %133 = vector.load %arg8[%c5_118, %c0_119, %c0_120] : memref<9x9x49xbf16, #tpu.memory_space<vmem>>, vector<1x9x49xbf16>
    %134 = vector.shape_cast %133 : vector<1x9x49xbf16> to vector<9x49xbf16>
    %cst_121 = arith.constant dense<0.000000e+00> : vector<9x16xf32>
    %135 = tpu.matmul %134, %91, %cst_121 {dimension_numbers = #tpu.dot_dimension_numbers<[1], [0], [0], [1], [0, 0, 1, 1], [], []>} : vector<9x49xbf16>, vector<49x16xbf16>, vector<9x16xf32> -> vector<9x16xf32>
    %136 = arith.truncf %135 : vector<9x16xf32> to vector<9x16xbf16>
    %c5_122 = arith.constant 5 : index
    %c0_123 = arith.constant 0 : index
    %c0_124 = arith.constant 0 : index
    %137 = vector.load %arg9[%c5_122, %c0_123, %c0_124] : memref<9x16x32xbf16, #tpu.memory_space<vmem>>, vector<1x16x32xbf16>
    %138 = vector.shape_cast %137 : vector<1x16x32xbf16> to vector<16x32xbf16>
    %cst_125 = arith.constant dense<0.000000e+00> : vector<9x32xf32>
    %139 = tpu.matmul %136, %138, %cst_125 {dimension_numbers = #tpu.dot_dimension_numbers<[1], [0], [0], [1], [0, 0, 1, 1], [], []>} : vector<9x16xbf16>, vector<16x32xbf16>, vector<9x32xf32> -> vector<9x32xf32>
    %140 = arith.addf %132, %139 : vector<9x32xf32>
    %c6_126 = arith.constant 6 : index
    %c0_127 = arith.constant 0 : index
    %c0_128 = arith.constant 0 : index
    %141 = vector.load %arg8[%c6_126, %c0_127, %c0_128] : memref<9x9x49xbf16, #tpu.memory_space<vmem>>, vector<1x9x49xbf16>
    %142 = vector.shape_cast %141 : vector<1x9x49xbf16> to vector<9x49xbf16>
    %cst_129 = arith.constant dense<0.000000e+00> : vector<9x16xf32>
    %143 = tpu.matmul %142, %91, %cst_129 {dimension_numbers = #tpu.dot_dimension_numbers<[1], [0], [0], [1], [0, 0, 1, 1], [], []>} : vector<9x49xbf16>, vector<49x16xbf16>, vector<9x16xf32> -> vector<9x16xf32>
    %144 = arith.truncf %143 : vector<9x16xf32> to vector<9x16xbf16>
    %c6_130 = arith.constant 6 : index
    %c0_131 = arith.constant 0 : index
    %c0_132 = arith.constant 0 : index
    %145 = vector.load %arg9[%c6_130, %c0_131, %c0_132] : memref<9x16x32xbf16, #tpu.memory_space<vmem>>, vector<1x16x32xbf16>
    %146 = vector.shape_cast %145 : vector<1x16x32xbf16> to vector<16x32xbf16>
    %cst_133 = arith.constant dense<0.000000e+00> : vector<9x32xf32>
    %147 = tpu.matmul %144, %146, %cst_133 {dimension_numbers = #tpu.dot_dimension_numbers<[1], [0], [0], [1], [0, 0, 1, 1], [], []>} : vector<9x16xbf16>, vector<16x32xbf16>, vector<9x32xf32> -> vector<9x32xf32>
    %148 = arith.addf %140, %147 : vector<9x32xf32>
    %c7_134 = arith.constant 7 : index
    %c0_135 = arith.constant 0 : index
    %c0_136 = arith.constant 0 : index
    %149 = vector.load %arg8[%c7_134, %c0_135, %c0_136] : memref<9x9x49xbf16, #tpu.memory_space<vmem>>, vector<1x9x49xbf16>
    %150 = vector.shape_cast %149 : vector<1x9x49xbf16> to vector<9x49xbf16>
    %cst_137 = arith.constant dense<0.000000e+00> : vector<9x16xf32>
    %151 = tpu.matmul %150, %91, %cst_137 {dimension_numbers = #tpu.dot_dimension_numbers<[1], [0], [0], [1], [0, 0, 1, 1], [], []>} : vector<9x49xbf16>, vector<49x16xbf16>, vector<9x16xf32> -> vector<9x16xf32>
    %152 = arith.truncf %151 : vector<9x16xf32> to vector<9x16xbf16>
    %c7_138 = arith.constant 7 : index
    %c0_139 = arith.constant 0 : index
    %c0_140 = arith.constant 0 : index
    %153 = vector.load %arg9[%c7_138, %c0_139, %c0_140] : memref<9x16x32xbf16, #tpu.memory_space<vmem>>, vector<1x16x32xbf16>
    %154 = vector.shape_cast %153 : vector<1x16x32xbf16> to vector<16x32xbf16>
    %cst_141 = arith.constant dense<0.000000e+00> : vector<9x32xf32>
    %155 = tpu.matmul %152, %154, %cst_141 {dimension_numbers = #tpu.dot_dimension_numbers<[1], [0], [0], [1], [0, 0, 1, 1], [], []>} : vector<9x16xbf16>, vector<16x32xbf16>, vector<9x32xf32> -> vector<9x32xf32>
    %156 = arith.addf %148, %155 : vector<9x32xf32>
    %c8_142 = arith.constant 8 : index
    %c0_143 = arith.constant 0 : index
    %c0_144 = arith.constant 0 : index
    %157 = vector.load %arg8[%c8_142, %c0_143, %c0_144] : memref<9x9x49xbf16, #tpu.memory_space<vmem>>, vector<1x9x49xbf16>
    %158 = vector.shape_cast %157 : vector<1x9x49xbf16> to vector<9x49xbf16>
    %cst_145 = arith.constant dense<0.000000e+00> : vector<9x16xf32>
    %159 = tpu.matmul %158, %91, %cst_145 {dimension_numbers = #tpu.dot_dimension_numbers<[1], [0], [0], [1], [0, 0, 1, 1], [], []>} : vector<9x49xbf16>, vector<49x16xbf16>, vector<9x16xf32> -> vector<9x16xf32>
    %160 = arith.truncf %159 : vector<9x16xf32> to vector<9x16xbf16>
    %c8_146 = arith.constant 8 : index
    %c0_147 = arith.constant 0 : index
    %c0_148 = arith.constant 0 : index
    %161 = vector.load %arg9[%c8_146, %c0_147, %c0_148] : memref<9x16x32xbf16, #tpu.memory_space<vmem>>, vector<1x16x32xbf16>
    %162 = vector.shape_cast %161 : vector<1x16x32xbf16> to vector<16x32xbf16>
    %cst_149 = arith.constant dense<0.000000e+00> : vector<9x32xf32>
    %163 = tpu.matmul %160, %162, %cst_149 {dimension_numbers = #tpu.dot_dimension_numbers<[1], [0], [0], [1], [0, 0, 1, 1], [], []>} : vector<9x16xbf16>, vector<16x32xbf16>, vector<9x32xf32> -> vector<9x32xf32>
    %164 = arith.addf %156, %163 : vector<9x32xf32>
    %c0_150 = arith.constant 0 : index
    %c0_151 = arith.constant 0 : index
    %165 = vector.load %arg10[%c0_150, %c0_151] : memref<1x32xf32, #tpu.memory_space<vmem>>, vector<1x32xf32>
    %166 = vector.broadcast %165 : vector<1x32xf32> to vector<9x32xf32>
    %167 = arith.addf %164, %166 : vector<9x32xf32>
    %cst_152 = arith.constant 0.000000e+00 : f32
    %168 = vector.broadcast %cst_152 : f32 to vector<9x32xf32>
    %169 = arith.maximumf %167, %168 : vector<9x32xf32>
    %170 = arith.truncf %169 : vector<9x32xf32> to vector<9x32xbf16>
    %cst_153 = arith.constant 0.000000e+00 : f32
    %171 = vector.broadcast %cst_153 : f32 to vector<1x128xf32>
    %172 = vector.extract_strided_slice %170 {offsets = [0, 0], sizes = [1, 32], strides = [1, 1]} : vector<9x32xbf16> to vector<1x32xbf16>
    %c0_154 = arith.constant 0 : index
    %c0_155 = arith.constant 0 : index
    %c0_156 = arith.constant 0 : index
    %173 = vector.load %arg11[%c0_154, %c0_155, %c0_156] : memref<9x32x128xbf16, #tpu.memory_space<vmem>>, vector<1x32x128xbf16>
    %174 = vector.shape_cast %173 : vector<1x32x128xbf16> to vector<32x128xbf16>
    %cst_157 = arith.constant dense<0.000000e+00> : vector<1x128xf32>
    %175 = tpu.matmul %172, %174, %cst_157 {dimension_numbers = #tpu.dot_dimension_numbers<[1], [0], [0], [1], [0, 0, 1, 1], [], []>} : vector<1x32xbf16>, vector<32x128xbf16>, vector<1x128xf32> -> vector<1x128xf32>
    %176 = arith.addf %171, %175 : vector<1x128xf32>
    %177 = vector.extract_strided_slice %170 {offsets = [1, 0], sizes = [1, 32], strides = [1, 1]} : vector<9x32xbf16> to vector<1x32xbf16>
    %c1_158 = arith.constant 1 : index
    %c0_159 = arith.constant 0 : index
    %c0_160 = arith.constant 0 : index
    %178 = vector.load %arg11[%c1_158, %c0_159, %c0_160] : memref<9x32x128xbf16, #tpu.memory_space<vmem>>, vector<1x32x128xbf16>
    %179 = vector.shape_cast %178 : vector<1x32x128xbf16> to vector<32x128xbf16>
    %cst_161 = arith.constant dense<0.000000e+00> : vector<1x128xf32>
    %180 = tpu.matmul %177, %179, %cst_161 {dimension_numbers = #tpu.dot_dimension_numbers<[1], [0], [0], [1], [0, 0, 1, 1], [], []>} : vector<1x32xbf16>, vector<32x128xbf16>, vector<1x128xf32> -> vector<1x128xf32>
    %181 = arith.addf %176, %180 : vector<1x128xf32>
    %182 = vector.extract_strided_slice %170 {offsets = [2, 0], sizes = [1, 32], strides = [1, 1]} : vector<9x32xbf16> to vector<1x32xbf16>
    %c2_162 = arith.constant 2 : index
    %c0_163 = arith.constant 0 : index
    %c0_164 = arith.constant 0 : index
    %183 = vector.load %arg11[%c2_162, %c0_163, %c0_164] : memref<9x32x128xbf16, #tpu.memory_space<vmem>>, vector<1x32x128xbf16>
    %184 = vector.shape_cast %183 : vector<1x32x128xbf16> to vector<32x128xbf16>
    %cst_165 = arith.constant dense<0.000000e+00> : vector<1x128xf32>
    %185 = tpu.matmul %182, %184, %cst_165 {dimension_numbers = #tpu.dot_dimension_numbers<[1], [0], [0], [1], [0, 0, 1, 1], [], []>} : vector<1x32xbf16>, vector<32x128xbf16>, vector<1x128xf32> -> vector<1x128xf32>
    %186 = arith.addf %181, %185 : vector<1x128xf32>
    %187 = vector.extract_strided_slice %170 {offsets = [3, 0], sizes = [1, 32], strides = [1, 1]} : vector<9x32xbf16> to vector<1x32xbf16>
    %c3_166 = arith.constant 3 : index
    %c0_167 = arith.constant 0 : index
    %c0_168 = arith.constant 0 : index
    %188 = vector.load %arg11[%c3_166, %c0_167, %c0_168] : memref<9x32x128xbf16, #tpu.memory_space<vmem>>, vector<1x32x128xbf16>
    %189 = vector.shape_cast %188 : vector<1x32x128xbf16> to vector<32x128xbf16>
    %cst_169 = arith.constant dense<0.000000e+00> : vector<1x128xf32>
    %190 = tpu.matmul %187, %189, %cst_169 {dimension_numbers = #tpu.dot_dimension_numbers<[1], [0], [0], [1], [0, 0, 1, 1], [], []>} : vector<1x32xbf16>, vector<32x128xbf16>, vector<1x128xf32> -> vector<1x128xf32>
    %191 = arith.addf %186, %190 : vector<1x128xf32>
    %192 = vector.extract_strided_slice %170 {offsets = [4, 0], sizes = [1, 32], strides = [1, 1]} : vector<9x32xbf16> to vector<1x32xbf16>
    %c4_170 = arith.constant 4 : index
    %c0_171 = arith.constant 0 : index
    %c0_172 = arith.constant 0 : index
    %193 = vector.load %arg11[%c4_170, %c0_171, %c0_172] : memref<9x32x128xbf16, #tpu.memory_space<vmem>>, vector<1x32x128xbf16>
    %194 = vector.shape_cast %193 : vector<1x32x128xbf16> to vector<32x128xbf16>
    %cst_173 = arith.constant dense<0.000000e+00> : vector<1x128xf32>
    %195 = tpu.matmul %192, %194, %cst_173 {dimension_numbers = #tpu.dot_dimension_numbers<[1], [0], [0], [1], [0, 0, 1, 1], [], []>} : vector<1x32xbf16>, vector<32x128xbf16>, vector<1x128xf32> -> vector<1x128xf32>
    %196 = arith.addf %191, %195 : vector<1x128xf32>
    %197 = vector.extract_strided_slice %170 {offsets = [5, 0], sizes = [1, 32], strides = [1, 1]} : vector<9x32xbf16> to vector<1x32xbf16>
    %c5_174 = arith.constant 5 : index
    %c0_175 = arith.constant 0 : index
    %c0_176 = arith.constant 0 : index
    %198 = vector.load %arg11[%c5_174, %c0_175, %c0_176] : memref<9x32x128xbf16, #tpu.memory_space<vmem>>, vector<1x32x128xbf16>
    %199 = vector.shape_cast %198 : vector<1x32x128xbf16> to vector<32x128xbf16>
    %cst_177 = arith.constant dense<0.000000e+00> : vector<1x128xf32>
    %200 = tpu.matmul %197, %199, %cst_177 {dimension_numbers = #tpu.dot_dimension_numbers<[1], [0], [0], [1], [0, 0, 1, 1], [], []>} : vector<1x32xbf16>, vector<32x128xbf16>, vector<1x128xf32> -> vector<1x128xf32>
    %201 = arith.addf %196, %200 : vector<1x128xf32>
    %202 = vector.extract_strided_slice %170 {offsets = [6, 0], sizes = [1, 32], strides = [1, 1]} : vector<9x32xbf16> to vector<1x32xbf16>
    %c6_178 = arith.constant 6 : index
    %c0_179 = arith.constant 0 : index
    %c0_180 = arith.constant 0 : index
    %203 = vector.load %arg11[%c6_178, %c0_179, %c0_180] : memref<9x32x128xbf16, #tpu.memory_space<vmem>>, vector<1x32x128xbf16>
    %204 = vector.shape_cast %203 : vector<1x32x128xbf16> to vector<32x128xbf16>
    %cst_181 = arith.constant dense<0.000000e+00> : vector<1x128xf32>
    %205 = tpu.matmul %202, %204, %cst_181 {dimension_numbers = #tpu.dot_dimension_numbers<[1], [0], [0], [1], [0, 0, 1, 1], [], []>} : vector<1x32xbf16>, vector<32x128xbf16>, vector<1x128xf32> -> vector<1x128xf32>
    %206 = arith.addf %201, %205 : vector<1x128xf32>
    %207 = vector.extract_strided_slice %170 {offsets = [7, 0], sizes = [1, 32], strides = [1, 1]} : vector<9x32xbf16> to vector<1x32xbf16>
    %c7_182 = arith.constant 7 : index
    %c0_183 = arith.constant 0 : index
    %c0_184 = arith.constant 0 : index
    %208 = vector.load %arg11[%c7_182, %c0_183, %c0_184] : memref<9x32x128xbf16, #tpu.memory_space<vmem>>, vector<1x32x128xbf16>
    %209 = vector.shape_cast %208 : vector<1x32x128xbf16> to vector<32x128xbf16>
    %cst_185 = arith.constant dense<0.000000e+00> : vector<1x128xf32>
    %210 = tpu.matmul %207, %209, %cst_185 {dimension_numbers = #tpu.dot_dimension_numbers<[1], [0], [0], [1], [0, 0, 1, 1], [], []>} : vector<1x32xbf16>, vector<32x128xbf16>, vector<1x128xf32> -> vector<1x128xf32>
    %211 = arith.addf %206, %210 : vector<1x128xf32>
    %212 = vector.extract_strided_slice %170 {offsets = [8, 0], sizes = [1, 32], strides = [1, 1]} : vector<9x32xbf16> to vector<1x32xbf16>
    %c8_186 = arith.constant 8 : index
    %c0_187 = arith.constant 0 : index
    %c0_188 = arith.constant 0 : index
    %213 = vector.load %arg11[%c8_186, %c0_187, %c0_188] : memref<9x32x128xbf16, #tpu.memory_space<vmem>>, vector<1x32x128xbf16>
    %214 = vector.shape_cast %213 : vector<1x32x128xbf16> to vector<32x128xbf16>
    %cst_189 = arith.constant dense<0.000000e+00> : vector<1x128xf32>
    %215 = tpu.matmul %212, %214, %cst_189 {dimension_numbers = #tpu.dot_dimension_numbers<[1], [0], [0], [1], [0, 0, 1, 1], [], []>} : vector<1x32xbf16>, vector<32x128xbf16>, vector<1x128xf32> -> vector<1x128xf32>
    %216 = arith.addf %211, %215 : vector<1x128xf32>
    %c0_190 = arith.constant 0 : index
    %c0_191 = arith.constant 0 : index
    %217 = vector.load %arg12[%c0_190, %c0_191] : memref<1x128xf32, #tpu.memory_space<vmem>>, vector<1x128xf32>
    %218 = arith.addf %216, %217 : vector<1x128xf32>
    %cst_192 = arith.constant 0.000000e+00 : f32
    %219 = vector.broadcast %cst_192 : f32 to vector<1x128xf32>
    %220 = arith.maximumf %218, %219 : vector<1x128xf32>
    %221 = arith.truncf %220 : vector<1x128xf32> to vector<1x128xbf16>
    %c0_193 = arith.constant 0 : index
    %c0_194 = arith.constant 0 : index
    %222 = vector.load %arg13[%c0_193, %c0_194] : memref<128x16xbf16, #tpu.memory_space<vmem>>, vector<128x16xbf16>
    %cst_195 = arith.constant dense<0.000000e+00> : vector<1x16xf32>
    %223 = tpu.matmul %221, %222, %cst_195 {dimension_numbers = #tpu.dot_dimension_numbers<[1], [0], [0], [1], [0, 0, 1, 1], [], []>} : vector<1x128xbf16>, vector<128x16xbf16>, vector<1x16xf32> -> vector<1x16xf32>
    %c0_196 = arith.constant 0 : index
    %c0_197 = arith.constant 0 : index
    %224 = vector.load %arg14[%c0_196, %c0_197] : memref<1x16xf32, #tpu.memory_space<vmem>>, vector<1x16xf32>
    %225 = arith.addf %223, %224 : vector<1x16xf32>
    %c0_198 = arith.constant 0 : index
    %c0_199 = arith.constant 0 : index
    %c0_200 = arith.constant 0 : index
    %226 = vector.load %arg15[%c0_198, %c0_199, %c0_200] : memref<1x1x16xf32, #tpu.memory_space<vmem>>, vector<1x1x16xf32>
    %227 = vector.shape_cast %226 : vector<1x1x16xf32> to vector<1x16xf32>
    %228 = vector.shape_cast %225 : vector<1x16xf32> to vector<1x1x16xf32>
    tpu.vector_store %arg15[%c0_198, %c0_199, %c0_200], %228 {strides = array<i32>} : memref<1x1x16xf32, #tpu.memory_space<vmem>>, vector<1x1x16xf32>,
    return
  }
  func.func @transform_0(%arg0: i32) -> (i32, i32, i32) {
    %c0_i32 = arith.constant 0 : i32
    %c0_i32_0 = arith.constant 0 : i32
    %c0_i32_1 = arith.constant 0 : i32
    return %arg0, %c0_i32, %c0_i32_0 : i32, i32, i32
  }
  func.func @transform_1(%arg0: i32) -> (i32, i32) {
    %c0_i32 = arith.constant 0 : i32
    %c0_i32_0 = arith.constant 0 : i32
    %c0_i32_1 = arith.constant 0 : i32
    return %c0_i32, %c0_i32_0 : i32, i32
  }
  func.func @transform_2(%arg0: i32) -> (i32, i32) {
    %c0_i32 = arith.constant 0 : i32
    %c0_i32_0 = arith.constant 0 : i32
    %c0_i32_1 = arith.constant 0 : i32
    return %c0_i32, %c0_i32_0 : i32, i32
  }
  func.func @transform_3(%arg0: i32) -> (i32, i32, i32) {
    %c0_i32 = arith.constant 0 : i32
    %c0_i32_0 = arith.constant 0 : i32
    %c0_i32_1 = arith.constant 0 : i32
    %c0_i32_2 = arith.constant 0 : i32
    return %c0_i32, %c0_i32_0, %c0_i32_1 : i32, i32, i32
  }
  func.func @transform_4(%arg0: i32) -> (i32, i32, i32) {
    %c0_i32 = arith.constant 0 : i32
    %c0_i32_0 = arith.constant 0 : i32
    %c0_i32_1 = arith.constant 0 : i32
    %c0_i32_2 = arith.constant 0 : i32
    return %c0_i32, %c0_i32_0, %c0_i32_1 : i32, i32, i32
  }
  func.func @transform_5(%arg0: i32) -> (i32, i32) {
    %c0_i32 = arith.constant 0 : i32
    %c0_i32_0 = arith.constant 0 : i32
    %c0_i32_1 = arith.constant 0 : i32
    return %c0_i32, %c0_i32_0 : i32, i32
  }
  func.func @transform_6(%arg0: i32) -> (i32, i32) {
    %c0_i32 = arith.constant 0 : i32
    %c0_i32_0 = arith.constant 0 : i32
    %c0_i32_1 = arith.constant 0 : i32
    return %c0_i32, %c0_i32_0 : i32, i32
  }
  func.func @transform_7(%arg0: i32) -> (i32, i32, i32) {
    %c0_i32 = arith.constant 0 : i32
    %c0_i32_0 = arith.constant 0 : i32
    %c0_i32_1 = arith.constant 0 : i32
    %c0_i32_2 = arith.constant 0 : i32
    return %c0_i32, %c0_i32_0, %c0_i32_1 : i32, i32, i32
  }
  func.func @transform_8(%arg0: i32) -> (i32, i32, i32) {
    %c0_i32 = arith.constant 0 : i32
    %c0_i32_0 = arith.constant 0 : i32
    %c0_i32_1 = arith.constant 0 : i32
    %c0_i32_2 = arith.constant 0 : i32
    return %c0_i32, %c0_i32_0, %c0_i32_1 : i32, i32, i32
  }
  func.func @transform_9(%arg0: i32) -> (i32, i32) {
    %c0_i32 = arith.constant 0 : i32
    %c0_i32_0 = arith.constant 0 : i32
    %c0_i32_1 = arith.constant 0 : i32
    return %c0_i32, %c0_i32_0 : i32, i32
  }
  func.func @transform_10(%arg0: i32) -> (i32, i32, i32) {
    %c0_i32 = arith.constant 0 : i32
    %c0_i32_0 = arith.constant 0 : i32
    %c0_i32_1 = arith.constant 0 : i32
    %c0_i32_2 = arith.constant 0 : i32
    return %c0_i32, %c0_i32_0, %c0_i32_1 : i32, i32, i32
  }
  func.func @transform_11(%arg0: i32) -> (i32, i32) {
    %c0_i32 = arith.constant 0 : i32
    %c0_i32_0 = arith.constant 0 : i32
    %c0_i32_1 = arith.constant 0 : i32
    return %c0_i32, %c0_i32_0 : i32, i32
  }
  func.func @transform_12(%arg0: i32) -> (i32, i32) {
    %c0_i32 = arith.constant 0 : i32
    %c0_i32_0 = arith.constant 0 : i32
    %c0_i32_1 = arith.constant 0 : i32
    return %c0_i32, %c0_i32_0 : i32, i32
  }
  func.func @transform_13(%arg0: i32) -> (i32, i32) {
    %c0_i32 = arith.constant 0 : i32
    %c0_i32_0 = arith.constant 0 : i32
    %c0_i32_1 = arith.constant 0 : i32
    return %c0_i32, %c0_i32_0 : i32, i32
  }
  func.func @transform_14(%arg0: i32) -> (i32, i32, i32) {
    %c0_i32 = arith.constant 0 : i32
    %c0_i32_0 = arith.constant 0 : i32
    %c0_i32_1 = arith.constant 0 : i32
    return %arg0, %c0_i32, %c0_i32_0 : i32, i32, i32
  }
}

</mosaic_0001>

<llo_original>
// kernel: encmnist_forward.1
$region0: #{encmnist_forward.1}
  #allocation0 [shape = 'u32[]', space=smem, size = 0x4, offset = 0x4, fixed_abs, tag = 'smem constant byte address 0x4 - core index']
  #allocation1 [shape = 'u32[72,128]{1,0:T(1,128)}', space=vmem, size = 0x9000, scoped, tag = 'internal scratch']
  %s0 = inlined_call_operand.vmem [shape: bf16[2,196,9], index: 0, kind: input, shape index: {}]
  %s1 = inlined_call_operand.vmem [shape: bf16[9,8], index: 1, kind: input, shape index: {}]
  %s2 = inlined_call_operand.vmem [shape: f32[1,8], index: 2, kind: input, shape index: {}]
  %s3 = inlined_call_operand.vmem [shape: bf16[9,49,196], index: 3, kind: input, shape index: {}]
  %s4 = inlined_call_operand.vmem [shape: bf16[9,8,16], index: 4, kind: input, shape index: {}]
  %s5 = inlined_call_operand.vmem [shape: f32[1,16], index: 5, kind: input, shape index: {}]
  %s6 = inlined_call_operand.vmem [shape: f32[1,16], index: 6, kind: input, shape index: {}]
  %s7 = inlined_call_operand.vmem [shape: bf16[9,9,49], index: 7, kind: input, shape index: {}]
  %s8 = inlined_call_operand.vmem [shape: bf16[9,16,32], index: 8, kind: input, shape index: {}]
  %s9 = inlined_call_operand.vmem [shape: f32[1,32], index: 9, kind: input, shape index: {}]
  %s10 = inlined_call_operand.vmem [shape: bf16[9,32,128], index: 10, kind: input, shape index: {}]
  %s11 = inlined_call_operand.vmem [shape: f32[1,128], index: 11, kind: input, shape index: {}]
  %s12 = inlined_call_operand.vmem [shape: bf16[128,16], index: 12, kind: input, shape index: {}]
  %s13 = inlined_call_operand.vmem [shape: f32[1,16], index: 13, kind: input, shape index: {}]
  %s14 = inlined_call_operand.hbm [shape: f32[2,1,16], index: 14, kind: output, shape index: {}]
  %s15 = sld [smem:[#allocation0]]
  $region89: #{encmnist_forward.1} parent=0
    _
  %s17 = ssub.s32 1, %s15
  %s18 = scalar_select 0, %s17, %s15
  $region1: #{encmnist_forward.1} parent=0
    #allocation2 [shape = 'u8[1024]{0}', space=vmem, size = 0x400, scoped, tag = 'output window, operand 0']
    #allocation3 [shape = 's32[2]{0}', space=sflag, size = 0x8, scoped, tag = 'scoped memory for encmnist_forward.1']
    %19 = vsyncpa [#allocation3], 0
    %s20 = scalar_lea.sflag [#allocation3], 1
    %21 = vsyncpa %s20, 0
    loop: start=0, step=1, limit=4
    $region2: #{encmnist_forward.1} parent=1 // loop_pre_header
      _
    $region3: #{encmnist_forward.1} parent=1 // loop_header
      %s23 = sphi 0, %s27
      %p24 = scmp.ge.s32.totalorder %s23, 4
      %s33 = sphi 0, %s35
      %s36 = sphi 0, %s33
      %s37 = sphi 0, %s36
      %s53 = sphi 0, %s37
      %s57 = sphi 0, %s57
      %s59 = sphi 0, %s57
      %s60 = sphi 0, %s59
      %s74 = sphi 0, %s60
      %s78 = sphi 0, %s78
      %s80 = sphi 0, %s78
      %s81 = sphi 0, %s80
      %s95 = sphi 0, %s81
      %s99 = sphi 0, %s99
      %s101 = sphi 0, %s99
      %s102 = sphi 0, %s101
      %s116 = sphi 0, %s102
      %s120 = sphi 0, %s120
      %s122 = sphi 0, %s120
      %s123 = sphi 0, %s122
      %s137 = sphi 0, %s123
      %s141 = sphi 0, %s141
      %s143 = sphi 0, %s141
      %s144 = sphi 0, %s143
      %s158 = sphi 0, %s144
      %s162 = sphi 0, %s162
      %s164 = sphi 0, %s162
      %s165 = sphi 0, %s164
      %s179 = sphi 0, %s165
      %s183 = sphi 0, %s183
      %s185 = sphi 0, %s183
      %s186 = sphi 0, %s185
      %s200 = sphi 0, %s186
      %s204 = sphi 0, %s204
      %s206 = sphi 0, %s204
      %s207 = sphi 0, %s206
      %s221 = sphi 0, %s207
      %s225 = sphi 0, %s225
      %s227 = sphi 0, %s225
      %s228 = sphi 0, %s227
      %s242 = sphi 0, %s228
      %s246 = sphi 0, %s246
      %s248 = sphi 0, %s246
      %s249 = sphi 0, %s248
      %s263 = sphi 0, %s249
      %s267 = sphi 0, %s267
      %s269 = sphi 0, %s267
      %s270 = sphi 0, %s269
      %s284 = sphi 0, %s270
      %s288 = sphi 0, %s288
      %s290 = sphi 0, %s288
      %s291 = sphi 0, %s290
      %s305 = sphi 0, %s291
      %s309 = sphi 0, %s309
      %s311 = sphi 0, %s309
      %s312 = sphi 0, %s311
      %s326 = sphi 0, %s312
      %s332 = sphi 0, %s334
      %s335 = sphi 0, %s332
      %s336 = sphi 0, %s335
      %s352 = sphi 0, %s336
    $region4: #{encmnist_forward.1} parent=1 // loop_header_branch
      %26 = sbr.rel (%p24) target = $region8
    $region5: #{encmnist_forward.1} parent=1 // loop_body
      %s28 = ssub.s32 %s23, 1
      %s29 = ssub.s32 %s23, 2
      %s30 = sadd.s32 %s23, 1
      %s31 = ssub.s32 %s23, %s30
      %p32 = scmp.eq.s32.totalorder %s31, 0
      %s34 = sadd.s32 %s33, 1
      %s35 = scalar_select %p32, %s33, %s34
      %p38 = pneg %p32
      %p39 = scmp.eq.s32.totalorder %s23, 1
      %p40 = por %p38, %p39
      %p41 = scmp.ne.s32.totalorder %s33, %s36
      %p42 = scmp.eq.s32.totalorder %s23, 0
      %p43 = por %p41, %p42
      %p44 = scmp.ne.s32.totalorder %s33, %s36
      %p45 = scmp.eq.s32.totalorder %s28, 1
      %p46 = por %p44, %p45
      %p47 = scmp.ne.s32.totalorder %s36, %s37
      %p48 = scmp.eq.s32.totalorder %s28, 0
      %p49 = por %p47, %p48
      %p50 = scmp.ne.s32.totalorder %s36, %s37
      %p51 = scmp.eq.s32.totalorder %s29, 1
      %p52 = por %p50, %p51
      %p54 = scmp.ne.s32.totalorder %s37, %s53
      %p55 = scmp.eq.s32.totalorder %s29, 0
      %p56 = por %p54, %p55
      %s58 = sadd.s32 %s57, 1
      %p61 = scmp.eq.s32.totalorder %s23, 1
      %p62 = scmp.ne.s32.totalorder %s57, %s59
      %p63 = scmp.eq.s32.totalorder %s23, 0
      %p64 = por %p62, %p63
      %p65 = scmp.ne.s32.totalorder %s57, %s59
      %p66 = scmp.eq.s32.totalorder %s28, 1
      %p67 = por %p65, %p66
      %p68 = scmp.ne.s32.totalorder %s59, %s60
      %p69 = scmp.eq.s32.totalorder %s28, 0
      %p70 = por %p68, %p69
      %p71 = scmp.ne.s32.totalorder %s59, %s60
      %p72 = scmp.eq.s32.totalorder %s29, 1
      %p73 = por %p71, %p72
      %p75 = scmp.ne.s32.totalorder %s60, %s74
      %p76 = scmp.eq.s32.totalorder %s29, 0
      %p77 = por %p75, %p76
      %s79 = sadd.s32 %s78, 1
      %p82 = scmp.eq.s32.totalorder %s23, 1
      %p83 = scmp.ne.s32.totalorder %s78, %s80
      %p84 = scmp.eq.s32.totalorder %s23, 0
      %p85 = por %p83, %p84
      %p86 = scmp.ne.s32.totalorder %s78, %s80
      %p87 = scmp.eq.s32.totalorder %s28, 1
      %p88 = por %p86, %p87
      %p89 = scmp.ne.s32.totalorder %s80, %s81
      %p90 = scmp.eq.s32.totalorder %s28, 0
      %p91 = por %p89, %p90
      %p92 = scmp.ne.s32.totalorder %s80, %s81
      %p93 = scmp.eq.s32.totalorder %s29, 1
      %p94 = por %p92, %p93
      %p96 = scmp.ne.s32.totalorder %s81, %s95
      %p97 = scmp.eq.s32.totalorder %s29, 0
      %p98 = por %p96, %p97
      %s100 = sadd.s32 %s99, 1
      %p103 = scmp.eq.s32.totalorder %s23, 1
      %p104 = scmp.ne.s32.totalorder %s99, %s101
      %p105 = scmp.eq.s32.totalorder %s23, 0
      %p106 = por %p104, %p105
      %p107 = scmp.ne.s32.totalorder %s99, %s101
      %p108 = scmp.eq.s32.totalorder %s28, 1
      %p109 = por %p107, %p108
      %p110 = scmp.ne.s32.totalorder %s101, %s102
      %p111 = scmp.eq.s32.totalorder %s28, 0
      %p112 = por %p110, %p111
      %p113 = scmp.ne.s32.totalorder %s101, %s102
      %p114 = scmp.eq.s32.totalorder %s29, 1
      %p115 = por %p113, %p114
      %p117 = scmp.ne.s32.totalorder %s102, %s116
      %p118 = scmp.eq.s32.totalorder %s29, 0
      %p119 = por %p117, %p118
      %s121 = sadd.s32 %s120, 1
      %p124 = scmp.eq.s32.totalorder %s23, 1
      %p125 = scmp.ne.s32.totalorder %s120, %s122
      %p126 = scmp.eq.s32.totalorder %s23, 0
      %p127 = por %p125, %p126
      %p128 = scmp.ne.s32.totalorder %s120, %s122
      %p129 = scmp.eq.s32.totalorder %s28, 1
      %p130 = por %p128, %p129
      %p131 = scmp.ne.s32.totalorder %s122, %s123
      %p132 = scmp.eq.s32.totalorder %s28, 0
      %p133 = por %p131, %p132
      %p134 = scmp.ne.s32.totalorder %s122, %s123
      %p135 = scmp.eq.s32.totalorder %s29, 1
      %p136 = por %p134, %p135
      %p138 = scmp.ne.s32.totalorder %s123, %s137
      %p139 = scmp.eq.s32.totalorder %s29, 0
      %p140 = por %p138, %p139
      %s142 = sadd.s32 %s141, 1
      %p145 = scmp.eq.s32.totalorder %s23, 1
      %p146 = scmp.ne.s32.totalorder %s141, %s143
      %p147 = scmp.eq.s32.totalorder %s23, 0
      %p148 = por %p146, %p147
      %p149 = scmp.ne.s32.totalorder %s141, %s143
      %p150 = scmp.eq.s32.totalorder %s28, 1
      %p151 = por %p149, %p150
      %p152 = scmp.ne.s32.totalorder %s143, %s144
      %p153 = scmp.eq.s32.totalorder %s28, 0
      %p154 = por %p152, %p153
      %p155 = scmp.ne.s32.totalorder %s143, %s144
      %p156 = scmp.eq.s32.totalorder %s29, 1
      %p157 = por %p155, %p156
      %p159 = scmp.ne.s32.totalorder %s144, %s158
      %p160 = scmp.eq.s32.totalorder %s29, 0
      %p161 = por %p159, %p160
      %s163 = sadd.s32 %s162, 1
      %p166 = scmp.eq.s32.totalorder %s23, 1
      %p167 = scmp.ne.s32.totalorder %s162, %s164
      %p168 = scmp.eq.s32.totalorder %s23, 0
      %p169 = por %p167, %p168
      %p170 = scmp.ne.s32.totalorder %s162, %s164
      %p171 = scmp.eq.s32.totalorder %s28, 1
      %p172 = por %p170, %p171
      %p173 = scmp.ne.s32.totalorder %s164, %s165
      %p174 = scmp.eq.s32.totalorder %s28, 0
      %p175 = por %p173, %p174
      %p176 = scmp.ne.s32.totalorder %s164, %s165
      %p177 = scmp.eq.s32.totalorder %s29, 1
      %p178 = por %p176, %p177
      %p180 = scmp.ne.s32.totalorder %s165, %s179
      %p181 = scmp.eq.s32.totalorder %s29, 0
      %p182 = por %p180, %p181
      %s184 = sadd.s32 %s183, 1
      %p187 = scmp.eq.s32.totalorder %s23, 1
      %p188 = scmp.ne.s32.totalorder %s183, %s185
      %p189 = scmp.eq.s32.totalorder %s23, 0
      %p190 = por %p188, %p189
      %p191 = scmp.ne.s32.totalorder %s183, %s185
      %p192 = scmp.eq.s32.totalorder %s28, 1
      %p193 = por %p191, %p192
      %p194 = scmp.ne.s32.totalorder %s185, %s186
      %p195 = scmp.eq.s32.totalorder %s28, 0
      %p196 = por %p194, %p195
      %p197 = scmp.ne.s32.totalorder %s185, %s186
      %p198 = scmp.eq.s32.totalorder %s29, 1
      %p199 = por %p197, %p198
      %p201 = scmp.ne.s32.totalorder %s186, %s200
      %p202 = scmp.eq.s32.totalorder %s29, 0
      %p203 = por %p201, %p202
      %s205 = sadd.s32 %s204, 1
      %p208 = scmp.eq.s32.totalorder %s23, 1
      %p209 = scmp.ne.s32.totalorder %s204, %s206
      %p210 = scmp.eq.s32.totalorder %s23, 0
      %p211 = por %p209, %p210
      %p212 = scmp.ne.s32.totalorder %s204, %s206
      %p213 = scmp.eq.s32.totalorder %s28, 1
      %p214 = por %p212, %p213
      %p215 = scmp.ne.s32.totalorder %s206, %s207
      %p216 = scmp.eq.s32.totalorder %s28, 0
      %p217 = por %p215, %p216
      %p218 = scmp.ne.s32.totalorder %s206, %s207
      %p219 = scmp.eq.s32.totalorder %s29, 1
      %p220 = por %p218, %p219
      %p222 = scmp.ne.s32.totalorder %s207, %s221
      %p223 = scmp.eq.s32.totalorder %s29, 0
      %p224 = por %p222, %p223
      %s226 = sadd.s32 %s225, 1
      %p229 = scmp.eq.s32.totalorder %s23, 1
      %p230 = scmp.ne.s32.totalorder %s225, %s227
      %p231 = scmp.eq.s32.totalorder %s23, 0
      %p232 = por %p230, %p231
      %p233 = scmp.ne.s32.totalorder %s225, %s227
      %p234 = scmp.eq.s32.totalorder %s28, 1
      %p235 = por %p233, %p234
      %p236 = scmp.ne.s32.totalorder %s227, %s228
      %p237 = scmp.eq.s32.totalorder %s28, 0
      %p238 = por %p236, %p237
      %p239 = scmp.ne.s32.totalorder %s227, %s228
      %p240 = scmp.eq.s32.totalorder %s29, 1
      %p241 = por %p239, %p240
      %p243 = scmp.ne.s32.totalorder %s228, %s242
      %p244 = scmp.eq.s32.totalorder %s29, 0
      %p245 = por %p243, %p244
      %s247 = sadd.s32 %s246, 1
      %p250 = scmp.eq.s32.totalorder %s23, 1
      %p251 = scmp.ne.s32.totalorder %s246, %s248
      %p252 = scmp.eq.s32.totalorder %s23, 0
      %p253 = por %p251, %p252
      %p254 = scmp.ne.s32.totalorder %s246, %s248
      %p255 = scmp.eq.s32.totalorder %s28, 1
      %p256 = por %p254, %p255
      %p257 = scmp.ne.s32.totalorder %s248, %s249
      %p258 = scmp.eq.s32.totalorder %s28, 0
      %p259 = por %p257, %p258
      %p260 = scmp.ne.s32.totalorder %s248, %s249
      %p261 = scmp.eq.s32.totalorder %s29, 1
      %p262 = por %p260, %p261
      %p264 = scmp.ne.s32.totalorder %s249, %s263
      %p265 = scmp.eq.s32.totalorder %s29, 0
      %p266 = por %p264, %p265
      %s268 = sadd.s32 %s267, 1
      %p271 = scmp.eq.s32.totalorder %s23, 1
      %p272 = scmp.ne.s32.totalorder %s267, %s269
      %p273 = scmp.eq.s32.totalorder %s23, 0
      %p274 = por %p272, %p273
      %p275 = scmp.ne.s32.totalorder %s267, %s269
      %p276 = scmp.eq.s32.totalorder %s28, 1
      %p277 = por %p275, %p276
      %p278 = scmp.ne.s32.totalorder %s269, %s270
      %p279 = scmp.eq.s32.totalorder %s28, 0
      %p280 = por %p278, %p279
      %p281 = scmp.ne.s32.totalorder %s269, %s270
      %p282 = scmp.eq.s32.totalorder %s29, 1
      %p283 = por %p281, %p282
      %p285 = scmp.ne.s32.totalorder %s270, %s284
      %p286 = scmp.eq.s32.totalorder %s29, 0
      %p287 = por %p285, %p286
      %s289 = sadd.s32 %s288, 1
      %p292 = scmp.eq.s32.totalorder %s23, 1
      %p293 = scmp.ne.s32.totalorder %s288, %s290
      %p294 = scmp.eq.s32.totalorder %s23, 0
      %p295 = por %p293, %p294
      %p296 = scmp.ne.s32.totalorder %s288, %s290
      %p297 = scmp.eq.s32.totalorder %s28, 1
      %p298 = por %p296, %p297
      %p299 = scmp.ne.s32.totalorder %s290, %s291
      %p300 = scmp.eq.s32.totalorder %s28, 0
      %p301 = por %p299, %p300
      %p302 = scmp.ne.s32.totalorder %s290, %s291
      %p303 = scmp.eq.s32.totalorder %s29, 1
      %p304 = por %p302, %p303
      %p306 = scmp.ne.s32.totalorder %s291, %s305
      %p307 = scmp.eq.s32.totalorder %s29, 0
      %p308 = por %p306, %p307
      %s310 = sadd.s32 %s309, 1
      %p313 = scmp.eq.s32.totalorder %s23, 1
      %p314 = scmp.ne.s32.totalorder %s309, %s311
      %p315 = scmp.eq.s32.totalorder %s23, 0
      %p316 = por %p314, %p315
      %p317 = scmp.ne.s32.totalorder %s309, %s311
      %p318 = scmp.eq.s32.totalorder %s28, 1
      %p319 = por %p317, %p318
      %p320 = scmp.ne.s32.totalorder %s311, %s312
      %p321 = scmp.eq.s32.totalorder %s28, 0
      %p322 = por %p320, %p321
      %p323 = scmp.ne.s32.totalorder %s311, %s312
      %p324 = scmp.eq.s32.totalorder %s29, 1
      %p325 = por %p323, %p324
      %p327 = scmp.ne.s32.totalorder %s312, %s326
      %p328 = scmp.eq.s32.totalorder %s29, 0
      %p329 = por %p327, %p328
      %s330 = ssub.s32 %s23, %s30
      %p331 = scmp.eq.s32.totalorder %s330, 0
      %s333 = sadd.s32 %s332, 1
      %s334 = scalar_select %p331, %s332, %s333
      %p337 = pneg %p331
      %p338 = scmp.eq.s32.totalorder %s23, 1
      %p339 = por %p337, %p338
      %p340 = scmp.ne.s32.totalorder %s332, %s335
      %p341 = scmp.eq.s32.totalorder %s23, 0
      %p342 = por %p340, %p341
      %p343 = scmp.ne.s32.totalorder %s332, %s335
      %p344 = scmp.eq.s32.totalorder %s28, 1
      %p345 = por %p343, %p344
      %p346 = scmp.ne.s32.totalorder %s335, %s336
      %p347 = scmp.eq.s32.totalorder %s28, 0
      %p348 = por %p346, %p347
      %p349 = scmp.ne.s32.totalorder %s335, %s336
      %p350 = scmp.eq.s32.totalorder %s29, 1
      %p351 = por %p349, %p350
      %p353 = scmp.ne.s32.totalorder %s336, %s352
      %p354 = scmp.eq.s32.totalorder %s29, 0
      %p355 = por %p353, %p354
      %p356 = scmp.le.s32.totalorder 1, %s23
      %p357 = scmp.lt.s32.totalorder %s23, 3
      %p358 = pnand %p356, %p357
      %p359 = pneg %p358
      // Predicated region
      $region9: #{encmnist_forward.1} parent=5 // pred_check
        _
      $region10: #{encmnist_forward.1} parent=5 // pred_check_branch
        %361 = sbr.rel (%p358) target = $region12
      $region11: #{encmnist_forward.1} parent=5 // pred_region
        %s362 = ssub.s32 %s23, 1
        // Predicated region
        $region13: #{encmnist_forward.1} parent=11 // pred_check
          %p363 = pneg %p70
        $region14: #{encmnist_forward.1} parent=11 // pred_check_branch
          %365 = sbr.rel (%p363) target = $region16
        $region15: #{encmnist_forward.1} parent=11 // pred_region
          _
        $region16: #{encmnist_forward.1} parent=11 // pred_fallthru
          _
        // Predicated region
        $region17: #{encmnist_forward.1} parent=11 // pred_check
          %p366 = pneg %p91
        $region18: #{encmnist_forward.1} parent=11 // pred_check_branch
          %368 = sbr.rel (%p366) target = $region20
        $region19: #{encmnist_forward.1} parent=11 // pred_region
          _
        $region20: #{encmnist_forward.1} parent=11 // pred_fallthru
          _
        // Predicated region
        $region21: #{encmnist_forward.1} parent=11 // pred_check
          %p369 = pneg %p112
        $region22: #{encmnist_forward.1} parent=11 // pred_check_branch
          %371 = sbr.rel (%p369) target = $region24
        $region23: #{encmnist_forward.1} parent=11 // pred_region
          _
        $region24: #{encmnist_forward.1} parent=11 // pred_fallthru
          _
        // Predicated region
        $region25: #{encmnist_forward.1} parent=11 // pred_check
          %p372 = pneg %p133
        $region26: #{encmnist_forward.1} parent=11 // pred_check_branch
          %374 = sbr.rel (%p372) target = $region28
        $region27: #{encmnist_forward.1} parent=11 // pred_region
          _
        $region28: #{encmnist_forward.1} parent=11 // pred_fallthru
          _
        // Predicated region
        $region29: #{encmnist_forward.1} parent=11 // pred_check
          %p375 = pneg %p154
        $region30: #{encmnist_forward.1} parent=11 // pred_check_branch
          %377 = sbr.rel (%p375) target = $region32
        $region31: #{encmnist_forward.1} parent=11 // pred_region
          _
        $region32: #{encmnist_forward.1} parent=11 // pred_fallthru
          _
        // Predicated region
        $region33: #{encmnist_forward.1} parent=11 // pred_check
          %p378 = pneg %p175
        $region34: #{encmnist_forward.1} parent=11 // pred_check_branch
          %380 = sbr.rel (%p378) target = $region36
        $region35: #{encmnist_forward.1} parent=11 // pred_region
          _
        $region36: #{encmnist_forward.1} parent=11 // pred_fallthru
          _
        // Predicated region
        $region37: #{encmnist_forward.1} parent=11 // pred_check
          %p381 = pneg %p196
        $region38: #{encmnist_forward.1} parent=11 // pred_check_branch
          %383 = sbr.rel (%p381) target = $region40
        $region39: #{encmnist_forward.1} parent=11 // pred_region
          _
        $region40: #{encmnist_forward.1} parent=11 // pred_fallthru
          _
        // Predicated region
        $region41: #{encmnist_forward.1} parent=11 // pred_check
          %p384 = pneg %p217
        $region42: #{encmnist_forward.1} parent=11 // pred_check_branch
          %386 = sbr.rel (%p384) target = $region44
        $region43: #{encmnist_forward.1} parent=11 // pred_region
          _
        $region44: #{encmnist_forward.1} parent=11 // pred_fallthru
          _
        // Predicated region
        $region45: #{encmnist_forward.1} parent=11 // pred_check
          %p387 = pneg %p238
        $region46: #{encmnist_forward.1} parent=11 // pred_check_branch
          %389 = sbr.rel (%p387) target = $region48
        $region47: #{encmnist_forward.1} parent=11 // pred_region
          _
        $region48: #{encmnist_forward.1} parent=11 // pred_fallthru
          _
        // Predicated region
        $region49: #{encmnist_forward.1} parent=11 // pred_check
          %p390 = pneg %p259
        $region50: #{encmnist_forward.1} parent=11 // pred_check_branch
          %392 = sbr.rel (%p390) target = $region52
        $region51: #{encmnist_forward.1} parent=11 // pred_region
          _
        $region52: #{encmnist_forward.1} parent=11 // pred_fallthru
          _
        // Predicated region
        $region53: #{encmnist_forward.1} parent=11 // pred_check
          %p393 = pneg %p280
        $region54: #{encmnist_forward.1} parent=11 // pred_check_branch
          %395 = sbr.rel (%p393) target = $region56
        $region55: #{encmnist_forward.1} parent=11 // pred_region
          _
        $region56: #{encmnist_forward.1} parent=11 // pred_fallthru
          _
        // Predicated region
        $region57: #{encmnist_forward.1} parent=11 // pred_check
          %p396 = pneg %p301
        $region58: #{encmnist_forward.1} parent=11 // pred_check_branch
          %398 = sbr.rel (%p396) target = $region60
        $region59: #{encmnist_forward.1} parent=11 // pred_region
          _
        $region60: #{encmnist_forward.1} parent=11 // pred_fallthru
          _
        // Predicated region
        $region61: #{encmnist_forward.1} parent=11 // pred_check
          %p399 = pneg %p322
        $region62: #{encmnist_forward.1} parent=11 // pred_check_branch
          %401 = sbr.rel (%p399) target = $region64
        $region63: #{encmnist_forward.1} parent=11 // pred_region
          _
        $region64: #{encmnist_forward.1} parent=11 // pred_fallthru
          _
      $region12: #{encmnist_forward.1} parent=5 // pred_fallthru
        _
      %p402 = scmp.lt.s32.totalorder %s23, 2
      // Predicated region
      $region65: #{encmnist_forward.1} parent=5 // pred_check
        %p403 = pneg %p402
      $region66: #{encmnist_forward.1} parent=5 // pred_check_branch
        %405 = sbr.rel (%p403) target = $region68
      $region67: #{encmnist_forward.1} parent=5 // pred_region
        // Predicated region
        $region69: #{encmnist_forward.1} parent=67 // pred_check
          %p406 = pneg %p43
        $region70: #{encmnist_forward.1} parent=67 // pred_check_branch
          %408 = sbr.rel (%p406) target = $region72
        $region71: #{encmnist_forward.1} parent=67 // pred_region
          %p409 = scmp.lt.s32.totalorder %s23, 1
          %s410 = scalar_select %p409, %s23, 1
          %s411 = smul.addr %s410, 25
          %s412 = smul.addr %s411, 4
          %s413 = scalar_lea.vmem %s0, %s412
        $region72: #{encmnist_forward.1} parent=67 // pred_fallthru
          _
      $region68: #{encmnist_forward.1} parent=5 // pred_fallthru
        _
      %p414 = scmp.le.s32.totalorder 1, %s23
      %p415 = scmp.lt.s32.totalorder %s23, 3
      %p416 = pnand %p414, %p415
      %p417 = pneg %p416
      // Predicated region
      $region73: #{encmnist_forward.1} parent=5 // pred_check
        _
      $region74: #{encmnist_forward.1} parent=5 // pred_check_branch
        %419 = sbr.rel (%p416) target = $region76
      $region75: #{encmnist_forward.1} parent=5 // pred_region
        %s420 = ssub.s32 %s23, 1
        %p421 = scmp.lt.s32.totalorder %s28, 1
        %s422 = scalar_select %p421, %s28, 1
        %s423 = smul.addr %s422, 25
        %s424 = smul.addr %s423, 4
        %s425 = scalar_lea.vmem %s0, %s424
        %p426 = pneg %p49
        %p427 = pneg %p46
        %p428 = pneg %p70
        %p429 = pneg %p67
        %p430 = pneg %p91
        %p431 = pneg %p88
        %p432 = pneg %p112
        %p433 = pneg %p109
        %p434 = pneg %p133
        %p435 = pneg %p130
        %p436 = pneg %p154
        %p437 = pneg %p151
        %p438 = pneg %p175
        %p439 = pneg %p172
        %p440 = pneg %p196
        %p441 = pneg %p193
        %p442 = pneg %p217
        %p443 = pneg %p214
        %p444 = pneg %p238
        %p445 = pneg %p235
        %p446 = pneg %p259
        %p447 = pneg %p256
        %p448 = pneg %p280
        %p449 = pneg %p277
        %p450 = pneg %p301
        %p451 = pneg %p298
        %p452 = pneg %p322
        %p453 = pneg %p319
        %p454 = pneg %p348
        %p455 = pneg %p345
        %s456 = sand.u32 %s335, 1
        %s457 = scalar_lea.sflag [#allocation3], %s456
        %s458 = sand.u32 %s335, 1
        %s459 = scalar_lea.vmem [#allocation2], %s458
        %p460 = scmp.lt.s32.totalorder %s28, 1
        %s461 = scalar_select %p460, %s28, 1
        %s462 = smul.addr %s461, 25
        %s463 = smul.addr %s462, 4
        %s464 = scalar_lea.vmem %s0, %s463
        %v466 = vld [vmem:[%s464] sm:$0xf]
        %v467 = vld [vmem:[%s464 + $0x4] sm:$0xf]
        %v468 = vld [vmem:[%s464 + $0x8] sm:$0xf]
        %v469 = vld [vmem:[%s464 + $0xc] sm:$0xf]
        %v470 = vld [vmem:[%s464 + $0x10] sm:$0xf]
        %v471 = vld [vmem:[%s464 + $0x14] sm:$0xf]
        %v472 = vld [vmem:[%s464 + $0x18] sm:$0xf]
        %v473 = vld [vmem:[%s464 + $0x1c] sm:$0xf]
        %v474 = vld [vmem:[%s464 + $0x20] sm:$0xf]
        %v475 = vld [vmem:[%s464 + $0x24] sm:$0xf]
        %v476 = vld [vmem:[%s464 + $0x28] sm:$0xf]
        %v477 = vld [vmem:[%s464 + $0x2c] sm:$0xf]
        %v478 = vld [vmem:[%s464 + $0x30] sm:$0xf]
        %v479 = vld [vmem:[%s464 + $0x34] sm:$0xf]
        %v480 = vld [vmem:[%s464 + $0x38] sm:$0xf]
        %v481 = vld [vmem:[%s464 + $0x3c] sm:$0xf]
        %v482 = vld [vmem:[%s464 + $0x40] sm:$0xf]
        %v483 = vld [vmem:[%s464 + $0x44] sm:$0xf]
        %v484 = vld [vmem:[%s464 + $0x48] sm:$0xf]
        %v485 = vld [vmem:[%s464 + $0x4c] sm:$0xf]
        %v486 = vld [vmem:[%s464 + $0x50] sm:$0xf]
        %v487 = vld [vmem:[%s464 + $0x54] sm:$0xf]
        %v488 = vld [vmem:[%s464 + $0x58] sm:$0xf]
        %v489 = vld [vmem:[%s464 + $0x5c] sm:$0xf]
        %v490 = vld [vmem:[%s464 + $0x60] sm:$0x3]
        %v491 = vld [vmem:[%s1] sm:$0xf]
        %v492 = vld [vmem:[%s1 + $0x4] sm:$0x1]
        %v493 = vld [vmem:[%s2] sm:$0x1]
        %v495 = vperm.slane %v493, 0
        %v522 = vunpack.c.l.b16 %v466
        %v523 = vunpack.c.l.b16 %v467
        %v524 = vunpack.c.l.b16 %v468
        %v525 = vunpack.c.l.b16 %v469
        %v526 = vunpack.c.l.b16 %v470
        %v527 = vunpack.c.l.b16 %v471
        %v528 = vunpack.c.l.b16 %v472
        %v529 = vunpack.c.l.b16 %v473
        %v530 = vunpack.c.l.b16 %v474
        %v531 = vunpack.c.l.b16 %v475
        %v532 = vunpack.c.l.b16 %v476
        %v533 = vunpack.c.l.b16 %v477
        %v534 = vunpack.c.l.b16 %v478
        %v535 = vunpack.c.l.b16 %v479
        %v536 = vunpack.c.l.b16 %v480
        %v537 = vunpack.c.l.b16 %v481
        %v538 = vunpack.c.l.b16 %v482
        %v539 = vunpack.c.l.b16 %v483
        %v540 = vunpack.c.l.b16 %v484
        %v541 = vunpack.c.l.b16 %v485
        %v542 = vunpack.c.l.b16 %v486
        %v543 = vunpack.c.l.b16 %v487
        %v544 = vunpack.c.l.b16 %v488
        %v545 = vunpack.c.l.b16 %v489
        %v546 = vunpack.c.l.b16 %v490
        %v547 = vpack.c.b16 %v523, %v522
        %v548 = vpack.c.b16 %v525, %v524
        %v549 = vpack.c.b16 %v527, %v526
        %v550 = vpack.c.b16 %v529, %v528
        %v551 = vpack.c.b16 %v531, %v530
        %v552 = vpack.c.b16 %v533, %v532
        %v553 = vpack.c.b16 %v535, %v534
        %v554 = vpack.c.b16 %v537, %v536
        %v555 = vpack.c.b16 %v539, %v538
        %v556 = vpack.c.b16 %v541, %v540
        %v557 = vpack.c.b16 %v543, %v542
        %v558 = vpack.c.b16 %v545, %v544
        %v559 = vpack.c.b16 %v546, %v546
        %v562 = vunpack.c.l.b16 %v491
        %v563 = vunpack.c.l.b16 %v492
        %v564 = vpack.c.b16 %v563, %v562
        %vm565 = vcmask 72704
        %v567 = vsel %vm565, %v547, 0
        %v570 = vsel %vm565, %v548, 0
        %v573 = vsel %vm565, %v549, 0
        %v576 = vsel %vm565, %v550, 0
        %v579 = vsel %vm565, %v551, 0
        %v582 = vsel %vm565, %v552, 0
        %v585 = vsel %vm565, %v553, 0
        %v588 = vsel %vm565, %v554, 0
        %v591 = vsel %vm565, %v555, 0
        %v594 = vsel %vm565, %v556, 0
        %v597 = vsel %vm565, %v557, 0
        %v600 = vsel %vm565, %v558, 0
        %v603 = vsel %vm565, %v559, 0
        %vm605 = vcmask 1043456
        %vm606 = vcmask 1044480
        %v607 = vsel %vm605, 4294967295, 65535
        %v608 = vsel %vm606, %v607, 0
        %v610 = vand.u32 %v564, %v608
        %612 = vmatpush.bf16.msra.mxu0 0
        %613 = vmatpush.bf16.msra.mxu0 0
        %614 = vmatpush.bf16.msra.mxu0 0
        %615 = vmatpush.bf16.msra.mxu0 0
        %616 = vmatpush.bf16.msra.mxu0 0
        %617 = vmatpush.bf16.msra.mxu0 0
        %618 = vmatpush.bf16.msra.mxu0 0
        %619 = vmatpush.bf16.msra.mxu0 %v610
        %620 = vmatmul.bf16.gmra.mxu0 %v567
        %v621 = vpop.f32.mrf.mxu0
        %v622 = vadd.f32 %v495, %v621
        %v623 = vpop.f32.mrf.mxu0
        %v624 = vadd.f32 %v495, %v623
        %625 = vmatmul.bf16.gmra.mxu0 %v570
        %v626 = vpop.f32.mrf.mxu0
        %v627 = vadd.f32 %v495, %v626
        %v628 = vpop.f32.mrf.mxu0
        %v629 = vadd.f32 %v495, %v628
        %630 = vmatmul.bf16.gmra.mxu0 %v573
        %v631 = vpop.f32.mrf.mxu0
        %v632 = vadd.f32 %v495, %v631
        %v633 = vpop.f32.mrf.mxu0
        %v634 = vadd.f32 %v495, %v633
        %635 = vmatmul.bf16.gmra.mxu0 %v576
        %v636 = vpop.f32.mrf.mxu0
        %v637 = vadd.f32 %v495, %v636
        %v638 = vpop.f32.mrf.mxu0
        %v639 = vadd.f32 %v495, %v638
        %640 = vmatmul.bf16.gmra.mxu0 %v579
        %v641 = vpop.f32.mrf.mxu0
        %v642 = vadd.f32 %v495, %v641
        %v643 = vpop.f32.mrf.mxu0
        %v644 = vadd.f32 %v495, %v643
        %645 = vmatmul.bf16.gmra.mxu0 %v582
        %v646 = vpop.f32.mrf.mxu0
        %v647 = vadd.f32 %v495, %v646
        %v648 = vpop.f32.mrf.mxu0
        %v649 = vadd.f32 %v495, %v648
        %650 = vmatmul.bf16.gmra.mxu0 %v585
        %v651 = vpop.f32.mrf.mxu0
        %v652 = vadd.f32 %v495, %v651
        %v653 = vpop.f32.mrf.mxu0
        %v654 = vadd.f32 %v495, %v653
        %655 = vmatmul.bf16.gmra.mxu0 %v588
        %v656 = vpop.f32.mrf.mxu0
        %v657 = vadd.f32 %v495, %v656
        %v658 = vpop.f32.mrf.mxu0
        %v659 = vadd.f32 %v495, %v658
        %660 = vmatmul.bf16.gmra.mxu0 %v591
        %v661 = vpop.f32.mrf.mxu0
        %v662 = vadd.f32 %v495, %v661
        %v663 = vpop.f32.mrf.mxu0
        %v664 = vadd.f32 %v495, %v663
        %665 = vmatmul.bf16.gmra.mxu0 %v594
        %v666 = vpop.f32.mrf.mxu0
        %v667 = vadd.f32 %v495, %v666
        %v668 = vpop.f32.mrf.mxu0
        %v669 = vadd.f32 %v495, %v668
        %670 = vmatmul.bf16.gmra.mxu0 %v597
        %v671 = vpop.f32.mrf.mxu0
        %v672 = vadd.f32 %v495, %v671
        %v673 = vpop.f32.mrf.mxu0
        %v674 = vadd.f32 %v495, %v673
        %675 = vmatmul.bf16.gmra.mxu0 %v600
        %v676 = vpop.f32.mrf.mxu0
        %v677 = vadd.f32 %v495, %v676
        %v678 = vpop.f32.mrf.mxu0
        %v679 = vadd.f32 %v495, %v678
        %680 = vmatmul.bf16.gmra.mxu0 %v603
        %v681 = vpop.f32.mrf.mxu0
        %v682 = vadd.f32 %v495, %v681
        %v683 = vpop.f32.mrf.mxu0
        %684 = vdwg.mxu0
        %v685 = vmax.f32 %v622, 0.0
        %v686 = vmax.f32 %v624, 0.0
        %v687 = vmax.f32 %v627, 0.0
        %v688 = vmax.f32 %v629, 0.0
        %v689 = vmax.f32 %v632, 0.0
        %v690 = vmax.f32 %v634, 0.0
        %v691 = vmax.f32 %v637, 0.0
        %v692 = vmax.f32 %v639, 0.0
        %v693 = vmax.f32 %v642, 0.0
        %v694 = vmax.f32 %v644, 0.0
        %v695 = vmax.f32 %v647, 0.0
        %v696 = vmax.f32 %v649, 0.0
        %v697 = vmax.f32 %v652, 0.0
        %v698 = vmax.f32 %v654, 0.0
        %v699 = vmax.f32 %v657, 0.0
        %v700 = vmax.f32 %v659, 0.0
        %v701 = vmax.f32 %v662, 0.0
        %v702 = vmax.f32 %v664, 0.0
        %v703 = vmax.f32 %v667, 0.0
        %v704 = vmax.f32 %v669, 0.0
        %v705 = vmax.f32 %v672, 0.0
        %v706 = vmax.f32 %v674, 0.0
        %v707 = vmax.f32 %v677, 0.0
        %v708 = vmax.f32 %v679, 0.0
        %v709 = vmax.f32 %v682, 0.0
        %v710 = vpack.c.bf16 %v686, %v685
        %v711 = vpack.c.bf16 %v688, %v687
        %v712 = vpack.c.bf16 %v690, %v689
        %v713 = vpack.c.bf16 %v692, %v691
        %v714 = vpack.c.bf16 %v694, %v693
        %v715 = vpack.c.bf16 %v696, %v695
        %v716 = vpack.c.bf16 %v698, %v697
        %v717 = vpack.c.bf16 %v700, %v699
        %v718 = vpack.c.bf16 %v702, %v701
        %v719 = vpack.c.bf16 %v704, %v703
        %v720 = vpack.c.bf16 %v706, %v705
        %v721 = vpack.c.bf16 %v708, %v707
        %v722 = vpack.c.bf16 %v709, %v709
        %v723 = vld [vmem:[%s3] sm:$0xff]
        %v724 = vld [vmem:[%s3 + $0x8] sm:$0xff]
        %v725 = vld [vmem:[%s3 + $0x10] sm:$0xff]
        %v726 = vld [vmem:[%s3 + $0x18] sm:$0xff]
        %v727 = vld [vmem:[%s3 + $0x20] sm:$0xff]
        %v728 = vld [vmem:[%s3 + $0x28] sm:$0xff]
        %v729 = vld [vmem:[%s3 + $0x30] sm:$0x11]
        %v737 = vunpack.c.l.b16 %v723
        %v738 = vunpack.c.h.b16 %v723
        %v739 = vunpack.c.l.b16 %v724
        %v740 = vunpack.c.h.b16 %v724
        %v741 = vunpack.c.l.b16 %v725
        %v742 = vunpack.c.h.b16 %v725
        %v743 = vunpack.c.l.b16 %v726
        %v744 = vunpack.c.h.b16 %v726
        %v745 = vunpack.c.l.b16 %v727
        %v746 = vunpack.c.h.b16 %v727
        %v747 = vunpack.c.l.b16 %v728
        %v748 = vunpack.c.h.b16 %v728
        %v749 = vunpack.c.l.b16 %v729
        %v750 = vunpack.c.h.b16 %v729
        %v751 = vpack.c.b16 %v739, %v737
        %v752 = vpack.c.b16 %v740, %v738
        %v753 = vpack.c.b16 %v743, %v741
        %v754 = vpack.c.b16 %v744, %v742
        %v755 = vpack.c.b16 %v747, %v745
        %v756 = vpack.c.b16 %v748, %v746
        %v757 = vpack.c.b16 %v749, %v749
        %v758 = vpack.c.b16 %v750, %v750
        %vm763 = vcmask 556032
        %v765 = vsel %vm763, %v752, 0
        %v768 = vsel %vm763, %v754, 0
        %v771 = vsel %vm763, %v756, 0
        %v774 = vsel %vm763, %v758, 0
        %vm776 = vcmask 1041408
        %v778 = vsel %vm776, %v722, 0
        %780 = vmatpush.bf16.msra.mxu0 %v717
        %781 = vmatpush.bf16.msra.mxu0 %v716
        %782 = vmatpush.bf16.msra.mxu0 %v715
        %783 = vmatpush.bf16.msra.mxu0 %v714
        %784 = vmatpush.bf16.msra.mxu0 %v713
        %785 = vmatpush.bf16.msra.mxu0 %v712
        %786 = vmatpush.bf16.msra.mxu0 %v711
        %787 = vmatpush.bf16.msra.mxu0 %v710
        %788 = vmatmul.bf16.gmra.mxu0 %v751
        %v789 = vpop.f32.mrf.mxu0
        %v790 = vadd.f32 0.0, %v789
        %v791 = vpop.f32.mrf.mxu0
        %v792 = vadd.f32 0.0, %v791
        %793 = vmatmul.bf16.gmra.mxu0 %v753
        %v794 = vpop.f32.mrf.mxu0
        %v795 = vadd.f32 0.0, %v794
        %v796 = vpop.f32.mrf.mxu0
        %v797 = vadd.f32 0.0, %v796
        %798 = vmatmul.bf16.gmra.mxu0 %v755
        %v799 = vpop.f32.mrf.mxu0
        %v800 = vadd.f32 0.0, %v799
        %v801 = vpop.f32.mrf.mxu0
        %v802 = vadd.f32 0.0, %v801
        %803 = vmatmul.bf16.gmra.mxu0 %v757
        %v804 = vpop.f32.mrf.mxu0
        %v805 = vadd.f32 0.0, %v804
        %v806 = vpop.f32.mrf.mxu0
        %807 = vdwg.mxu0
        %808 = vmatpush.bf16.msra.mxu0 0
        %809 = vmatpush.bf16.msra.mxu0 0
        %810 = vmatpush.bf16.msra.mxu0 0
        %811 = vmatpush.bf16.msra.mxu0 %v778
        %812 = vmatpush.bf16.msra.mxu0 %v721
        %813 = vmatpush.bf16.msra.mxu0 %v720
        %814 = vmatpush.bf16.msra.mxu0 %v719
        %815 = vmatpush.bf16.msra.mxu0 %v718
        %816 = vmatmul.bf16.gmra.mxu0 %v765
        %v817 = vpop.f32.mrf.mxu0
        %v818 = vadd.f32 %v790, %v817
        %v819 = vpop.f32.mrf.mxu0
        %v820 = vadd.f32 %v792, %v819
        %821 = vmatmul.bf16.gmra.mxu0 %v768
        %v822 = vpop.f32.mrf.mxu0
        %v823 = vadd.f32 %v795, %v822
        %v824 = vpop.f32.mrf.mxu0
        %v825 = vadd.f32 %v797, %v824
        %826 = vmatmul.bf16.gmra.mxu0 %v771
        %v827 = vpop.f32.mrf.mxu0
        %v828 = vadd.f32 %v800, %v827
        %v829 = vpop.f32.mrf.mxu0
        %v830 = vadd.f32 %v802, %v829
        %831 = vmatmul.bf16.gmra.mxu0 %v774
        %v832 = vpop.f32.mrf.mxu0
        %v833 = vadd.f32 %v805, %v832
        %v834 = vpop.f32.mrf.mxu0
        %835 = vdwg.mxu0
        %v836 = vpack.c.bf16 %v820, %v818
        %v837 = vpack.c.bf16 %v825, %v823
        %v838 = vpack.c.bf16 %v830, %v828
        %v839 = vpack.c.bf16 %v833, %v833
        %v840 = vld [vmem:[%s4] sm:$0xf]
        %s841 = scalar_lea.vmem %s3, 56
        %v842 = vld [vmem:[%s841] sm:$0xff]
        %v843 = vld [vmem:[%s841 + $0x8] sm:$0xff]
        %v844 = vld [vmem:[%s841 + $0x10] sm:$0xff]
        %v845 = vld [vmem:[%s841 + $0x18] sm:$0xff]
        %v846 = vld [vmem:[%s841 + $0x20] sm:$0xff]
        %v847 = vld [vmem:[%s841 + $0x28] sm:$0xff]
        %v848 = vld [vmem:[%s841 + $0x30] sm:$0x11]
        %v856 = vunpack.c.l.b16 %v842
        %v857 = vunpack.c.h.b16 %v842
        %v858 = vunpack.c.l.b16 %v843
        %v859 = vunpack.c.h.b16 %v843
        %v860 = vunpack.c.l.b16 %v844
        %v861 = vunpack.c.h.b16 %v844
        %v862 = vunpack.c.l.b16 %v845
        %v863 = vunpack.c.h.b16 %v845
        %v864 = vunpack.c.l.b16 %v846
        %v865 = vunpack.c.h.b16 %v846
        %v866 = vunpack.c.l.b16 %v847
        %v867 = vunpack.c.h.b16 %v847
        %v868 = vunpack.c.l.b16 %v848
        %v869 = vunpack.c.h.b16 %v848
        %v870 = vpack.c.b16 %v858, %v856
        %v871 = vpack.c.b16 %v859, %v857
        %v872 = vpack.c.b16 %v862, %v860
        %v873 = vpack.c.b16 %v863, %v861
        %v874 = vpack.c.b16 %v866, %v864
        %v875 = vpack.c.b16 %v867, %v865
        %v876 = vpack.c.b16 %v868, %v868
        %v877 = vpack.c.b16 %v869, %v869
        %v883 = vsel %vm763, %v871, 0
        %v886 = vsel %vm763, %v873, 0
        %v889 = vsel %vm763, %v875, 0
        %v892 = vsel %vm763, %v877, 0
        %894 = vmatpush.bf16.msra.mxu0 %v717
        %895 = vmatpush.bf16.msra.mxu0 %v716
        %896 = vmatpush.bf16.msra.mxu0 %v715
        %897 = vmatpush.bf16.msra.mxu0 %v714
        %898 = vmatpush.bf16.msra.mxu0 %v713
        %899 = vmatpush.bf16.msra.mxu0 %v712
        %900 = vmatpush.bf16.msra.mxu0 %v711
        %901 = vmatpush.bf16.msra.mxu0 %v710
        %902 = vmatmul.bf16.gmra.mxu0 %v870
        %v903 = vpop.f32.mrf.mxu0
        %v904 = vadd.f32 0.0, %v903
        %v905 = vpop.f32.mrf.mxu0
        %v906 = vadd.f32 0.0, %v905
        %907 = vmatmul.bf16.gmra.mxu0 %v872
        %v908 = vpop.f32.mrf.mxu0
        %v909 = vadd.f32 0.0, %v908
        %v910 = vpop.f32.mrf.mxu0
        %v911 = vadd.f32 0.0, %v910
        %912 = vmatmul.bf16.gmra.mxu0 %v874
        %v913 = vpop.f32.mrf.mxu0
        %v914 = vadd.f32 0.0, %v913
        %v915 = vpop.f32.mrf.mxu0
        %v916 = vadd.f32 0.0, %v915
        %917 = vmatmul.bf16.gmra.mxu0 %v876
        %v918 = vpop.f32.mrf.mxu0
        %v919 = vadd.f32 0.0, %v918
        %v920 = vpop.f32.mrf.mxu0
        %921 = vdwg.mxu0
        %922 = vmatpush.bf16.msra.mxu0 0
        %923 = vmatpush.bf16.msra.mxu0 0
        %924 = vmatpush.bf16.msra.mxu0 0
        %925 = vmatpush.bf16.msra.mxu0 %v778
        %926 = vmatpush.bf16.msra.mxu0 %v721
        %927 = vmatpush.bf16.msra.mxu0 %v720
        %928 = vmatpush.bf16.msra.mxu0 %v719
        %929 = vmatpush.bf16.msra.mxu0 %v718
        %930 = vmatmul.bf16.gmra.mxu0 %v883
        %v931 = vpop.f32.mrf.mxu0
        %v932 = vadd.f32 %v904, %v931
        %v933 = vpop.f32.mrf.mxu0
        %v934 = vadd.f32 %v906, %v933
        %935 = vmatmul.bf16.gmra.mxu0 %v886
        %v936 = vpop.f32.mrf.mxu0
        %v937 = vadd.f32 %v909, %v936
        %v938 = vpop.f32.mrf.mxu0
        %v939 = vadd.f32 %v911, %v938
        %940 = vmatmul.bf16.gmra.mxu0 %v889
        %v941 = vpop.f32.mrf.mxu0
        %v942 = vadd.f32 %v914, %v941
        %v943 = vpop.f32.mrf.mxu0
        %v944 = vadd.f32 %v916, %v943
        %945 = vmatmul.bf16.gmra.mxu0 %v892
        %v946 = vpop.f32.mrf.mxu0
        %v947 = vadd.f32 %v919, %v946
        %v948 = vpop.f32.mrf.mxu0
        %949 = vdwg.mxu0
        %v950 = vpack.c.bf16 %v934, %v932
        %v951 = vpack.c.bf16 %v939, %v937
        %v952 = vpack.c.bf16 %v944, %v942
        %v953 = vpack.c.bf16 %v947, %v947
        %s954 = scalar_lea.vmem %s4, 4
        %v955 = vld [vmem:[%s954] sm:$0xf]
        %vm956 = vcmask 64512
        %v958 = vsel %vm956, %v950, 0
        %v961 = vsel %vm956, %v951, 0
        %v964 = vsel %vm956, %v952, 0
        %v967 = vsel %vm956, %v953, 0
        %v970 = vsel %vm605, %v955, 0
        %972 = vmatpush.bf16.msra.mxu0 0
        %973 = vmatpush.bf16.msra.mxu0 0
        %974 = vmatpush.bf16.msra.mxu0 0
        %975 = vmatpush.bf16.msra.mxu0 0
        %976 = vmatpush.bf16.msra.mxu0 0
        %977 = vmatpush.bf16.msra.mxu0 0
        %978 = vmatpush.bf16.msra.mxu0 0
        %979 = vmatpush.bf16.msra.mxu0 %v970
        %980 = vmatmul.bf16.gmra.mxu0 %v958
        %v981 = vpop.f32.mrf.mxu0
        %v982 = vadd.f32 0.0, %v981
        %v983 = vpop.f32.mrf.mxu0
        %v984 = vadd.f32 0.0, %v983
        %985 = vmatmul.bf16.gmra.mxu0 %v961
        %v986 = vpop.f32.mrf.mxu0
        %v987 = vadd.f32 0.0, %v986
        %v988 = vpop.f32.mrf.mxu0
        %v989 = vadd.f32 0.0, %v988
        %990 = vmatmul.bf16.gmra.mxu0 %v964
        %v991 = vpop.f32.mrf.mxu0
        %v992 = vadd.f32 0.0, %v991
        %v993 = vpop.f32.mrf.mxu0
        %v994 = vadd.f32 0.0, %v993
        %995 = vmatmul.bf16.gmra.mxu0 %v967
        %v996 = vpop.f32.mrf.mxu0
        %v997 = vadd.f32 0.0, %v996
        %v998 = vpop.f32.mrf.mxu0
        %999 = vdwg.mxu0
        %v1001 = vsel %vm956, %v836, 0
        %v1004 = vsel %vm956, %v837, 0
        %v1007 = vsel %vm956, %v838, 0
        %v1010 = vsel %vm956, %v839, 0
        %v1013 = vsel %vm605, %v840, 0
        %1015 = vmatpush.bf16.msra.mxu0 0
        %1016 = vmatpush.bf16.msra.mxu0 0
        %1017 = vmatpush.bf16.msra.mxu0 0
        %1018 = vmatpush.bf16.msra.mxu0 0
        %1019 = vmatpush.bf16.msra.mxu0 0
        %1020 = vmatpush.bf16.msra.mxu0 0
        %1021 = vmatpush.bf16.msra.mxu0 0
        %1022 = vmatpush.bf16.msra.mxu0 %v1013
        %1023 = vmatmul.bf16.gmra.mxu0 %v1001
        %v1024 = vpop.f32.mrf.mxu0
        %v1025 = vadd.f32 %v982, %v1024
        %v1026 = vpop.f32.mrf.mxu0
        %v1027 = vadd.f32 %v984, %v1026
        %1028 = vmatmul.bf16.gmra.mxu0 %v1004
        %v1029 = vpop.f32.mrf.mxu0
        %v1030 = vadd.f32 %v987, %v1029
        %v1031 = vpop.f32.mrf.mxu0
        %v1032 = vadd.f32 %v989, %v1031
        %1033 = vmatmul.bf16.gmra.mxu0 %v1007
        %v1034 = vpop.f32.mrf.mxu0
        %v1035 = vadd.f32 %v992, %v1034
        %v1036 = vpop.f32.mrf.mxu0
        %v1037 = vadd.f32 %v994, %v1036
        %1038 = vmatmul.bf16.gmra.mxu0 %v1010
        %v1039 = vpop.f32.mrf.mxu0
        %v1040 = vadd.f32 %v997, %v1039
        %v1041 = vpop.f32.mrf.mxu0
        %1042 = vdwg.mxu0
        %s1043 = scalar_lea.vmem %s3, 112
        %v1044 = vld [vmem:[%s1043] sm:$0xff]
        %v1045 = vld [vmem:[%s1043 + $0x8] sm:$0xff]
        %v1046 = vld [vmem:[%s1043 + $0x10] sm:$0xff]
        %v1047 = vld [vmem:[%s1043 + $0x18] sm:$0xff]
        %v1048 = vld [vmem:[%s1043 + $0x20] sm:$0xff]
        %v1049 = vld [vmem:[%s1043 + $0x28] sm:$0xff]
        %v1050 = vld [vmem:[%s1043 + $0x30] sm:$0x11]
        %v1058 = vunpack.c.l.b16 %v1044
        %v1059 = vunpack.c.h.b16 %v1044
        %v1060 = vunpack.c.l.b16 %v1045
        %v1061 = vunpack.c.h.b16 %v1045
        %v1062 = vunpack.c.l.b16 %v1046
        %v1063 = vunpack.c.h.b16 %v1046
        %v1064 = vunpack.c.l.b16 %v1047
        %v1065 = vunpack.c.h.b16 %v1047
        %v1066 = vunpack.c.l.b16 %v1048
        %v1067 = vunpack.c.h.b16 %v1048
        %v1068 = vunpack.c.l.b16 %v1049
        %v1069 = vunpack.c.h.b16 %v1049
        %v1070 = vunpack.c.l.b16 %v1050
        %v1071 = vunpack.c.h.b16 %v1050
        %v1072 = vpack.c.b16 %v1060, %v1058
        %v1073 = vpack.c.b16 %v1061, %v1059
        %v1074 = vpack.c.b16 %v1064, %v1062
        %v1075 = vpack.c.b16 %v1065, %v1063
        %v1076 = vpack.c.b16 %v1068, %v1066
        %v1077 = vpack.c.b16 %v1069, %v1067
        %v1078 = vpack.c.b16 %v1070, %v1070
        %v1079 = vpack.c.b16 %v1071, %v1071
        %v1085 = vsel %vm763, %v1073, 0
        %v1088 = vsel %vm763, %v1075, 0
        %v1091 = vsel %vm763, %v1077, 0
        %v1094 = vsel %vm763, %v1079, 0
        %1096 = vmatpush.bf16.msra.mxu0 %v717
        %1097 = vmatpush.bf16.msra.mxu0 %v716
        %1098 = vmatpush.bf16.msra.mxu0 %v715
        %1099 = vmatpush.bf16.msra.mxu0 %v714
        %1100 = vmatpush.bf16.msra.mxu0 %v713
        %1101 = vmatpush.bf16.msra.mxu0 %v712
        %1102 = vmatpush.bf16.msra.mxu0 %v711
        %1103 = vmatpush.bf16.msra.mxu0 %v710
        %1104 = vmatmul.bf16.gmra.mxu0 %v1072
        %v1105 = vpop.f32.mrf.mxu0
        %v1106 = vadd.f32 0.0, %v1105
        %v1107 = vpop.f32.mrf.mxu0
        %v1108 = vadd.f32 0.0, %v1107
        %1109 = vmatmul.bf16.gmra.mxu0 %v1074
        %v1110 = vpop.f32.mrf.mxu0
        %v1111 = vadd.f32 0.0, %v1110
        %v1112 = vpop.f32.mrf.mxu0
        %v1113 = vadd.f32 0.0, %v1112
        %1114 = vmatmul.bf16.gmra.mxu0 %v1076
        %v1115 = vpop.f32.mrf.mxu0
        %v1116 = vadd.f32 0.0, %v1115
        %v1117 = vpop.f32.mrf.mxu0
        %v1118 = vadd.f32 0.0, %v1117
        %1119 = vmatmul.bf16.gmra.mxu0 %v1078
        %v1120 = vpop.f32.mrf.mxu0
        %v1121 = vadd.f32 0.0, %v1120
        %v1122 = vpop.f32.mrf.mxu0
        %1123 = vdwg.mxu0
        %1124 = vmatpush.bf16.msra.mxu0 0
        %1125 = vmatpush.bf16.msra.mxu0 0
        %1126 = vmatpush.bf16.msra.mxu0 0
        %1127 = vmatpush.bf16.msra.mxu0 %v778
        %1128 = vmatpush.bf16.msra.mxu0 %v721
        %1129 = vmatpush.bf16.msra.mxu0 %v720
        %1130 = vmatpush.bf16.msra.mxu0 %v719
        %1131 = vmatpush.bf16.msra.mxu0 %v718
        %1132 = vmatmul.bf16.gmra.mxu0 %v1085
        %v1133 = vpop.f32.mrf.mxu0
        %v1134 = vadd.f32 %v1106, %v1133
        %v1135 = vpop.f32.mrf.mxu0
        %v1136 = vadd.f32 %v1108, %v1135
        %1137 = vmatmul.bf16.gmra.mxu0 %v1088
        %v1138 = vpop.f32.mrf.mxu0
        %v1139 = vadd.f32 %v1111, %v1138
        %v1140 = vpop.f32.mrf.mxu0
        %v1141 = vadd.f32 %v1113, %v1140
        %1142 = vmatmul.bf16.gmra.mxu0 %v1091
        %v1143 = vpop.f32.mrf.mxu0
        %v1144 = vadd.f32 %v1116, %v1143
        %v1145 = vpop.f32.mrf.mxu0
        %v1146 = vadd.f32 %v1118, %v1145
        %1147 = vmatmul.bf16.gmra.mxu0 %v1094
        %v1148 = vpop.f32.mrf.mxu0
        %v1149 = vadd.f32 %v1121, %v1148
        %v1150 = vpop.f32.mrf.mxu0
        %1151 = vdwg.mxu0
        %v1152 = vpack.c.bf16 %v1136, %v1134
        %v1153 = vpack.c.bf16 %v1141, %v1139
        %v1154 = vpack.c.bf16 %v1146, %v1144
        %v1155 = vpack.c.bf16 %v1149, %v1149
        %s1156 = scalar_lea.vmem %s4, 8
        %v1157 = vld [vmem:[%s1156] sm:$0xf]
        %v1159 = vsel %vm956, %v1152, 0
        %v1162 = vsel %vm956, %v1153, 0
        %v1165 = vsel %vm956, %v1154, 0
        %v1168 = vsel %vm956, %v1155, 0
        %v1171 = vsel %vm605, %v1157, 0
        %1173 = vmatpush.bf16.msra.mxu0 0
        %1174 = vmatpush.bf16.msra.mxu0 0
        %1175 = vmatpush.bf16.msra.mxu0 0
        %1176 = vmatpush.bf16.msra.mxu0 0
        %1177 = vmatpush.bf16.msra.mxu0 0
        %1178 = vmatpush.bf16.msra.mxu0 0
        %1179 = vmatpush.bf16.msra.mxu0 0
        %1180 = vmatpush.bf16.msra.mxu0 %v1171
        %1181 = vmatmul.bf16.gmra.mxu0 %v1159
        %v1182 = vpop.f32.mrf.mxu0
        %v1183 = vadd.f32 0.0, %v1182
        %v1184 = vpop.f32.mrf.mxu0
        %v1185 = vadd.f32 0.0, %v1184
        %1186 = vmatmul.bf16.gmra.mxu0 %v1162
        %v1187 = vpop.f32.mrf.mxu0
        %v1188 = vadd.f32 0.0, %v1187
        %v1189 = vpop.f32.mrf.mxu0
        %v1190 = vadd.f32 0.0, %v1189
        %1191 = vmatmul.bf16.gmra.mxu0 %v1165
        %v1192 = vpop.f32.mrf.mxu0
        %v1193 = vadd.f32 0.0, %v1192
        %v1194 = vpop.f32.mrf.mxu0
        %v1195 = vadd.f32 0.0, %v1194
        %1196 = vmatmul.bf16.gmra.mxu0 %v1168
        %v1197 = vpop.f32.mrf.mxu0
        %v1198 = vadd.f32 0.0, %v1197
        %v1199 = vpop.f32.mrf.mxu0
        %1200 = vdwg.mxu0
        %v1201 = vadd.f32 %v1025, %v1183
        %v1202 = vadd.f32 %v1027, %v1185
        %v1203 = vadd.f32 %v1030, %v1188
        %v1204 = vadd.f32 %v1032, %v1190
        %v1205 = vadd.f32 %v1035, %v1193
        %v1206 = vadd.f32 %v1037, %v1195
        %v1207 = vadd.f32 %v1040, %v1198
        %s1208 = scalar_lea.vmem %s3, 168
        %v1209 = vld [vmem:[%s1208] sm:$0xff]
        %v1210 = vld [vmem:[%s1208 + $0x8] sm:$0xff]
        %v1211 = vld [vmem:[%s1208 + $0x10] sm:$0xff]
        %v1212 = vld [vmem:[%s1208 + $0x18] sm:$0xff]
        %v1213 = vld [vmem:[%s1208 + $0x20] sm:$0xff]
        %v1214 = vld [vmem:[%s1208 + $0x28] sm:$0xff]
        %v1215 = vld [vmem:[%s1208 + $0x30] sm:$0x11]
        %v1223 = vunpack.c.l.b16 %v1209
        %v1224 = vunpack.c.h.b16 %v1209
        %v1225 = vunpack.c.l.b16 %v1210
        %v1226 = vunpack.c.h.b16 %v1210
        %v1227 = vunpack.c.l.b16 %v1211
        %v1228 = vunpack.c.h.b16 %v1211
        %v1229 = vunpack.c.l.b16 %v1212
        %v1230 = vunpack.c.h.b16 %v1212
        %v1231 = vunpack.c.l.b16 %v1213
        %v1232 = vunpack.c.h.b16 %v1213
        %v1233 = vunpack.c.l.b16 %v1214
        %v1234 = vunpack.c.h.b16 %v1214
        %v1235 = vunpack.c.l.b16 %v1215
        %v1236 = vunpack.c.h.b16 %v1215
        %v1237 = vpack.c.b16 %v1225, %v1223
        %v1238 = vpack.c.b16 %v1226, %v1224
        %v1239 = vpack.c.b16 %v1229, %v1227
        %v1240 = vpack.c.b16 %v1230, %v1228
        %v1241 = vpack.c.b16 %v1233, %v1231
        %v1242 = vpack.c.b16 %v1234, %v1232
        %v1243 = vpack.c.b16 %v1235, %v1235
        %v1244 = vpack.c.b16 %v1236, %v1236
        %v1250 = vsel %vm763, %v1238, 0
        %v1253 = vsel %vm763, %v1240, 0
        %v1256 = vsel %vm763, %v1242, 0
        %v1259 = vsel %vm763, %v1244, 0
        %1261 = vmatpush.bf16.msra.mxu0 %v717
        %1262 = vmatpush.bf16.msra.mxu0 %v716
        %1263 = vmatpush.bf16.msra.mxu0 %v715
        %1264 = vmatpush.bf16.msra.mxu0 %v714
        %1265 = vmatpush.bf16.msra.mxu0 %v713
        %1266 = vmatpush.bf16.msra.mxu0 %v712
        %1267 = vmatpush.bf16.msra.mxu0 %v711
        %1268 = vmatpush.bf16.msra.mxu0 %v710
        %1269 = vmatmul.bf16.gmra.mxu0 %v1237
        %v1270 = vpop.f32.mrf.mxu0
        %v1271 = vadd.f32 0.0, %v1270
        %v1272 = vpop.f32.mrf.mxu0
        %v1273 = vadd.f32 0.0, %v1272
        %1274 = vmatmul.bf16.gmra.mxu0 %v1239
        %v1275 = vpop.f32.mrf.mxu0
        %v1276 = vadd.f32 0.0, %v1275
        %v1277 = vpop.f32.mrf.mxu0
        %v1278 = vadd.f32 0.0, %v1277
        %1279 = vmatmul.bf16.gmra.mxu0 %v1241
        %v1280 = vpop.f32.mrf.mxu0
        %v1281 = vadd.f32 0.0, %v1280
        %v1282 = vpop.f32.mrf.mxu0
        %v1283 = vadd.f32 0.0, %v1282
        %1284 = vmatmul.bf16.gmra.mxu0 %v1243
        %v1285 = vpop.f32.mrf.mxu0
        %v1286 = vadd.f32 0.0, %v1285
        %v1287 = vpop.f32.mrf.mxu0
        %1288 = vdwg.mxu0
        %1289 = vmatpush.bf16.msra.mxu0 0
        %1290 = vmatpush.bf16.msra.mxu0 0
        %1291 = vmatpush.bf16.msra.mxu0 0
        %1292 = vmatpush.bf16.msra.mxu0 %v778
        %1293 = vmatpush.bf16.msra.mxu0 %v721
        %1294 = vmatpush.bf16.msra.mxu0 %v720
        %1295 = vmatpush.bf16.msra.mxu0 %v719
        %1296 = vmatpush.bf16.msra.mxu0 %v718
        %1297 = vmatmul.bf16.gmra.mxu0 %v1250
        %v1298 = vpop.f32.mrf.mxu0
        %v1299 = vadd.f32 %v1271, %v1298
        %v1300 = vpop.f32.mrf.mxu0
        %v1301 = vadd.f32 %v1273, %v1300
        %1302 = vmatmul.bf16.gmra.mxu0 %v1253
        %v1303 = vpop.f32.mrf.mxu0
        %v1304 = vadd.f32 %v1276, %v1303
        %v1305 = vpop.f32.mrf.mxu0
        %v1306 = vadd.f32 %v1278, %v1305
        %1307 = vmatmul.bf16.gmra.mxu0 %v1256
        %v1308 = vpop.f32.mrf.mxu0
        %v1309 = vadd.f32 %v1281, %v1308
        %v1310 = vpop.f32.mrf.mxu0
        %v1311 = vadd.f32 %v1283, %v1310
        %1312 = vmatmul.bf16.gmra.mxu0 %v1259
        %v1313 = vpop.f32.mrf.mxu0
        %v1314 = vadd.f32 %v1286, %v1313
        %v1315 = vpop.f32.mrf.mxu0
        %1316 = vdwg.mxu0
        %v1317 = vpack.c.bf16 %v1301, %v1299
        %v1318 = vpack.c.bf16 %v1306, %v1304
        %v1319 = vpack.c.bf16 %v1311, %v1309
        %v1320 = vpack.c.bf16 %v1314, %v1314
        %s1321 = scalar_lea.vmem %s4, 12
        %v1322 = vld [vmem:[%s1321] sm:$0xf]
        %v1324 = vsel %vm956, %v1317, 0
        %v1327 = vsel %vm956, %v1318, 0
        %v1330 = vsel %vm956, %v1319, 0
        %v1333 = vsel %vm956, %v1320, 0
        %v1336 = vsel %vm605, %v1322, 0
        %1338 = vmatpush.bf16.msra.mxu0 0
        %1339 = vmatpush.bf16.msra.mxu0 0
        %1340 = vmatpush.bf16.msra.mxu0 0
        %1341 = vmatpush.bf16.msra.mxu0 0
        %1342 = vmatpush.bf16.msra.mxu0 0
        %1343 = vmatpush.bf16.msra.mxu0 0
        %1344 = vmatpush.bf16.msra.mxu0 0
        %1345 = vmatpush.bf16.msra.mxu0 %v1336
        %1346 = vmatmul.bf16.gmra.mxu0 %v1324
        %v1347 = vpop.f32.mrf.mxu0
        %v1348 = vadd.f32 0.0, %v1347
        %v1349 = vpop.f32.mrf.mxu0
        %v1350 = vadd.f32 0.0, %v1349
        %1351 = vmatmul.bf16.gmra.mxu0 %v1327
        %v1352 = vpop.f32.mrf.mxu0
        %v1353 = vadd.f32 0.0, %v1352
        %v1354 = vpop.f32.mrf.mxu0
        %v1355 = vadd.f32 0.0, %v1354
        %1356 = vmatmul.bf16.gmra.mxu0 %v1330
        %v1357 = vpop.f32.mrf.mxu0
        %v1358 = vadd.f32 0.0, %v1357
        %v1359 = vpop.f32.mrf.mxu0
        %v1360 = vadd.f32 0.0, %v1359
        %1361 = vmatmul.bf16.gmra.mxu0 %v1333
        %v1362 = vpop.f32.mrf.mxu0
        %v1363 = vadd.f32 0.0, %v1362
        %v1364 = vpop.f32.mrf.mxu0
        %1365 = vdwg.mxu0
        %v1366 = vadd.f32 %v1201, %v1348
        %v1367 = vadd.f32 %v1202, %v1350
        %v1368 = vadd.f32 %v1203, %v1353
        %v1369 = vadd.f32 %v1204, %v1355
        %v1370 = vadd.f32 %v1205, %v1358
        %v1371 = vadd.f32 %v1206, %v1360
        %v1372 = vadd.f32 %v1207, %v1363
        %s1373 = scalar_lea.vmem %s3, 224
        %v1374 = vld [vmem:[%s1373] sm:$0xff]
        %v1375 = vld [vmem:[%s1373 + $0x8] sm:$0xff]
        %v1376 = vld [vmem:[%s1373 + $0x10] sm:$0xff]
        %v1377 = vld [vmem:[%s1373 + $0x18] sm:$0xff]
        %v1378 = vld [vmem:[%s1373 + $0x20] sm:$0xff]
        %v1379 = vld [vmem:[%s1373 + $0x28] sm:$0xff]
        %v1380 = vld [vmem:[%s1373 + $0x30] sm:$0x11]
        %v1388 = vunpack.c.l.b16 %v1374
        %v1389 = vunpack.c.h.b16 %v1374
        %v1390 = vunpack.c.l.b16 %v1375
        %v1391 = vunpack.c.h.b16 %v1375
        %v1392 = vunpack.c.l.b16 %v1376
        %v1393 = vunpack.c.h.b16 %v1376
        %v1394 = vunpack.c.l.b16 %v1377
        %v1395 = vunpack.c.h.b16 %v1377
        %v1396 = vunpack.c.l.b16 %v1378
        %v1397 = vunpack.c.h.b16 %v1378
        %v1398 = vunpack.c.l.b16 %v1379
        %v1399 = vunpack.c.h.b16 %v1379
        %v1400 = vunpack.c.l.b16 %v1380
        %v1401 = vunpack.c.h.b16 %v1380
        %v1402 = vpack.c.b16 %v1390, %v1388
        %v1403 = vpack.c.b16 %v1391, %v1389
        %v1404 = vpack.c.b16 %v1394, %v1392
        %v1405 = vpack.c.b16 %v1395, %v1393
        %v1406 = vpack.c.b16 %v1398, %v1396
        %v1407 = vpack.c.b16 %v1399, %v1397
        %v1408 = vpack.c.b16 %v1400, %v1400
        %v1409 = vpack.c.b16 %v1401, %v1401
        %v1415 = vsel %vm763, %v1403, 0
        %v1418 = vsel %vm763, %v1405, 0
        %v1421 = vsel %vm763, %v1407, 0
        %v1424 = vsel %vm763, %v1409, 0
        %1426 = vmatpush.bf16.msra.mxu0 %v717
        %1427 = vmatpush.bf16.msra.mxu0 %v716
        %1428 = vmatpush.bf16.msra.mxu0 %v715
        %1429 = vmatpush.bf16.msra.mxu0 %v714
        %1430 = vmatpush.bf16.msra.mxu0 %v713
        %1431 = vmatpush.bf16.msra.mxu0 %v712
        %1432 = vmatpush.bf16.msra.mxu0 %v711
        %1433 = vmatpush.bf16.msra.mxu0 %v710
        %1434 = vmatmul.bf16.gmra.mxu0 %v1402
        %v1435 = vpop.f32.mrf.mxu0
        %v1436 = vadd.f32 0.0, %v1435
        %v1437 = vpop.f32.mrf.mxu0
        %v1438 = vadd.f32 0.0, %v1437
        %1439 = vmatmul.bf16.gmra.mxu0 %v1404
        %v1440 = vpop.f32.mrf.mxu0
        %v1441 = vadd.f32 0.0, %v1440
        %v1442 = vpop.f32.mrf.mxu0
        %v1443 = vadd.f32 0.0, %v1442
        %1444 = vmatmul.bf16.gmra.mxu0 %v1406
        %v1445 = vpop.f32.mrf.mxu0
        %v1446 = vadd.f32 0.0, %v1445
        %v1447 = vpop.f32.mrf.mxu0
        %v1448 = vadd.f32 0.0, %v1447
        %1449 = vmatmul.bf16.gmra.mxu0 %v1408
        %v1450 = vpop.f32.mrf.mxu0
        %v1451 = vadd.f32 0.0, %v1450
        %v1452 = vpop.f32.mrf.mxu0
        %1453 = vdwg.mxu0
        %1454 = vmatpush.bf16.msra.mxu0 0
        %1455 = vmatpush.bf16.msra.mxu0 0
        %1456 = vmatpush.bf16.msra.mxu0 0
        %1457 = vmatpush.bf16.msra.mxu0 %v778
        %1458 = vmatpush.bf16.msra.mxu0 %v721
        %1459 = vmatpush.bf16.msra.mxu0 %v720
        %1460 = vmatpush.bf16.msra.mxu0 %v719
        %1461 = vmatpush.bf16.msra.mxu0 %v718
        %1462 = vmatmul.bf16.gmra.mxu0 %v1415
        %v1463 = vpop.f32.mrf.mxu0
        %v1464 = vadd.f32 %v1436, %v1463
        %v1465 = vpop.f32.mrf.mxu0
        %v1466 = vadd.f32 %v1438, %v1465
        %1467 = vmatmul.bf16.gmra.mxu0 %v1418
        %v1468 = vpop.f32.mrf.mxu0
        %v1469 = vadd.f32 %v1441, %v1468
        %v1470 = vpop.f32.mrf.mxu0
        %v1471 = vadd.f32 %v1443, %v1470
        %1472 = vmatmul.bf16.gmra.mxu0 %v1421
        %v1473 = vpop.f32.mrf.mxu0
        %v1474 = vadd.f32 %v1446, %v1473
        %v1475 = vpop.f32.mrf.mxu0
        %v1476 = vadd.f32 %v1448, %v1475
        %1477 = vmatmul.bf16.gmra.mxu0 %v1424
        %v1478 = vpop.f32.mrf.mxu0
        %v1479 = vadd.f32 %v1451, %v1478
        %v1480 = vpop.f32.mrf.mxu0
        %1481 = vdwg.mxu0
        %v1482 = vpack.c.bf16 %v1466, %v1464
        %v1483 = vpack.c.bf16 %v1471, %v1469
        %v1484 = vpack.c.bf16 %v1476, %v1474
        %v1485 = vpack.c.bf16 %v1479, %v1479
        %s1486 = scalar_lea.vmem %s4, 16
        %v1487 = vld [vmem:[%s1486] sm:$0xf]
        %v1489 = vsel %vm956, %v1482, 0
        %v1492 = vsel %vm956, %v1483, 0
        %v1495 = vsel %vm956, %v1484, 0
        %v1498 = vsel %vm956, %v1485, 0
        %v1501 = vsel %vm605, %v1487, 0
        %1503 = vmatpush.bf16.msra.mxu0 0
        %1504 = vmatpush.bf16.msra.mxu0 0
        %1505 = vmatpush.bf16.msra.mxu0 0
        %1506 = vmatpush.bf16.msra.mxu0 0
        %1507 = vmatpush.bf16.msra.mxu0 0
        %1508 = vmatpush.bf16.msra.mxu0 0
        %1509 = vmatpush.bf16.msra.mxu0 0
        %1510 = vmatpush.bf16.msra.mxu0 %v1501
        %1511 = vmatmul.bf16.gmra.mxu0 %v1489
        %v1512 = vpop.f32.mrf.mxu0
        %v1513 = vadd.f32 0.0, %v1512
        %v1514 = vpop.f32.mrf.mxu0
        %v1515 = vadd.f32 0.0, %v1514
        %1516 = vmatmul.bf16.gmra.mxu0 %v1492
        %v1517 = vpop.f32.mrf.mxu0
        %v1518 = vadd.f32 0.0, %v1517
        %v1519 = vpop.f32.mrf.mxu0
        %v1520 = vadd.f32 0.0, %v1519
        %1521 = vmatmul.bf16.gmra.mxu0 %v1495
        %v1522 = vpop.f32.mrf.mxu0
        %v1523 = vadd.f32 0.0, %v1522
        %v1524 = vpop.f32.mrf.mxu0
        %v1525 = vadd.f32 0.0, %v1524
        %1526 = vmatmul.bf16.gmra.mxu0 %v1498
        %v1527 = vpop.f32.mrf.mxu0
        %v1528 = vadd.f32 0.0, %v1527
        %v1529 = vpop.f32.mrf.mxu0
        %1530 = vdwg.mxu0
        %v1531 = vadd.f32 %v1366, %v1513
        %v1532 = vadd.f32 %v1367, %v1515
        %v1533 = vadd.f32 %v1368, %v1518
        %v1534 = vadd.f32 %v1369, %v1520
        %v1535 = vadd.f32 %v1370, %v1523
        %v1536 = vadd.f32 %v1371, %v1525
        %v1537 = vadd.f32 %v1372, %v1528
        %s1538 = scalar_lea.vmem %s3, 280
        %v1539 = vld [vmem:[%s1538] sm:$0xff]
        %v1540 = vld [vmem:[%s1538 + $0x8] sm:$0xff]
        %v1541 = vld [vmem:[%s1538 + $0x10] sm:$0xff]
        %v1542 = vld [vmem:[%s1538 + $0x18] sm:$0xff]
        %v1543 = vld [vmem:[%s1538 + $0x20] sm:$0xff]
        %v1544 = vld [vmem:[%s1538 + $0x28] sm:$0xff]
        %v1545 = vld [vmem:[%s1538 + $0x30] sm:$0x11]
        %v1553 = vunpack.c.l.b16 %v1539
        %v1554 = vunpack.c.h.b16 %v1539
        %v1555 = vunpack.c.l.b16 %v1540
        %v1556 = vunpack.c.h.b16 %v1540
        %v1557 = vunpack.c.l.b16 %v1541
        %v1558 = vunpack.c.h.b16 %v1541
        %v1559 = vunpack.c.l.b16 %v1542
        %v1560 = vunpack.c.h.b16 %v1542
        %v1561 = vunpack.c.l.b16 %v1543
        %v1562 = vunpack.c.h.b16 %v1543
        %v1563 = vunpack.c.l.b16 %v1544
        %v1564 = vunpack.c.h.b16 %v1544
        %v1565 = vunpack.c.l.b16 %v1545
        %v1566 = vunpack.c.h.b16 %v1545
        %v1567 = vpack.c.b16 %v1555, %v1553
        %v1568 = vpack.c.b16 %v1556, %v1554
        %v1569 = vpack.c.b16 %v1559, %v1557
        %v1570 = vpack.c.b16 %v1560, %v1558
        %v1571 = vpack.c.b16 %v1563, %v1561
        %v1572 = vpack.c.b16 %v1564, %v1562
        %v1573 = vpack.c.b16 %v1565, %v1565
        %v1574 = vpack.c.b16 %v1566, %v1566
        %v1580 = vsel %vm763, %v1568, 0
        %v1583 = vsel %vm763, %v1570, 0
        %v1586 = vsel %vm763, %v1572, 0
        %v1589 = vsel %vm763, %v1574, 0
        %1591 = vmatpush.bf16.msra.mxu0 %v717
        %1592 = vmatpush.bf16.msra.mxu0 %v716
        %1593 = vmatpush.bf16.msra.mxu0 %v715
        %1594 = vmatpush.bf16.msra.mxu0 %v714
        %1595 = vmatpush.bf16.msra.mxu0 %v713
        %1596 = vmatpush.bf16.msra.mxu0 %v712
        %1597 = vmatpush.bf16.msra.mxu0 %v711
        %1598 = vmatpush.bf16.msra.mxu0 %v710
        %1599 = vmatmul.bf16.gmra.mxu0 %v1567
        %v1600 = vpop.f32.mrf.mxu0
        %v1601 = vadd.f32 0.0, %v1600
        %v1602 = vpop.f32.mrf.mxu0
        %v1603 = vadd.f32 0.0, %v1602
        %1604 = vmatmul.bf16.gmra.mxu0 %v1569
        %v1605 = vpop.f32.mrf.mxu0
        %v1606 = vadd.f32 0.0, %v1605
        %v1607 = vpop.f32.mrf.mxu0
        %v1608 = vadd.f32 0.0, %v1607
        %1609 = vmatmul.bf16.gmra.mxu0 %v1571
        %v1610 = vpop.f32.mrf.mxu0
        %v1611 = vadd.f32 0.0, %v1610
        %v1612 = vpop.f32.mrf.mxu0
        %v1613 = vadd.f32 0.0, %v1612
        %1614 = vmatmul.bf16.gmra.mxu0 %v1573
        %v1615 = vpop.f32.mrf.mxu0
        %v1616 = vadd.f32 0.0, %v1615
        %v1617 = vpop.f32.mrf.mxu0
        %1618 = vdwg.mxu0
        %1619 = vmatpush.bf16.msra.mxu0 0
        %1620 = vmatpush.bf16.msra.mxu0 0
        %1621 = vmatpush.bf16.msra.mxu0 0
        %1622 = vmatpush.bf16.msra.mxu0 %v778
        %1623 = vmatpush.bf16.msra.mxu0 %v721
        %1624 = vmatpush.bf16.msra.mxu0 %v720
        %1625 = vmatpush.bf16.msra.mxu0 %v719
        %1626 = vmatpush.bf16.msra.mxu0 %v718
        %1627 = vmatmul.bf16.gmra.mxu0 %v1580
        %v1628 = vpop.f32.mrf.mxu0
        %v1629 = vadd.f32 %v1601, %v1628
        %v1630 = vpop.f32.mrf.mxu0
        %v1631 = vadd.f32 %v1603, %v1630
        %1632 = vmatmul.bf16.gmra.mxu0 %v1583
        %v1633 = vpop.f32.mrf.mxu0
        %v1634 = vadd.f32 %v1606, %v1633
        %v1635 = vpop.f32.mrf.mxu0
        %v1636 = vadd.f32 %v1608, %v1635
        %1637 = vmatmul.bf16.gmra.mxu0 %v1586
        %v1638 = vpop.f32.mrf.mxu0
        %v1639 = vadd.f32 %v1611, %v1638
        %v1640 = vpop.f32.mrf.mxu0
        %v1641 = vadd.f32 %v1613, %v1640
        %1642 = vmatmul.bf16.gmra.mxu0 %v1589
        %v1643 = vpop.f32.mrf.mxu0
        %v1644 = vadd.f32 %v1616, %v1643
        %v1645 = vpop.f32.mrf.mxu0
        %1646 = vdwg.mxu0
        %v1647 = vpack.c.bf16 %v1631, %v1629
        %v1648 = vpack.c.bf16 %v1636, %v1634
        %v1649 = vpack.c.bf16 %v1641, %v1639
        %v1650 = vpack.c.bf16 %v1644, %v1644
        %s1651 = scalar_lea.vmem %s4, 20
        %v1652 = vld [vmem:[%s1651] sm:$0xf]
        %v1654 = vsel %vm956, %v1647, 0
        %v1657 = vsel %vm956, %v1648, 0
        %v1660 = vsel %vm956, %v1649, 0
        %v1663 = vsel %vm956, %v1650, 0
        %v1666 = vsel %vm605, %v1652, 0
        %1668 = vmatpush.bf16.msra.mxu0 0
        %1669 = vmatpush.bf16.msra.mxu0 0
        %1670 = vmatpush.bf16.msra.mxu0 0
        %1671 = vmatpush.bf16.msra.mxu0 0
        %1672 = vmatpush.bf16.msra.mxu0 0
        %1673 = vmatpush.bf16.msra.mxu0 0
        %1674 = vmatpush.bf16.msra.mxu0 0
        %1675 = vmatpush.bf16.msra.mxu0 %v1666
        %1676 = vmatmul.bf16.gmra.mxu0 %v1654
        %v1677 = vpop.f32.mrf.mxu0
        %v1678 = vadd.f32 0.0, %v1677
        %v1679 = vpop.f32.mrf.mxu0
        %v1680 = vadd.f32 0.0, %v1679
        %1681 = vmatmul.bf16.gmra.mxu0 %v1657
        %v1682 = vpop.f32.mrf.mxu0
        %v1683 = vadd.f32 0.0, %v1682
        %v1684 = vpop.f32.mrf.mxu0
        %v1685 = vadd.f32 0.0, %v1684
        %1686 = vmatmul.bf16.gmra.mxu0 %v1660
        %v1687 = vpop.f32.mrf.mxu0
        %v1688 = vadd.f32 0.0, %v1687
        %v1689 = vpop.f32.mrf.mxu0
        %v1690 = vadd.f32 0.0, %v1689
        %1691 = vmatmul.bf16.gmra.mxu0 %v1663
        %v1692 = vpop.f32.mrf.mxu0
        %v1693 = vadd.f32 0.0, %v1692
        %v1694 = vpop.f32.mrf.mxu0
        %1695 = vdwg.mxu0
        %v1696 = vadd.f32 %v1531, %v1678
        %v1697 = vadd.f32 %v1532, %v1680
        %v1698 = vadd.f32 %v1533, %v1683
        %v1699 = vadd.f32 %v1534, %v1685
        %v1700 = vadd.f32 %v1535, %v1688
        %v1701 = vadd.f32 %v1536, %v1690
        %v1702 = vadd.f32 %v1537, %v1693
        %s1703 = scalar_lea.vmem %s3, 336
        %v1704 = vld [vmem:[%s1703] sm:$0xff]
        %v1705 = vld [vmem:[%s1703 + $0x8] sm:$0xff]
        %v1706 = vld [vmem:[%s1703 + $0x10] sm:$0xff]
        %v1707 = vld [vmem:[%s1703 + $0x18] sm:$0xff]
        %v1708 = vld [vmem:[%s1703 + $0x20] sm:$0xff]
        %v1709 = vld [vmem:[%s1703 + $0x28] sm:$0xff]
        %v1710 = vld [vmem:[%s1703 + $0x30] sm:$0x11]
        %v1718 = vunpack.c.l.b16 %v1704
        %v1719 = vunpack.c.h.b16 %v1704
        %v1720 = vunpack.c.l.b16 %v1705
        %v1721 = vunpack.c.h.b16 %v1705
        %v1722 = vunpack.c.l.b16 %v1706
        %v1723 = vunpack.c.h.b16 %v1706
        %v1724 = vunpack.c.l.b16 %v1707
        %v1725 = vunpack.c.h.b16 %v1707
        %v1726 = vunpack.c.l.b16 %v1708
        %v1727 = vunpack.c.h.b16 %v1708
        %v1728 = vunpack.c.l.b16 %v1709
        %v1729 = vunpack.c.h.b16 %v1709
        %v1730 = vunpack.c.l.b16 %v1710
        %v1731 = vunpack.c.h.b16 %v1710
        %v1732 = vpack.c.b16 %v1720, %v1718
        %v1733 = vpack.c.b16 %v1721, %v1719
        %v1734 = vpack.c.b16 %v1724, %v1722
        %v1735 = vpack.c.b16 %v1725, %v1723
        %v1736 = vpack.c.b16 %v1728, %v1726
        %v1737 = vpack.c.b16 %v1729, %v1727
        %v1738 = vpack.c.b16 %v1730, %v1730
        %v1739 = vpack.c.b16 %v1731, %v1731
        %v1745 = vsel %vm763, %v1733, 0
        %v1748 = vsel %vm763, %v1735, 0
        %v1751 = vsel %vm763, %v1737, 0
        %v1754 = vsel %vm763, %v1739, 0
        %1756 = vmatpush.bf16.msra.mxu0 %v717
        %1757 = vmatpush.bf16.msra.mxu0 %v716
        %1758 = vmatpush.bf16.msra.mxu0 %v715
        %1759 = vmatpush.bf16.msra.mxu0 %v714
        %1760 = vmatpush.bf16.msra.mxu0 %v713
        %1761 = vmatpush.bf16.msra.mxu0 %v712
        %1762 = vmatpush.bf16.msra.mxu0 %v711
        %1763 = vmatpush.bf16.msra.mxu0 %v710
        %1764 = vmatmul.bf16.gmra.mxu0 %v1732
        %v1765 = vpop.f32.mrf.mxu0
        %v1766 = vadd.f32 0.0, %v1765
        %v1767 = vpop.f32.mrf.mxu0
        %v1768 = vadd.f32 0.0, %v1767
        %1769 = vmatmul.bf16.gmra.mxu0 %v1734
        %v1770 = vpop.f32.mrf.mxu0
        %v1771 = vadd.f32 0.0, %v1770
        %v1772 = vpop.f32.mrf.mxu0
        %v1773 = vadd.f32 0.0, %v1772
        %1774 = vmatmul.bf16.gmra.mxu0 %v1736
        %v1775 = vpop.f32.mrf.mxu0
        %v1776 = vadd.f32 0.0, %v1775
        %v1777 = vpop.f32.mrf.mxu0
        %v1778 = vadd.f32 0.0, %v1777
        %1779 = vmatmul.bf16.gmra.mxu0 %v1738
        %v1780 = vpop.f32.mrf.mxu0
        %v1781 = vadd.f32 0.0, %v1780
        %v1782 = vpop.f32.mrf.mxu0
        %1783 = vdwg.mxu0
        %1784 = vmatpush.bf16.msra.mxu0 0
        %1785 = vmatpush.bf16.msra.mxu0 0
        %1786 = vmatpush.bf16.msra.mxu0 0
        %1787 = vmatpush.bf16.msra.mxu0 %v778
        %1788 = vmatpush.bf16.msra.mxu0 %v721
        %1789 = vmatpush.bf16.msra.mxu0 %v720
        %1790 = vmatpush.bf16.msra.mxu0 %v719
        %1791 = vmatpush.bf16.msra.mxu0 %v718
        %1792 = vmatmul.bf16.gmra.mxu0 %v1745
        %v1793 = vpop.f32.mrf.mxu0
        %v1794 = vadd.f32 %v1766, %v1793
        %v1795 = vpop.f32.mrf.mxu0
        %v1796 = vadd.f32 %v1768, %v1795
        %1797 = vmatmul.bf16.gmra.mxu0 %v1748
        %v1798 = vpop.f32.mrf.mxu0
        %v1799 = vadd.f32 %v1771, %v1798
        %v1800 = vpop.f32.mrf.mxu0
        %v1801 = vadd.f32 %v1773, %v1800
        %1802 = vmatmul.bf16.gmra.mxu0 %v1751
        %v1803 = vpop.f32.mrf.mxu0
        %v1804 = vadd.f32 %v1776, %v1803
        %v1805 = vpop.f32.mrf.mxu0
        %v1806 = vadd.f32 %v1778, %v1805
        %1807 = vmatmul.bf16.gmra.mxu0 %v1754
        %v1808 = vpop.f32.mrf.mxu0
        %v1809 = vadd.f32 %v1781, %v1808
        %v1810 = vpop.f32.mrf.mxu0
        %1811 = vdwg.mxu0
        %v1812 = vpack.c.bf16 %v1796, %v1794
        %v1813 = vpack.c.bf16 %v1801, %v1799
        %v1814 = vpack.c.bf16 %v1806, %v1804
        %v1815 = vpack.c.bf16 %v1809, %v1809
        %s1816 = scalar_lea.vmem %s4, 24
        %v1817 = vld [vmem:[%s1816] sm:$0xf]
        %v1819 = vsel %vm956, %v1812, 0
        %v1822 = vsel %vm956, %v1813, 0
        %v1825 = vsel %vm956, %v1814, 0
        %v1828 = vsel %vm956, %v1815, 0
        %v1831 = vsel %vm605, %v1817, 0
        %1833 = vmatpush.bf16.msra.mxu0 0
        %1834 = vmatpush.bf16.msra.mxu0 0
        %1835 = vmatpush.bf16.msra.mxu0 0
        %1836 = vmatpush.bf16.msra.mxu0 0
        %1837 = vmatpush.bf16.msra.mxu0 0
        %1838 = vmatpush.bf16.msra.mxu0 0
        %1839 = vmatpush.bf16.msra.mxu0 0
        %1840 = vmatpush.bf16.msra.mxu0 %v1831
        %1841 = vmatmul.bf16.gmra.mxu0 %v1819
        %v1842 = vpop.f32.mrf.mxu0
        %v1843 = vadd.f32 0.0, %v1842
        %v1844 = vpop.f32.mrf.mxu0
        %v1845 = vadd.f32 0.0, %v1844
        %1846 = vmatmul.bf16.gmra.mxu0 %v1822
        %v1847 = vpop.f32.mrf.mxu0
        %v1848 = vadd.f32 0.0, %v1847
        %v1849 = vpop.f32.mrf.mxu0
        %v1850 = vadd.f32 0.0, %v1849
        %1851 = vmatmul.bf16.gmra.mxu0 %v1825
        %v1852 = vpop.f32.mrf.mxu0
        %v1853 = vadd.f32 0.0, %v1852
        %v1854 = vpop.f32.mrf.mxu0
        %v1855 = vadd.f32 0.0, %v1854
        %1856 = vmatmul.bf16.gmra.mxu0 %v1828
        %v1857 = vpop.f32.mrf.mxu0
        %v1858 = vadd.f32 0.0, %v1857
        %v1859 = vpop.f32.mrf.mxu0
        %1860 = vdwg.mxu0
        %v1861 = vadd.f32 %v1696, %v1843
        %v1862 = vadd.f32 %v1697, %v1845
        %v1863 = vadd.f32 %v1698, %v1848
        %v1864 = vadd.f32 %v1699, %v1850
        %v1865 = vadd.f32 %v1700, %v1853
        %v1866 = vadd.f32 %v1701, %v1855
        %v1867 = vadd.f32 %v1702, %v1858
        %s1868 = scalar_lea.vmem %s3, 392
        %v1869 = vld [vmem:[%s1868] sm:$0xff]
        %v1870 = vld [vmem:[%s1868 + $0x8] sm:$0xff]
        %v1871 = vld [vmem:[%s1868 + $0x10] sm:$0xff]
        %v1872 = vld [vmem:[%s1868 + $0x18] sm:$0xff]
        %v1873 = vld [vmem:[%s1868 + $0x20] sm:$0xff]
        %v1874 = vld [vmem:[%s1868 + $0x28] sm:$0xff]
        %v1875 = vld [vmem:[%s1868 + $0x30] sm:$0x11]
        %v1883 = vunpack.c.l.b16 %v1869
        %v1884 = vunpack.c.h.b16 %v1869
        %v1885 = vunpack.c.l.b16 %v1870
        %v1886 = vunpack.c.h.b16 %v1870
        %v1887 = vunpack.c.l.b16 %v1871
        %v1888 = vunpack.c.h.b16 %v1871
        %v1889 = vunpack.c.l.b16 %v1872
        %v1890 = vunpack.c.h.b16 %v1872
        %v1891 = vunpack.c.l.b16 %v1873
        %v1892 = vunpack.c.h.b16 %v1873
        %v1893 = vunpack.c.l.b16 %v1874
        %v1894 = vunpack.c.h.b16 %v1874
        %v1895 = vunpack.c.l.b16 %v1875
        %v1896 = vunpack.c.h.b16 %v1875
        %v1897 = vpack.c.b16 %v1885, %v1883
        %v1898 = vpack.c.b16 %v1886, %v1884
        %v1899 = vpack.c.b16 %v1889, %v1887
        %v1900 = vpack.c.b16 %v1890, %v1888
        %v1901 = vpack.c.b16 %v1893, %v1891
        %v1902 = vpack.c.b16 %v1894, %v1892
        %v1903 = vpack.c.b16 %v1895, %v1895
        %v1904 = vpack.c.b16 %v1896, %v1896
        %v1910 = vsel %vm763, %v1898, 0
        %v1913 = vsel %vm763, %v1900, 0
        %v1916 = vsel %vm763, %v1902, 0
        %v1919 = vsel %vm763, %v1904, 0
        %1921 = vmatpush.bf16.msra.mxu0 %v717
        %1922 = vmatpush.bf16.msra.mxu0 %v716
        %1923 = vmatpush.bf16.msra.mxu0 %v715
        %1924 = vmatpush.bf16.msra.mxu0 %v714
        %1925 = vmatpush.bf16.msra.mxu0 %v713
        %1926 = vmatpush.bf16.msra.mxu0 %v712
        %1927 = vmatpush.bf16.msra.mxu0 %v711
        %1928 = vmatpush.bf16.msra.mxu0 %v710
        %1929 = vmatmul.bf16.gmra.mxu0 %v1897
        %v1930 = vpop.f32.mrf.mxu0
        %v1931 = vadd.f32 0.0, %v1930
        %v1932 = vpop.f32.mrf.mxu0
        %v1933 = vadd.f32 0.0, %v1932
        %1934 = vmatmul.bf16.gmra.mxu0 %v1899
        %v1935 = vpop.f32.mrf.mxu0
        %v1936 = vadd.f32 0.0, %v1935
        %v1937 = vpop.f32.mrf.mxu0
        %v1938 = vadd.f32 0.0, %v1937
        %1939 = vmatmul.bf16.gmra.mxu0 %v1901
        %v1940 = vpop.f32.mrf.mxu0
        %v1941 = vadd.f32 0.0, %v1940
        %v1942 = vpop.f32.mrf.mxu0
        %v1943 = vadd.f32 0.0, %v1942
        %1944 = vmatmul.bf16.gmra.mxu0 %v1903
        %v1945 = vpop.f32.mrf.mxu0
        %v1946 = vadd.f32 0.0, %v1945
        %v1947 = vpop.f32.mrf.mxu0
        %1948 = vdwg.mxu0
        %1949 = vmatpush.bf16.msra.mxu0 0
        %1950 = vmatpush.bf16.msra.mxu0 0
        %1951 = vmatpush.bf16.msra.mxu0 0
        %1952 = vmatpush.bf16.msra.mxu0 %v778
        %1953 = vmatpush.bf16.msra.mxu0 %v721
        %1954 = vmatpush.bf16.msra.mxu0 %v720
        %1955 = vmatpush.bf16.msra.mxu0 %v719
        %1956 = vmatpush.bf16.msra.mxu0 %v718
        %1957 = vmatmul.bf16.gmra.mxu0 %v1910
        %v1958 = vpop.f32.mrf.mxu0
        %v1959 = vadd.f32 %v1931, %v1958
        %v1960 = vpop.f32.mrf.mxu0
        %v1961 = vadd.f32 %v1933, %v1960
        %1962 = vmatmul.bf16.gmra.mxu0 %v1913
        %v1963 = vpop.f32.mrf.mxu0
        %v1964 = vadd.f32 %v1936, %v1963
        %v1965 = vpop.f32.mrf.mxu0
        %v1966 = vadd.f32 %v1938, %v1965
        %1967 = vmatmul.bf16.gmra.mxu0 %v1916
        %v1968 = vpop.f32.mrf.mxu0
        %v1969 = vadd.f32 %v1941, %v1968
        %v1970 = vpop.f32.mrf.mxu0
        %v1971 = vadd.f32 %v1943, %v1970
        %1972 = vmatmul.bf16.gmra.mxu0 %v1919
        %v1973 = vpop.f32.mrf.mxu0
        %v1974 = vadd.f32 %v1946, %v1973
        %v1975 = vpop.f32.mrf.mxu0
        %1976 = vdwg.mxu0
        %v1977 = vpack.c.bf16 %v1961, %v1959
        %v1978 = vpack.c.bf16 %v1966, %v1964
        %v1979 = vpack.c.bf16 %v1971, %v1969
        %v1980 = vpack.c.bf16 %v1974, %v1974
        %s1981 = scalar_lea.vmem %s4, 28
        %v1982 = vld [vmem:[%s1981] sm:$0xf]
        %v1984 = vsel %vm956, %v1977, 0
        %v1987 = vsel %vm956, %v1978, 0
        %v1990 = vsel %vm956, %v1979, 0
        %v1993 = vsel %vm956, %v1980, 0
        %v1996 = vsel %vm605, %v1982, 0
        %1998 = vmatpush.bf16.msra.mxu0 0
        %1999 = vmatpush.bf16.msra.mxu0 0
        %2000 = vmatpush.bf16.msra.mxu0 0
        %2001 = vmatpush.bf16.msra.mxu0 0
        %2002 = vmatpush.bf16.msra.mxu0 0
        %2003 = vmatpush.bf16.msra.mxu0 0
        %2004 = vmatpush.bf16.msra.mxu0 0
        %2005 = vmatpush.bf16.msra.mxu0 %v1996
        %2006 = vmatmul.bf16.gmra.mxu0 %v1984
        %v2007 = vpop.f32.mrf.mxu0
        %v2008 = vadd.f32 0.0, %v2007
        %v2009 = vpop.f32.mrf.mxu0
        %v2010 = vadd.f32 0.0, %v2009
        %2011 = vmatmul.bf16.gmra.mxu0 %v1987
        %v2012 = vpop.f32.mrf.mxu0
        %v2013 = vadd.f32 0.0, %v2012
        %v2014 = vpop.f32.mrf.mxu0
        %v2015 = vadd.f32 0.0, %v2014
        %2016 = vmatmul.bf16.gmra.mxu0 %v1990
        %v2017 = vpop.f32.mrf.mxu0
        %v2018 = vadd.f32 0.0, %v2017
        %v2019 = vpop.f32.mrf.mxu0
        %v2020 = vadd.f32 0.0, %v2019
        %2021 = vmatmul.bf16.gmra.mxu0 %v1993
        %v2022 = vpop.f32.mrf.mxu0
        %v2023 = vadd.f32 0.0, %v2022
        %v2024 = vpop.f32.mrf.mxu0
        %2025 = vdwg.mxu0
        %v2026 = vadd.f32 %v1861, %v2008
        %v2027 = vadd.f32 %v1862, %v2010
        %v2028 = vadd.f32 %v1863, %v2013
        %v2029 = vadd.f32 %v1864, %v2015
        %v2030 = vadd.f32 %v1865, %v2018
        %v2031 = vadd.f32 %v1866, %v2020
        %v2032 = vadd.f32 %v1867, %v2023
        %s2033 = scalar_lea.vmem %s3, 448
        %v2034 = vld [vmem:[%s2033] sm:$0xff]
        %v2035 = vld [vmem:[%s2033 + $0x8] sm:$0xff]
        %v2036 = vld [vmem:[%s2033 + $0x10] sm:$0xff]
        %v2037 = vld [vmem:[%s2033 + $0x18] sm:$0xff]
        %v2038 = vld [vmem:[%s2033 + $0x20] sm:$0xff]
        %v2039 = vld [vmem:[%s2033 + $0x28] sm:$0xff]
        %v2040 = vld [vmem:[%s2033 + $0x30] sm:$0x11]
        %v2048 = vunpack.c.l.b16 %v2034
        %v2049 = vunpack.c.h.b16 %v2034
        %v2050 = vunpack.c.l.b16 %v2035
        %v2051 = vunpack.c.h.b16 %v2035
        %v2052 = vunpack.c.l.b16 %v2036
        %v2053 = vunpack.c.h.b16 %v2036
        %v2054 = vunpack.c.l.b16 %v2037
        %v2055 = vunpack.c.h.b16 %v2037
        %v2056 = vunpack.c.l.b16 %v2038
        %v2057 = vunpack.c.h.b16 %v2038
        %v2058 = vunpack.c.l.b16 %v2039
        %v2059 = vunpack.c.h.b16 %v2039
        %v2060 = vunpack.c.l.b16 %v2040
        %v2061 = vunpack.c.h.b16 %v2040
        %v2062 = vpack.c.b16 %v2050, %v2048
        %v2063 = vpack.c.b16 %v2051, %v2049
        %v2064 = vpack.c.b16 %v2054, %v2052
        %v2065 = vpack.c.b16 %v2055, %v2053
        %v2066 = vpack.c.b16 %v2058, %v2056
        %v2067 = vpack.c.b16 %v2059, %v2057
        %v2068 = vpack.c.b16 %v2060, %v2060
        %v2069 = vpack.c.b16 %v2061, %v2061
        %v2075 = vsel %vm763, %v2063, 0
        %v2078 = vsel %vm763, %v2065, 0
        %v2081 = vsel %vm763, %v2067, 0
        %v2084 = vsel %vm763, %v2069, 0
        %2086 = vmatpush.bf16.msra.mxu0 %v717
        %2087 = vmatpush.bf16.msra.mxu0 %v716
        %2088 = vmatpush.bf16.msra.mxu0 %v715
        %2089 = vmatpush.bf16.msra.mxu0 %v714
        %2090 = vmatpush.bf16.msra.mxu0 %v713
        %2091 = vmatpush.bf16.msra.mxu0 %v712
        %2092 = vmatpush.bf16.msra.mxu0 %v711
        %2093 = vmatpush.bf16.msra.mxu0 %v710
        %2094 = vmatmul.bf16.gmra.mxu0 %v2062
        %v2095 = vpop.f32.mrf.mxu0
        %v2096 = vadd.f32 0.0, %v2095
        %v2097 = vpop.f32.mrf.mxu0
        %v2098 = vadd.f32 0.0, %v2097
        %2099 = vmatmul.bf16.gmra.mxu0 %v2064
        %v2100 = vpop.f32.mrf.mxu0
        %v2101 = vadd.f32 0.0, %v2100
        %v2102 = vpop.f32.mrf.mxu0
        %v2103 = vadd.f32 0.0, %v2102
        %2104 = vmatmul.bf16.gmra.mxu0 %v2066
        %v2105 = vpop.f32.mrf.mxu0
        %v2106 = vadd.f32 0.0, %v2105
        %v2107 = vpop.f32.mrf.mxu0
        %v2108 = vadd.f32 0.0, %v2107
        %2109 = vmatmul.bf16.gmra.mxu0 %v2068
        %v2110 = vpop.f32.mrf.mxu0
        %v2111 = vadd.f32 0.0, %v2110
        %v2112 = vpop.f32.mrf.mxu0
        %2113 = vdwg.mxu0
        %2114 = vmatpush.bf16.msra.mxu0 0
        %2115 = vmatpush.bf16.msra.mxu0 0
        %2116 = vmatpush.bf16.msra.mxu0 0
        %2117 = vmatpush.bf16.msra.mxu0 %v778
        %2118 = vmatpush.bf16.msra.mxu0 %v721
        %2119 = vmatpush.bf16.msra.mxu0 %v720
        %2120 = vmatpush.bf16.msra.mxu0 %v719
        %2121 = vmatpush.bf16.msra.mxu0 %v718
        %2122 = vmatmul.bf16.gmra.mxu0 %v2075
        %v2123 = vpop.f32.mrf.mxu0
        %v2124 = vadd.f32 %v2096, %v2123
        %v2125 = vpop.f32.mrf.mxu0
        %v2126 = vadd.f32 %v2098, %v2125
        %2127 = vmatmul.bf16.gmra.mxu0 %v2078
        %v2128 = vpop.f32.mrf.mxu0
        %v2129 = vadd.f32 %v2101, %v2128
        %v2130 = vpop.f32.mrf.mxu0
        %v2131 = vadd.f32 %v2103, %v2130
        %2132 = vmatmul.bf16.gmra.mxu0 %v2081
        %v2133 = vpop.f32.mrf.mxu0
        %v2134 = vadd.f32 %v2106, %v2133
        %v2135 = vpop.f32.mrf.mxu0
        %v2136 = vadd.f32 %v2108, %v2135
        %2137 = vmatmul.bf16.gmra.mxu0 %v2084
        %v2138 = vpop.f32.mrf.mxu0
        %v2139 = vadd.f32 %v2111, %v2138
        %v2140 = vpop.f32.mrf.mxu0
        %2141 = vdwg.mxu0
        %v2142 = vpack.c.bf16 %v2126, %v2124
        %v2143 = vpack.c.bf16 %v2131, %v2129
        %v2144 = vpack.c.bf16 %v2136, %v2134
        %v2145 = vpack.c.bf16 %v2139, %v2139
        %s2146 = scalar_lea.vmem %s4, 32
        %v2147 = vld [vmem:[%s2146] sm:$0xf]
        %v2149 = vsel %vm956, %v2142, 0
        %v2152 = vsel %vm956, %v2143, 0
        %v2155 = vsel %vm956, %v2144, 0
        %v2158 = vsel %vm956, %v2145, 0
        %v2161 = vsel %vm605, %v2147, 0
        %2163 = vmatpush.bf16.msra.mxu0 0
        %2164 = vmatpush.bf16.msra.mxu0 0
        %2165 = vmatpush.bf16.msra.mxu0 0
        %2166 = vmatpush.bf16.msra.mxu0 0
        %2167 = vmatpush.bf16.msra.mxu0 0
        %2168 = vmatpush.bf16.msra.mxu0 0
        %2169 = vmatpush.bf16.msra.mxu0 0
        %2170 = vmatpush.bf16.msra.mxu0 %v2161
        %2171 = vmatmul.bf16.gmra.mxu0 %v2149
        %v2172 = vpop.f32.mrf.mxu0
        %v2173 = vadd.f32 0.0, %v2172
        %v2174 = vpop.f32.mrf.mxu0
        %v2175 = vadd.f32 0.0, %v2174
        %2176 = vmatmul.bf16.gmra.mxu0 %v2152
        %v2177 = vpop.f32.mrf.mxu0
        %v2178 = vadd.f32 0.0, %v2177
        %v2179 = vpop.f32.mrf.mxu0
        %v2180 = vadd.f32 0.0, %v2179
        %2181 = vmatmul.bf16.gmra.mxu0 %v2155
        %v2182 = vpop.f32.mrf.mxu0
        %v2183 = vadd.f32 0.0, %v2182
        %v2184 = vpop.f32.mrf.mxu0
        %v2185 = vadd.f32 0.0, %v2184
        %2186 = vmatmul.bf16.gmra.mxu0 %v2158
        %v2187 = vpop.f32.mrf.mxu0
        %v2188 = vadd.f32 0.0, %v2187
        %v2189 = vpop.f32.mrf.mxu0
        %2190 = vdwg.mxu0
        %v2191 = vadd.f32 %v2026, %v2173
        %v2192 = vadd.f32 %v2027, %v2175
        %v2193 = vadd.f32 %v2028, %v2178
        %v2194 = vadd.f32 %v2029, %v2180
        %v2195 = vadd.f32 %v2030, %v2183
        %v2196 = vadd.f32 %v2031, %v2185
        %v2197 = vadd.f32 %v2032, %v2188
        %v2198 = vld [vmem:[%s5] sm:$0x1]
        %v2200 = vperm.slane %v2198, 0
        %v2202 = vmul.f32 %v2191, %v2200
        %v2203 = vmul.f32 %v2192, %v2200
        %v2204 = vmul.f32 %v2193, %v2200
        %v2205 = vmul.f32 %v2194, %v2200
        %v2206 = vmul.f32 %v2195, %v2200
        %v2207 = vmul.f32 %v2196, %v2200
        %v2208 = vmul.f32 %v2197, %v2200
        %v2209 = vld [vmem:[%s6] sm:$0x1]
        %v2211 = vperm.slane %v2209, 0
        %v2213 = vadd.f32 %v2202, %v2211
        %v2214 = vadd.f32 %v2203, %v2211
        %v2215 = vadd.f32 %v2204, %v2211
        %v2216 = vadd.f32 %v2205, %v2211
        %v2217 = vadd.f32 %v2206, %v2211
        %v2218 = vadd.f32 %v2207, %v2211
        %v2219 = vadd.f32 %v2208, %v2211
        %v2220 = vmax.f32 %v2213, 0.0
        %v2221 = vmax.f32 %v2214, 0.0
        %v2222 = vmax.f32 %v2215, 0.0
        %v2223 = vmax.f32 %v2216, 0.0
        %v2224 = vmax.f32 %v2217, 0.0
        %v2225 = vmax.f32 %v2218, 0.0
        %v2226 = vmax.f32 %v2219, 0.0
        %v2227 = vpack.c.bf16 %v2221, %v2220
        %v2228 = vpack.c.bf16 %v2223, %v2222
        %v2229 = vpack.c.bf16 %v2225, %v2224
        %v2230 = vpack.c.bf16 %v2226, %v2226
        %v2231 = vld [vmem:[%s7] sm:$0xf]
        %v2232 = vld [vmem:[%s7 + $0x4] sm:$0x1]
        %v2235 = vunpack.c.l.b16 %v2231
        %v2236 = vunpack.c.l.b16 %v2232
        %v2237 = vpack.c.b16 %v2236, %v2235
        %vm2238 = vcmask 400384
        %v2240 = vsel %vm2238, %v2237, 0
        %vm2242 = vcmask 1040384
        %v2243 = vsel 0, 4294967295, 65535
        %v2244 = vsel %vm2242, %v2243, 0
        %v2246 = vand.u32 %v2230, %v2244
        %2248 = vmatpush.bf16.msra.mxu0 0
        %2249 = vmatpush.bf16.msra.mxu0 0
        %2250 = vmatpush.bf16.msra.mxu0 0
        %2251 = vmatpush.bf16.msra.mxu0 0
        %2252 = vmatpush.bf16.msra.mxu0 %v2246
        %2253 = vmatpush.bf16.msra.mxu0 %v2229
        %2254 = vmatpush.bf16.msra.mxu0 %v2228
        %2255 = vmatpush.bf16.msra.mxu0 %v2227
        %2256 = vmatmul.bf16.gmra.mxu0 %v2240
        %v2257 = vpop.f32.mrf.mxu0
        %v2258 = vadd.f32 0.0, %v2257
        %v2259 = vpop.f32.mrf.mxu0
        %v2260 = vadd.f32 0.0, %v2259
        %2261 = vdwg.mxu0
        %v2262 = vpack.c.bf16 %v2260, %v2258
        %v2263 = vld [vmem:[%s8] sm:$0xf]
        %v2264 = vld [vmem:[%s8 + $0x4] sm:$0xf]
        %s2265 = scalar_lea.vmem %s7, 8
        %v2266 = vld [vmem:[%s2265] sm:$0xf]
        %v2267 = vld [vmem:[%s2265 + $0x4] sm:$0x1]
        %v2270 = vunpack.c.l.b16 %v2266
        %v2271 = vunpack.c.l.b16 %v2267
        %v2272 = vpack.c.b16 %v2271, %v2270
        %v2274 = vsel %vm2238, %v2272, 0
        %2276 = vmatpush.bf16.msra.mxu0 0
        %2277 = vmatpush.bf16.msra.mxu0 0
        %2278 = vmatpush.bf16.msra.mxu0 0
        %2279 = vmatpush.bf16.msra.mxu0 0
        %2280 = vmatpush.bf16.msra.mxu0 %v2246
        %2281 = vmatpush.bf16.msra.mxu0 %v2229
        %2282 = vmatpush.bf16.msra.mxu0 %v2228
        %2283 = vmatpush.bf16.msra.mxu0 %v2227
        %2284 = vmatmul.bf16.gmra.mxu0 %v2274
        %v2285 = vpop.f32.mrf.mxu0
        %v2286 = vadd.f32 0.0, %v2285
        %v2287 = vpop.f32.mrf.mxu0
        %v2288 = vadd.f32 0.0, %v2287
        %2289 = vdwg.mxu0
        %v2290 = vpack.c.bf16 %v2288, %v2286
        %s2291 = scalar_lea.vmem %s8, 8
        %v2292 = vld [vmem:[%s2291] sm:$0xf]
        %v2293 = vld [vmem:[%s2291 + $0x4] sm:$0xf]
        %v2296 = vunpack.c.l.b16 %v2292
        %v2297 = vunpack.c.l.b16 %v2293
        %v2298 = vpack.c.b16 %v2297, %v2296
        %vm2300 = vcmask 130048
        %v2302 = vsel %vm2300, %v2290, 0
        %2304 = vmatpush.bf16.msra.mxu0 0
        %2305 = vmatpush.bf16.msra.mxu0 0
        %2306 = vmatpush.bf16.msra.mxu0 0
        %2307 = vmatpush.bf16.msra.mxu0 0
        %2308 = vmatpush.bf16.msra.mxu0 0
        %2309 = vmatpush.bf16.msra.mxu0 0
        %2310 = vmatpush.bf16.msra.mxu0 0
        %2311 = vmatpush.bf16.msra.mxu0 %v2298
        %2312 = vmatmul.bf16.gmra.mxu0 %v2302
        %v2313 = vpop.f32.mrf.mxu0
        %v2314 = vadd.f32 0.0, %v2313
        %v2315 = vpop.f32.mrf.mxu0
        %v2316 = vadd.f32 0.0, %v2315
        %2317 = vdwg.mxu0
        %v2320 = vunpack.c.l.b16 %v2263
        %v2321 = vunpack.c.l.b16 %v2264
        %v2322 = vpack.c.b16 %v2321, %v2320
        %v2325 = vsel %vm2300, %v2262, 0
        %2327 = vmatpush.bf16.msra.mxu0 0
        %2328 = vmatpush.bf16.msra.mxu0 0
        %2329 = vmatpush.bf16.msra.mxu0 0
        %2330 = vmatpush.bf16.msra.mxu0 0
        %2331 = vmatpush.bf16.msra.mxu0 0
        %2332 = vmatpush.bf16.msra.mxu0 0
        %2333 = vmatpush.bf16.msra.mxu0 0
        %2334 = vmatpush.bf16.msra.mxu0 %v2322
        %2335 = vmatmul.bf16.gmra.mxu0 %v2325
        %v2336 = vpop.f32.mrf.mxu0
        %v2337 = vadd.f32 %v2314, %v2336
        %v2338 = vpop.f32.mrf.mxu0
        %v2339 = vadd.f32 %v2316, %v2338
        %2340 = vdwg.mxu0
        %s2341 = scalar_lea.vmem %s7, 16
        %v2342 = vld [vmem:[%s2341] sm:$0xf]
        %v2343 = vld [vmem:[%s2341 + $0x4] sm:$0x1]
        %v2346 = vunpack.c.l.b16 %v2342
        %v2347 = vunpack.c.l.b16 %v2343
        %v2348 = vpack.c.b16 %v2347, %v2346
        %v2350 = vsel %vm2238, %v2348, 0
        %2352 = vmatpush.bf16.msra.mxu0 0
        %2353 = vmatpush.bf16.msra.mxu0 0
        %2354 = vmatpush.bf16.msra.mxu0 0
        %2355 = vmatpush.bf16.msra.mxu0 0
        %2356 = vmatpush.bf16.msra.mxu0 %v2246
        %2357 = vmatpush.bf16.msra.mxu0 %v2229
        %2358 = vmatpush.bf16.msra.mxu0 %v2228
        %2359 = vmatpush.bf16.msra.mxu0 %v2227
        %2360 = vmatmul.bf16.gmra.mxu0 %v2350
        %v2361 = vpop.f32.mrf.mxu0
        %v2362 = vadd.f32 0.0, %v2361
        %v2363 = vpop.f32.mrf.mxu0
        %v2364 = vadd.f32 0.0, %v2363
        %2365 = vdwg.mxu0
        %v2366 = vpack.c.bf16 %v2364, %v2362
        %s2367 = scalar_lea.vmem %s8, 16
        %v2368 = vld [vmem:[%s2367] sm:$0xf]
        %v2369 = vld [vmem:[%s2367 + $0x4] sm:$0xf]
        %v2372 = vunpack.c.l.b16 %v2368
        %v2373 = vunpack.c.l.b16 %v2369
        %v2374 = vpack.c.b16 %v2373, %v2372
        %v2377 = vsel %vm2300, %v2366, 0
        %2379 = vmatpush.bf16.msra.mxu0 0
        %2380 = vmatpush.bf16.msra.mxu0 0
        %2381 = vmatpush.bf16.msra.mxu0 0
        %2382 = vmatpush.bf16.msra.mxu0 0
        %2383 = vmatpush.bf16.msra.mxu0 0
        %2384 = vmatpush.bf16.msra.mxu0 0
        %2385 = vmatpush.bf16.msra.mxu0 0
        %2386 = vmatpush.bf16.msra.mxu0 %v2374
        %2387 = vmatmul.bf16.gmra.mxu0 %v2377
        %v2388 = vpop.f32.mrf.mxu0
        %v2389 = vadd.f32 0.0, %v2388
        %v2390 = vpop.f32.mrf.mxu0
        %v2391 = vadd.f32 0.0, %v2390
        %2392 = vdwg.mxu0
        %v2393 = vadd.f32 %v2337, %v2389
        %v2394 = vadd.f32 %v2339, %v2391
        %s2395 = scalar_lea.vmem %s7, 24
        %v2396 = vld [vmem:[%s2395] sm:$0xf]
        %v2397 = vld [vmem:[%s2395 + $0x4] sm:$0x1]
        %v2400 = vunpack.c.l.b16 %v2396
        %v2401 = vunpack.c.l.b16 %v2397
        %v2402 = vpack.c.b16 %v2401, %v2400
        %v2404 = vsel %vm2238, %v2402, 0
        %2406 = vmatpush.bf16.msra.mxu0 0
        %2407 = vmatpush.bf16.msra.mxu0 0
        %2408 = vmatpush.bf16.msra.mxu0 0
        %2409 = vmatpush.bf16.msra.mxu0 0
        %2410 = vmatpush.bf16.msra.mxu0 %v2246
        %2411 = vmatpush.bf16.msra.mxu0 %v2229
        %2412 = vmatpush.bf16.msra.mxu0 %v2228
        %2413 = vmatpush.bf16.msra.mxu0 %v2227
        %2414 = vmatmul.bf16.gmra.mxu0 %v2404
        %v2415 = vpop.f32.mrf.mxu0
        %v2416 = vadd.f32 0.0, %v2415
        %v2417 = vpop.f32.mrf.mxu0
        %v2418 = vadd.f32 0.0, %v2417
        %2419 = vdwg.mxu0
        %v2420 = vpack.c.bf16 %v2418, %v2416
        %s2421 = scalar_lea.vmem %s8, 24
        %v2422 = vld [vmem:[%s2421] sm:$0xf]
        %v2423 = vld [vmem:[%s2421 + $0x4] sm:$0xf]
        %v2426 = vunpack.c.l.b16 %v2422
        %v2427 = vunpack.c.l.b16 %v2423
        %v2428 = vpack.c.b16 %v2427, %v2426
        %v2431 = vsel %vm2300, %v2420, 0
        %2433 = vmatpush.bf16.msra.mxu0 0
        %2434 = vmatpush.bf16.msra.mxu0 0
        %2435 = vmatpush.bf16.msra.mxu0 0
        %2436 = vmatpush.bf16.msra.mxu0 0
        %2437 = vmatpush.bf16.msra.mxu0 0
        %2438 = vmatpush.bf16.msra.mxu0 0
        %2439 = vmatpush.bf16.msra.mxu0 0
        %2440 = vmatpush.bf16.msra.mxu0 %v2428
        %2441 = vmatmul.bf16.gmra.mxu0 %v2431
        %v2442 = vpop.f32.mrf.mxu0
        %v2443 = vadd.f32 0.0, %v2442
        %v2444 = vpop.f32.mrf.mxu0
        %v2445 = vadd.f32 0.0, %v2444
        %2446 = vdwg.mxu0
        %v2447 = vadd.f32 %v2393, %v2443
        %v2448 = vadd.f32 %v2394, %v2445
        %s2449 = scalar_lea.vmem %s7, 32
        %v2450 = vld [vmem:[%s2449] sm:$0xf]
        %v2451 = vld [vmem:[%s2449 + $0x4] sm:$0x1]
        %v2454 = vunpack.c.l.b16 %v2450
        %v2455 = vunpack.c.l.b16 %v2451
        %v2456 = vpack.c.b16 %v2455, %v2454
        %v2458 = vsel %vm2238, %v2456, 0
        %2460 = vmatpush.bf16.msra.mxu0 0
        %2461 = vmatpush.bf16.msra.mxu0 0
        %2462 = vmatpush.bf16.msra.mxu0 0
        %2463 = vmatpush.bf16.msra.mxu0 0
        %2464 = vmatpush.bf16.msra.mxu0 %v2246
        %2465 = vmatpush.bf16.msra.mxu0 %v2229
        %2466 = vmatpush.bf16.msra.mxu0 %v2228
        %2467 = vmatpush.bf16.msra.mxu0 %v2227
        %2468 = vmatmul.bf16.gmra.mxu0 %v2458
        %v2469 = vpop.f32.mrf.mxu0
        %v2470 = vadd.f32 0.0, %v2469
        %v2471 = vpop.f32.mrf.mxu0
        %v2472 = vadd.f32 0.0, %v2471
        %2473 = vdwg.mxu0
        %v2474 = vpack.c.bf16 %v2472, %v2470
        %s2475 = scalar_lea.vmem %s8, 32
        %v2476 = vld [vmem:[%s2475] sm:$0xf]
        %v2477 = vld [vmem:[%s2475 + $0x4] sm:$0xf]
        %v2480 = vunpack.c.l.b16 %v2476
        %v2481 = vunpack.c.l.b16 %v2477
        %v2482 = vpack.c.b16 %v2481, %v2480
        %v2485 = vsel %vm2300, %v2474, 0
        %2487 = vmatpush.bf16.msra.mxu0 0
        %2488 = vmatpush.bf16.msra.mxu0 0
        %2489 = vmatpush.bf16.msra.mxu0 0
        %2490 = vmatpush.bf16.msra.mxu0 0
        %2491 = vmatpush.bf16.msra.mxu0 0
        %2492 = vmatpush.bf16.msra.mxu0 0
        %2493 = vmatpush.bf16.msra.mxu0 0
        %2494 = vmatpush.bf16.msra.mxu0 %v2482
        %2495 = vmatmul.bf16.gmra.mxu0 %v2485
        %v2496 = vpop.f32.mrf.mxu0
        %v2497 = vadd.f32 0.0, %v2496
        %v2498 = vpop.f32.mrf.mxu0
        %v2499 = vadd.f32 0.0, %v2498
        %2500 = vdwg.mxu0
        %v2501 = vadd.f32 %v2447, %v2497
        %v2502 = vadd.f32 %v2448, %v2499
        %s2503 = scalar_lea.vmem %s7, 40
        %v2504 = vld [vmem:[%s2503] sm:$0xf]
        %v2505 = vld [vmem:[%s2503 + $0x4] sm:$0x1]
        %v2508 = vunpack.c.l.b16 %v2504
        %v2509 = vunpack.c.l.b16 %v2505
        %v2510 = vpack.c.b16 %v2509, %v2508
        %v2512 = vsel %vm2238, %v2510, 0
        %2514 = vmatpush.bf16.msra.mxu0 0
        %2515 = vmatpush.bf16.msra.mxu0 0
        %2516 = vmatpush.bf16.msra.mxu0 0
        %2517 = vmatpush.bf16.msra.mxu0 0
        %2518 = vmatpush.bf16.msra.mxu0 %v2246
        %2519 = vmatpush.bf16.msra.mxu0 %v2229
        %2520 = vmatpush.bf16.msra.mxu0 %v2228
        %2521 = vmatpush.bf16.msra.mxu0 %v2227
        %2522 = vmatmul.bf16.gmra.mxu0 %v2512
        %v2523 = vpop.f32.mrf.mxu0
        %v2524 = vadd.f32 0.0, %v2523
        %v2525 = vpop.f32.mrf.mxu0
        %v2526 = vadd.f32 0.0, %v2525
        %2527 = vdwg.mxu0
        %v2528 = vpack.c.bf16 %v2526, %v2524
        %s2529 = scalar_lea.vmem %s8, 40
        %v2530 = vld [vmem:[%s2529] sm:$0xf]
        %v2531 = vld [vmem:[%s2529 + $0x4] sm:$0xf]
        %v2534 = vunpack.c.l.b16 %v2530
        %v2535 = vunpack.c.l.b16 %v2531
        %v2536 = vpack.c.b16 %v2535, %v2534
        %v2539 = vsel %vm2300, %v2528, 0
        %2541 = vmatpush.bf16.msra.mxu0 0
        %2542 = vmatpush.bf16.msra.mxu0 0
        %2543 = vmatpush.bf16.msra.mxu0 0
        %2544 = vmatpush.bf16.msra.mxu0 0
        %2545 = vmatpush.bf16.msra.mxu0 0
        %2546 = vmatpush.bf16.msra.mxu0 0
        %2547 = vmatpush.bf16.msra.mxu0 0
        %2548 = vmatpush.bf16.msra.mxu0 %v2536
        %2549 = vmatmul.bf16.gmra.mxu0 %v2539
        %v2550 = vpop.f32.mrf.mxu0
        %v2551 = vadd.f32 0.0, %v2550
        %v2552 = vpop.f32.mrf.mxu0
        %v2553 = vadd.f32 0.0, %v2552
        %2554 = vdwg.mxu0
        %v2555 = vadd.f32 %v2501, %v2551
        %v2556 = vadd.f32 %v2502, %v2553
        %s2557 = scalar_lea.vmem %s7, 48
        %v2558 = vld [vmem:[%s2557] sm:$0xf]
        %v2559 = vld [vmem:[%s2557 + $0x4] sm:$0x1]
        %v2562 = vunpack.c.l.b16 %v2558
        %v2563 = vunpack.c.l.b16 %v2559
        %v2564 = vpack.c.b16 %v2563, %v2562
        %v2566 = vsel %vm2238, %v2564, 0
        %2568 = vmatpush.bf16.msra.mxu0 0
        %2569 = vmatpush.bf16.msra.mxu0 0
        %2570 = vmatpush.bf16.msra.mxu0 0
        %2571 = vmatpush.bf16.msra.mxu0 0
        %2572 = vmatpush.bf16.msra.mxu0 %v2246
        %2573 = vmatpush.bf16.msra.mxu0 %v2229
        %2574 = vmatpush.bf16.msra.mxu0 %v2228
        %2575 = vmatpush.bf16.msra.mxu0 %v2227
        %2576 = vmatmul.bf16.gmra.mxu0 %v2566
        %v2577 = vpop.f32.mrf.mxu0
        %v2578 = vadd.f32 0.0, %v2577
        %v2579 = vpop.f32.mrf.mxu0
        %v2580 = vadd.f32 0.0, %v2579
        %2581 = vdwg.mxu0
        %v2582 = vpack.c.bf16 %v2580, %v2578
        %s2583 = scalar_lea.vmem %s8, 48
        %v2584 = vld [vmem:[%s2583] sm:$0xf]
        %v2585 = vld [vmem:[%s2583 + $0x4] sm:$0xf]
        %v2588 = vunpack.c.l.b16 %v2584
        %v2589 = vunpack.c.l.b16 %v2585
        %v2590 = vpack.c.b16 %v2589, %v2588
        %v2593 = vsel %vm2300, %v2582, 0
        %2595 = vmatpush.bf16.msra.mxu0 0
        %2596 = vmatpush.bf16.msra.mxu0 0
        %2597 = vmatpush.bf16.msra.mxu0 0
        %2598 = vmatpush.bf16.msra.mxu0 0
        %2599 = vmatpush.bf16.msra.mxu0 0
        %2600 = vmatpush.bf16.msra.mxu0 0
        %2601 = vmatpush.bf16.msra.mxu0 0
        %2602 = vmatpush.bf16.msra.mxu0 %v2590
        %2603 = vmatmul.bf16.gmra.mxu0 %v2593
        %v2604 = vpop.f32.mrf.mxu0
        %v2605 = vadd.f32 0.0, %v2604
        %v2606 = vpop.f32.mrf.mxu0
        %v2607 = vadd.f32 0.0, %v2606
        %2608 = vdwg.mxu0
        %v2609 = vadd.f32 %v2555, %v2605
        %v2610 = vadd.f32 %v2556, %v2607
        %s2611 = scalar_lea.vmem %s7, 56
        %v2612 = vld [vmem:[%s2611] sm:$0xf]
        %v2613 = vld [vmem:[%s2611 + $0x4] sm:$0x1]
        %v2616 = vunpack.c.l.b16 %v2612
        %v2617 = vunpack.c.l.b16 %v2613
        %v2618 = vpack.c.b16 %v2617, %v2616
        %v2620 = vsel %vm2238, %v2618, 0
        %2622 = vmatpush.bf16.msra.mxu0 0
        %2623 = vmatpush.bf16.msra.mxu0 0
        %2624 = vmatpush.bf16.msra.mxu0 0
        %2625 = vmatpush.bf16.msra.mxu0 0
        %2626 = vmatpush.bf16.msra.mxu0 %v2246
        %2627 = vmatpush.bf16.msra.mxu0 %v2229
        %2628 = vmatpush.bf16.msra.mxu0 %v2228
        %2629 = vmatpush.bf16.msra.mxu0 %v2227
        %2630 = vmatmul.bf16.gmra.mxu0 %v2620
        %v2631 = vpop.f32.mrf.mxu0
        %v2632 = vadd.f32 0.0, %v2631
        %v2633 = vpop.f32.mrf.mxu0
        %v2634 = vadd.f32 0.0, %v2633
        %2635 = vdwg.mxu0
        %v2636 = vpack.c.bf16 %v2634, %v2632
        %s2637 = scalar_lea.vmem %s8, 56
        %v2638 = vld [vmem:[%s2637] sm:$0xf]
        %v2639 = vld [vmem:[%s2637 + $0x4] sm:$0xf]
        %v2642 = vunpack.c.l.b16 %v2638
        %v2643 = vunpack.c.l.b16 %v2639
        %v2644 = vpack.c.b16 %v2643, %v2642
        %v2647 = vsel %vm2300, %v2636, 0
        %2649 = vmatpush.bf16.msra.mxu0 0
        %2650 = vmatpush.bf16.msra.mxu0 0
        %2651 = vmatpush.bf16.msra.mxu0 0
        %2652 = vmatpush.bf16.msra.mxu0 0
        %2653 = vmatpush.bf16.msra.mxu0 0
        %2654 = vmatpush.bf16.msra.mxu0 0
        %2655 = vmatpush.bf16.msra.mxu0 0
        %2656 = vmatpush.bf16.msra.mxu0 %v2644
        %2657 = vmatmul.bf16.gmra.mxu0 %v2647
        %v2658 = vpop.f32.mrf.mxu0
        %v2659 = vadd.f32 0.0, %v2658
        %v2660 = vpop.f32.mrf.mxu0
        %v2661 = vadd.f32 0.0, %v2660
        %2662 = vdwg.mxu0
        %v2663 = vadd.f32 %v2609, %v2659
        %v2664 = vadd.f32 %v2610, %v2661
        %s2665 = scalar_lea.vmem %s7, 64
        %v2666 = vld [vmem:[%s2665] sm:$0xf]
        %v2667 = vld [vmem:[%s2665 + $0x4] sm:$0x1]
        %v2670 = vunpack.c.l.b16 %v2666
        %v2671 = vunpack.c.l.b16 %v2667
        %v2672 = vpack.c.b16 %v2671, %v2670
        %v2674 = vsel %vm2238, %v2672, 0
        %2676 = vmatpush.bf16.msra.mxu0 0
        %2677 = vmatpush.bf16.msra.mxu0 0
        %2678 = vmatpush.bf16.msra.mxu0 0
        %2679 = vmatpush.bf16.msra.mxu0 0
        %2680 = vmatpush.bf16.msra.mxu0 %v2246
        %2681 = vmatpush.bf16.msra.mxu0 %v2229
        %2682 = vmatpush.bf16.msra.mxu0 %v2228
        %2683 = vmatpush.bf16.msra.mxu0 %v2227
        %2684 = vmatmul.bf16.gmra.mxu0 %v2674
        %v2685 = vpop.f32.mrf.mxu0
        %v2686 = vadd.f32 0.0, %v2685
        %v2687 = vpop.f32.mrf.mxu0
        %v2688 = vadd.f32 0.0, %v2687
        %2689 = vdwg.mxu0
        %v2690 = vpack.c.bf16 %v2688, %v2686
        %s2691 = scalar_lea.vmem %s8, 64
        %v2692 = vld [vmem:[%s2691] sm:$0xf]
        %v2693 = vld [vmem:[%s2691 + $0x4] sm:$0xf]
        %v2696 = vunpack.c.l.b16 %v2692
        %v2697 = vunpack.c.l.b16 %v2693
        %v2698 = vpack.c.b16 %v2697, %v2696
        %v2701 = vsel %vm2300, %v2690, 0
        %2703 = vmatpush.bf16.msra.mxu0 0
        %2704 = vmatpush.bf16.msra.mxu0 0
        %2705 = vmatpush.bf16.msra.mxu0 0
        %2706 = vmatpush.bf16.msra.mxu0 0
        %2707 = vmatpush.bf16.msra.mxu0 0
        %2708 = vmatpush.bf16.msra.mxu0 0
        %2709 = vmatpush.bf16.msra.mxu0 0
        %2710 = vmatpush.bf16.msra.mxu0 %v2698
        %2711 = vmatmul.bf16.gmra.mxu0 %v2701
        %v2712 = vpop.f32.mrf.mxu0
        %v2713 = vadd.f32 0.0, %v2712
        %v2714 = vpop.f32.mrf.mxu0
        %v2715 = vadd.f32 0.0, %v2714
        %2716 = vdwg.mxu0
        %v2717 = vadd.f32 %v2663, %v2713
        %v2718 = vadd.f32 %v2664, %v2715
        %v2719 = vld [vmem:[%s9] sm:$0x1]
        %v2721 = vperm.slane %v2719, 0
        %v2723 = vadd.f32 %v2717, %v2721
        %v2724 = vadd.f32 %v2718, %v2721
        %v2725 = vmax.f32 %v2723, 0.0
        %v2726 = vmax.f32 %v2724, 0.0
        %v2727 = vpack.c.bf16 %v2725, %v2725
        %v2728 = vpack.c.bf16 %v2726, %v2726
        %v2729 = vld [vmem:[%s10] sm:$0xf]
        %v2730 = vld [vmem:[%s10 + $0x4] sm:$0xf]
        %v2731 = vld [vmem:[%s10 + $0x8] sm:$0xf]
        %v2732 = vld [vmem:[%s10 + $0xc] sm:$0xf]
        %s2733 = scalar_lea.vmem %s10, 16
        %v2734 = vld [vmem:[%s2733] sm:$0xf]
        %v2735 = vld [vmem:[%s2733 + $0x4] sm:$0xf]
        %v2736 = vld [vmem:[%s2733 + $0x8] sm:$0xf]
        %v2737 = vld [vmem:[%s2733 + $0xc] sm:$0xf]
        %v2739 = vunpack.c.l.b16 %v2727
        %v2740 = vpack.c.b16 %v2739, %v2739
        %v2742 = vshrl.u32 %v2740, 16
        %v2748 = vunpack.c.l.b16 %v2734
        %v2749 = vunpack.c.l.b16 %v2735
        %v2750 = vunpack.c.l.b16 %v2736
        %v2751 = vunpack.c.l.b16 %v2737
        %v2752 = vpack.c.b16 %v2749, %v2748
        %v2753 = vpack.c.b16 %v2751, %v2750
        %vm2756 = vcmask 261120
        %v2758 = vsel %vm2756, %v2742, 0
        %2760 = vmatpush.bf16.msra.mxu0 0
        %2761 = vmatpush.bf16.msra.mxu0 0
        %2762 = vmatpush.bf16.msra.mxu0 0
        %2763 = vmatpush.bf16.msra.mxu0 0
        %2764 = vmatpush.bf16.msra.mxu0 0
        %2765 = vmatpush.bf16.msra.mxu0 0
        %2766 = vmatpush.bf16.msra.mxu0 %v2753
        %2767 = vmatpush.bf16.msra.mxu0 %v2752
        %2768 = vmatmul.bf16.gmra.mxu0 %v2758
        %v2769 = vpop.f32.mrf.mxu0
        %v2770 = vadd.f32 0.0, %v2769
        %v2771 = vpop.f32.mrf.mxu0
        %2772 = vdwg.mxu0
        %v2777 = vunpack.c.l.b16 %v2729
        %v2778 = vunpack.c.l.b16 %v2730
        %v2779 = vunpack.c.l.b16 %v2731
        %v2780 = vunpack.c.l.b16 %v2732
        %v2781 = vpack.c.b16 %v2778, %v2777
        %v2782 = vpack.c.b16 %v2780, %v2779
        %v2786 = vsel %vm2756, %v2727, 0
        %2788 = vmatpush.bf16.msra.mxu0 0
        %2789 = vmatpush.bf16.msra.mxu0 0
        %2790 = vmatpush.bf16.msra.mxu0 0
        %2791 = vmatpush.bf16.msra.mxu0 0
        %2792 = vmatpush.bf16.msra.mxu0 0
        %2793 = vmatpush.bf16.msra.mxu0 0
        %2794 = vmatpush.bf16.msra.mxu0 %v2782
        %2795 = vmatpush.bf16.msra.mxu0 %v2781
        %2796 = vmatmul.bf16.gmra.mxu0 %v2786
        %v2797 = vpop.f32.mrf.mxu0
        %v2798 = vadd.f32 %v2770, %v2797
        %v2799 = vpop.f32.mrf.mxu0
        %2800 = vdwg.mxu0
        %s2801 = scalar_lea.vmem %s10, 32
        %v2802 = vld [vmem:[%s2801] sm:$0xf]
        %v2803 = vld [vmem:[%s2801 + $0x4] sm:$0xf]
        %v2804 = vld [vmem:[%s2801 + $0x8] sm:$0xf]
        %v2805 = vld [vmem:[%s2801 + $0xc] sm:$0xf]
        %v2806 = vrot.slane %v2740, 1
        %v2811 = vunpack.c.l.b16 %v2802
        %v2812 = vunpack.c.l.b16 %v2803
        %v2813 = vunpack.c.l.b16 %v2804
        %v2814 = vunpack.c.l.b16 %v2805
        %v2815 = vpack.c.b16 %v2812, %v2811
        %v2816 = vpack.c.b16 %v2814, %v2813
        %v2820 = vsel %vm2756, %v2806, 0
        %2822 = vmatpush.bf16.msra.mxu0 0
        %2823 = vmatpush.bf16.msra.mxu0 0
        %2824 = vmatpush.bf16.msra.mxu0 0
        %2825 = vmatpush.bf16.msra.mxu0 0
        %2826 = vmatpush.bf16.msra.mxu0 0
        %2827 = vmatpush.bf16.msra.mxu0 0
        %2828 = vmatpush.bf16.msra.mxu0 %v2816
        %2829 = vmatpush.bf16.msra.mxu0 %v2815
        %2830 = vmatmul.bf16.gmra.mxu0 %v2820
        %v2831 = vpop.f32.mrf.mxu0
        %v2832 = vadd.f32 0.0, %v2831
        %v2833 = vpop.f32.mrf.mxu0
        %2834 = vdwg.mxu0
        %v2835 = vadd.f32 %v2798, %v2832
        %s2836 = scalar_lea.vmem %s10, 48
        %v2837 = vld [vmem:[%s2836] sm:$0xf]
        %v2838 = vld [vmem:[%s2836 + $0x4] sm:$0xf]
        %v2839 = vld [vmem:[%s2836 + $0x8] sm:$0xf]
        %v2840 = vld [vmem:[%s2836 + $0xc] sm:$0xf]
        %v2841 = vrot.slane %v2742, 1
        %v2846 = vunpack.c.l.b16 %v2837
        %v2847 = vunpack.c.l.b16 %v2838
        %v2848 = vunpack.c.l.b16 %v2839
        %v2849 = vunpack.c.l.b16 %v2840
        %v2850 = vpack.c.b16 %v2847, %v2846
        %v2851 = vpack.c.b16 %v2849, %v2848
        %v2855 = vsel %vm2756, %v2841, 0
        %2857 = vmatpush.bf16.msra.mxu0 0
        %2858 = vmatpush.bf16.msra.mxu0 0
        %2859 = vmatpush.bf16.msra.mxu0 0
        %2860 = vmatpush.bf16.msra.mxu0 0
        %2861 = vmatpush.bf16.msra.mxu0 0
        %2862 = vmatpush.bf16.msra.mxu0 0
        %2863 = vmatpush.bf16.msra.mxu0 %v2851
        %2864 = vmatpush.bf16.msra.mxu0 %v2850
        %2865 = vmatmul.bf16.gmra.mxu0 %v2855
        %v2866 = vpop.f32.mrf.mxu0
        %v2867 = vadd.f32 0.0, %v2866
        %v2868 = vpop.f32.mrf.mxu0
        %2869 = vdwg.mxu0
        %v2870 = vadd.f32 %v2835, %v2867
        %s2871 = scalar_lea.vmem %s10, 64
        %v2872 = vld [vmem:[%s2871] sm:$0xf]
        %v2873 = vld [vmem:[%s2871 + $0x4] sm:$0xf]
        %v2874 = vld [vmem:[%s2871 + $0x8] sm:$0xf]
        %v2875 = vld [vmem:[%s2871 + $0xc] sm:$0xf]
        %v2876 = vrot.slane %v2740, 2
        %v2881 = vunpack.c.l.b16 %v2872
        %v2882 = vunpack.c.l.b16 %v2873
        %v2883 = vunpack.c.l.b16 %v2874
        %v2884 = vunpack.c.l.b16 %v2875
        %v2885 = vpack.c.b16 %v2882, %v2881
        %v2886 = vpack.c.b16 %v2884, %v2883
        %v2890 = vsel %vm2756, %v2876, 0
        %2892 = vmatpush.bf16.msra.mxu0 0
        %2893 = vmatpush.bf16.msra.mxu0 0
        %2894 = vmatpush.bf16.msra.mxu0 0
        %2895 = vmatpush.bf16.msra.mxu0 0
        %2896 = vmatpush.bf16.msra.mxu0 0
        %2897 = vmatpush.bf16.msra.mxu0 0
        %2898 = vmatpush.bf16.msra.mxu0 %v2886
        %2899 = vmatpush.bf16.msra.mxu0 %v2885
        %2900 = vmatmul.bf16.gmra.mxu0 %v2890
        %v2901 = vpop.f32.mrf.mxu0
        %v2902 = vadd.f32 0.0, %v2901
        %v2903 = vpop.f32.mrf.mxu0
        %2904 = vdwg.mxu0
        %v2905 = vadd.f32 %v2870, %v2902
        %s2906 = scalar_lea.vmem %s10, 80
        %v2907 = vld [vmem:[%s2906] sm:$0xf]
        %v2908 = vld [vmem:[%s2906 + $0x4] sm:$0xf]
        %v2909 = vld [vmem:[%s2906 + $0x8] sm:$0xf]
        %v2910 = vld [vmem:[%s2906 + $0xc] sm:$0xf]
        %v2911 = vrot.slane %v2742, 2
        %v2916 = vunpack.c.l.b16 %v2907
        %v2917 = vunpack.c.l.b16 %v2908
        %v2918 = vunpack.c.l.b16 %v2909
        %v2919 = vunpack.c.l.b16 %v2910
        %v2920 = vpack.c.b16 %v2917, %v2916
        %v2921 = vpack.c.b16 %v2919, %v2918
        %v2925 = vsel %vm2756, %v2911, 0
        %2927 = vmatpush.bf16.msra.mxu0 0
        %2928 = vmatpush.bf16.msra.mxu0 0
        %2929 = vmatpush.bf16.msra.mxu0 0
        %2930 = vmatpush.bf16.msra.mxu0 0
        %2931 = vmatpush.bf16.msra.mxu0 0
        %2932 = vmatpush.bf16.msra.mxu0 0
        %2933 = vmatpush.bf16.msra.mxu0 %v2921
        %2934 = vmatpush.bf16.msra.mxu0 %v2920
        %2935 = vmatmul.bf16.gmra.mxu0 %v2925
        %v2936 = vpop.f32.mrf.mxu0
        %v2937 = vadd.f32 0.0, %v2936
        %v2938 = vpop.f32.mrf.mxu0
        %2939 = vdwg.mxu0
        %v2940 = vadd.f32 %v2905, %v2937
        %s2941 = scalar_lea.vmem %s10, 96
        %v2942 = vld [vmem:[%s2941] sm:$0xf]
        %v2943 = vld [vmem:[%s2941 + $0x4] sm:$0xf]
        %v2944 = vld [vmem:[%s2941 + $0x8] sm:$0xf]
        %v2945 = vld [vmem:[%s2941 + $0xc] sm:$0xf]
        %v2946 = vrot.slane %v2740, 3
        %v2951 = vunpack.c.l.b16 %v2942
        %v2952 = vunpack.c.l.b16 %v2943
        %v2953 = vunpack.c.l.b16 %v2944
        %v2954 = vunpack.c.l.b16 %v2945
        %v2955 = vpack.c.b16 %v2952, %v2951
        %v2956 = vpack.c.b16 %v2954, %v2953
        %v2960 = vsel %vm2756, %v2946, 0
        %2962 = vmatpush.bf16.msra.mxu0 0
        %2963 = vmatpush.bf16.msra.mxu0 0
        %2964 = vmatpush.bf16.msra.mxu0 0
        %2965 = vmatpush.bf16.msra.mxu0 0
        %2966 = vmatpush.bf16.msra.mxu0 0
        %2967 = vmatpush.bf16.msra.mxu0 0
        %2968 = vmatpush.bf16.msra.mxu0 %v2956
        %2969 = vmatpush.bf16.msra.mxu0 %v2955
        %2970 = vmatmul.bf16.gmra.mxu0 %v2960
        %v2971 = vpop.f32.mrf.mxu0
        %v2972 = vadd.f32 0.0, %v2971
        %v2973 = vpop.f32.mrf.mxu0
        %2974 = vdwg.mxu0
        %v2975 = vadd.f32 %v2940, %v2972
        %s2976 = scalar_lea.vmem %s10, 112
        %v2977 = vld [vmem:[%s2976] sm:$0xf]
        %v2978 = vld [vmem:[%s2976 + $0x4] sm:$0xf]
        %v2979 = vld [vmem:[%s2976 + $0x8] sm:$0xf]
        %v2980 = vld [vmem:[%s2976 + $0xc] sm:$0xf]
        %v2981 = vrot.slane %v2742, 3
        %v2986 = vunpack.c.l.b16 %v2977
        %v2987 = vunpack.c.l.b16 %v2978
        %v2988 = vunpack.c.l.b16 %v2979
        %v2989 = vunpack.c.l.b16 %v2980
        %v2990 = vpack.c.b16 %v2987, %v2986
        %v2991 = vpack.c.b16 %v2989, %v2988
        %v2995 = vsel %vm2756, %v2981, 0
        %2997 = vmatpush.bf16.msra.mxu0 0
        %2998 = vmatpush.bf16.msra.mxu0 0
        %2999 = vmatpush.bf16.msra.mxu0 0
        %3000 = vmatpush.bf16.msra.mxu0 0
        %3001 = vmatpush.bf16.msra.mxu0 0
        %3002 = vmatpush.bf16.msra.mxu0 0
        %3003 = vmatpush.bf16.msra.mxu0 %v2991
        %3004 = vmatpush.bf16.msra.mxu0 %v2990
        %3005 = vmatmul.bf16.gmra.mxu0 %v2995
        %v3006 = vpop.f32.mrf.mxu0
        %v3007 = vadd.f32 0.0, %v3006
        %v3008 = vpop.f32.mrf.mxu0
        %3009 = vdwg.mxu0
        %v3010 = vadd.f32 %v2975, %v3007
        %s3011 = scalar_lea.vmem %s10, 128
        %v3012 = vld [vmem:[%s3011] sm:$0xf]
        %v3013 = vld [vmem:[%s3011 + $0x4] sm:$0xf]
        %v3014 = vld [vmem:[%s3011 + $0x8] sm:$0xf]
        %v3015 = vld [vmem:[%s3011 + $0xc] sm:$0xf]
        %v3020 = vunpack.c.l.b16 %v3012
        %v3021 = vunpack.c.l.b16 %v3013
        %v3022 = vunpack.c.l.b16 %v3014
        %v3023 = vunpack.c.l.b16 %v3015
        %v3024 = vpack.c.b16 %v3021, %v3020
        %v3025 = vpack.c.b16 %v3023, %v3022
        %v3029 = vsel %vm2756, %v2728, 0
        %3031 = vmatpush.bf16.msra.mxu0 0
        %3032 = vmatpush.bf16.msra.mxu0 0
        %3033 = vmatpush.bf16.msra.mxu0 0
        %3034 = vmatpush.bf16.msra.mxu0 0
        %3035 = vmatpush.bf16.msra.mxu0 0
        %3036 = vmatpush.bf16.msra.mxu0 0
        %3037 = vmatpush.bf16.msra.mxu0 %v3025
        %3038 = vmatpush.bf16.msra.mxu0 %v3024
        %3039 = vmatmul.bf16.gmra.mxu0 %v3029
        %v3040 = vpop.f32.mrf.mxu0
        %v3041 = vadd.f32 0.0, %v3040
        %v3042 = vpop.f32.mrf.mxu0
        %3043 = vdwg.mxu0
        %v3044 = vadd.f32 %v3010, %v3041
        %v3045 = vld [vmem:[%s11] sm:$0x1]
        %v3046 = vadd.f32 %v3044, %v3045
        %v3047 = vmax.f32 %v3046, 0.0
        %v3048 = vpack.c.bf16 %v3047, %v3047
        %v3049 = vld [vmem:[%s12] sm:$0xf]
        %v3050 = vld [vmem:[%s12 + $0x4] sm:$0xf]
        %v3051 = vld [vmem:[%s12 + $0x8] sm:$0xf]
        %v3052 = vld [vmem:[%s12 + $0xc] sm:$0xf]
        %v3053 = vld [vmem:[%s12 + $0x10] sm:$0xf]
        %v3054 = vld [vmem:[%s12 + $0x14] sm:$0xf]
        %v3055 = vld [vmem:[%s12 + $0x18] sm:$0xf]
        %v3056 = vld [vmem:[%s12 + $0x1c] sm:$0xf]
        %v3057 = vld [vmem:[%s12 + $0x20] sm:$0xf]
        %v3058 = vld [vmem:[%s12 + $0x24] sm:$0xf]
        %v3059 = vld [vmem:[%s12 + $0x28] sm:$0xf]
        %v3060 = vld [vmem:[%s12 + $0x2c] sm:$0xf]
        %v3061 = vld [vmem:[%s12 + $0x30] sm:$0xf]
        %v3062 = vld [vmem:[%s12 + $0x34] sm:$0xf]
        %v3063 = vld [vmem:[%s12 + $0x38] sm:$0xf]
        %v3064 = vld [vmem:[%s12 + $0x3c] sm:$0xf]
        %v3065 = vld [vmem:[%s13] sm:$0x1]
        %v3082 = vunpack.c.l.b16 %v3049
        %v3083 = vunpack.c.l.b16 %v3050
        %v3084 = vunpack.c.l.b16 %v3051
        %v3085 = vunpack.c.l.b16 %v3052
        %v3086 = vunpack.c.l.b16 %v3053
        %v3087 = vunpack.c.l.b16 %v3054
        %v3088 = vunpack.c.l.b16 %v3055
        %v3089 = vunpack.c.l.b16 %v3056
        %v3090 = vunpack.c.l.b16 %v3057
        %v3091 = vunpack.c.l.b16 %v3058
        %v3092 = vunpack.c.l.b16 %v3059
        %v3093 = vunpack.c.l.b16 %v3060
        %v3094 = vunpack.c.l.b16 %v3061
        %v3095 = vunpack.c.l.b16 %v3062
        %v3096 = vunpack.c.l.b16 %v3063
        %v3097 = vunpack.c.l.b16 %v3064
        %v3098 = vpack.c.b16 %v3083, %v3082
        %v3099 = vpack.c.b16 %v3085, %v3084
        %v3100 = vpack.c.b16 %v3087, %v3086
        %v3101 = vpack.c.b16 %v3089, %v3088
        %v3102 = vpack.c.b16 %v3091, %v3090
        %v3103 = vpack.c.b16 %v3093, %v3092
        %v3104 = vpack.c.b16 %v3095, %v3094
        %v3105 = vpack.c.b16 %v3097, %v3096
        %3114 = vmatpush.bf16.msra.mxu0 %v3105
        %3115 = vmatpush.bf16.msra.mxu0 %v3104
        %3116 = vmatpush.bf16.msra.mxu0 %v3103
        %3117 = vmatpush.bf16.msra.mxu0 %v3102
        %3118 = vmatpush.bf16.msra.mxu0 %v3101
        %3119 = vmatpush.bf16.msra.mxu0 %v3100
        %3120 = vmatpush.bf16.msra.mxu0 %v3099
        %3121 = vmatpush.bf16.msra.mxu0 %v3098
        %3122 = vmatmul.bf16.gmra.mxu0 %v3048
        %v3123 = vpop.f32.mrf.mxu0
        %v3124 = vadd.f32 %v3065, %v3123
        %v3125 = vpop.f32.mrf.mxu0
        %3126 = vdwg.mxu0
        %vm3127 = vcmask 122880
        %3128 = vst.msk [vmem:[%s459] sm:$0x1] %vm3127, %v3124
        %s3129 = sand.u32 %s335, 1
        %s3130 = scalar_lea.sflag [#allocation3], %s3129
        %s3131 = sand.u32 %s335, 1
        %s3132 = scalar_lea.vmem [#allocation2], %s3131
        // Predicated region
        $region77: #{encmnist_forward.1} parent=75 // pred_check
          %p3133 = pneg %p345
        $region78: #{encmnist_forward.1} parent=75 // pred_check_branch
          %3135 = sbr.rel (%p3133) target = $region80
        $region79: #{encmnist_forward.1} parent=75 // pred_region
          %3137 = vsyncadd %s3130, 0
          %s3138 = scalar_lea.hbm %s14, %s28
          %s3140 = sshll.u32 %s3132, 4
          %s3141 = int_to_ptr.vmem [resolvable:$true] %s3140
          %s3142 = sshll.u32 %s3138, 4
          %s3143 = int_to_ptr.hbm [resolvable:$true] %s3142
          %3145 = dma.vmem_to_hbm [thread:$0]  %s3141, 16, %s3143, %s3130
        $region80: #{encmnist_forward.1} parent=75 // pred_fallthru
          _
      $region76: #{encmnist_forward.1} parent=5 // pred_fallthru
        _
      %p3146 = scmp.le.s32.totalorder 2, %s23
      // Predicated region
      $region81: #{encmnist_forward.1} parent=5 // pred_check
        %p3147 = pneg %p3146
      $region82: #{encmnist_forward.1} parent=5 // pred_check_branch
        %3149 = sbr.rel (%p3147) target = $region84
      $region83: #{encmnist_forward.1} parent=5 // pred_region
        %s3150 = ssub.s32 %s23, 2
        // Predicated region
        $region85: #{encmnist_forward.1} parent=83 // pred_check
          %p3151 = pneg %p351
        $region86: #{encmnist_forward.1} parent=83 // pred_check_branch
          %3153 = sbr.rel (%p3151) target = $region88
        $region87: #{encmnist_forward.1} parent=83 // pred_region
          %s3154 = sand.u32 %s336, 1
          %s3155 = scalar_lea.sflag [#allocation3], %s3154
          %s3156 = sand.u32 %s336, 1
          %s3157 = scalar_lea.vmem [#allocation2], %s3156
          %3159 = dma.done %s3155, 16
        $region88: #{encmnist_forward.1} parent=83 // pred_fallthru
          _
      $region84: #{encmnist_forward.1} parent=5 // pred_fallthru
        _
    $region6: #{encmnist_forward.1} parent=1 // loop_footer
      %s27 = sadd.s32 1, %s23
    $region7: #{encmnist_forward.1} parent=1 // loop_footer_branch
      %22 = sbr.rel target = $region3
    $region8: #{encmnist_forward.1} parent=1 // loop_exit
      _
    %3160 = vsyncpa [#allocation3], 1
    %s3161 = scalar_lea.sflag [#allocation3], 1
    %3162 = vsyncpa %s3161, 1

</llo_original>
